<compile_context>
chip_gen: v5e
topology: v5e:2x2
jax: 0.10.0
libtpu: 0.0.40
codegen_flags: <defaults>
</compile_context>

<pallas_src>
import functools

import jax
import jax.numpy as jnp
from jax.experimental import pallas as pl
from jax.experimental.pallas import tpu as pltpu

EPS = 1e-5  # torch.nn.LayerNorm default


def _layernorm(v, g, b):
    # Centered two-pass variance: safer against cancellation on the residual
    # stream; the extra XLU reduction is negligible next to the matmuls.
    mu = jnp.mean(v, axis=-1, keepdims=True)
    d = v - mu
    var = jnp.mean(d * d, axis=-1, keepdims=True)
    return d * jax.lax.rsqrt(var + EPS) * g + b


def _gelu(v):
    # TODO(synk): PyTorch nn.GELU defaults to the exact erf form; the tanh
    # approximation is used for portable Mosaic lowering (~1e-3 abs diff).
    return jax.nn.gelu(v, approximate=True)


def _encoder_block_kernel(x_ref,
                          ln1_g, ln1_b,
                          w_qkv_ref, w_proj_ref, b_proj,
                          ln2_g, ln2_b,
                          w_fc1, b_fc1, w_fc2, b_fc2,
                          o_ref, *, num_heads):
    f32 = jnp.float32
    bf16 = jnp.bfloat16

    n, c = x_ref.shape[1], x_ref.shape[2]
    dh = c // num_heads

    x = x_ref[0].astype(f32)                                    # (N, C)

    # ---- norm1 --------------------------------------------------------------
    x1 = _layernorm(x, ln1_g[...], ln1_b[...]).astype(bf16)     # (N, C) bf16

    # ---- fused QKV projection: ONE wide (N, C) @ (C, 3C) MXU matmul ----------
    # (softmax scale dh**-0.5 is already folded into the Q columns of w_qkv.)
    qkv = jnp.dot(x1, w_qkv_ref[...], preferred_element_type=f32)   # (N, 3C)

    def split_heads(base):
        # (N, C) slab of qkv -> (H, N, Dh), heads on the leading (batch) dim.
        return jnp.stack(
            [qkv[:, base + h * dh: base + (h + 1) * dh] for h in range(num_heads)],
            axis=0).astype(bf16)

    q = split_heads(0)                                          # (H, N, Dh)
    k = split_heads(c)                                          # (H, N, Dh)
    v = split_heads(2 * c)                                      # (H, N, Dh)

    # ---- per-head attention, heads batched on the leading dim ---------------
    s = jnp.einsum("hqd,hkd->hqk", q, k, preferred_element_type=f32)  # (H, N, N)
    s = s - jnp.max(s, axis=-1, keepdims=True)
    p = jnp.exp(s)                                              # f32 softmax stats
    p = p * pl.reciprocal(jnp.sum(p, axis=-1, keepdims=True), approx=True)  # EUP

    o = jnp.einsum("hqk,hkd->hqd", p.astype(bf16), v,
                   preferred_element_type=f32)                  # (H, N, Dh)

    # ---- output projection: concat heads on lanes -> one C-deep matmul ------
    o_cat = jnp.concatenate([o[h] for h in range(num_heads)], axis=-1)  # (N, C)
    attn = jnp.dot(o_cat.astype(bf16), w_proj_ref[...],
                   preferred_element_type=f32) + b_proj[...]    # (N, C) f32

    x2 = x + attn                                               # residual 1

    # ---- norm2 + MLP ---------------------------------------------------------
    x3 = _layernorm(x2, ln2_g[...], ln2_b[...]).astype(bf16)
    h1 = jnp.dot(x3, w_fc1[...], preferred_element_type=f32) + b_fc1[...]
    h1 = _gelu(h1).astype(bf16)                                 # GELU in f32
    mlp = jnp.dot(h1, w_fc2[...], preferred_element_type=f32) + b_fc2[...]

    o_ref[0] = (x2 + mlp).astype(o_ref.dtype)                   # residual 2


def encoder_block(x, params, *, num_heads,
                  compute_dtype=jnp.bfloat16,
                  vmem_limit_bytes=48 * 1024 * 1024,
                  single_buffer_weights=False):
    """Fused ViT encoder block.

    vmem_limit_bytes: 48 MiB keeps headroom under v7x's 64 MiB physical VMEM;
      raise toward ~96-112 MiB on v5e/v6e (128 MiB physical).
    single_buffer_weights: single-buffer the constant-index weight blocks
      (pl.Buffered(1)); useful at ViT-Base scale on v7x to halve weight VMEM.
    """
    B, N, C = x.shape
    assert C % num_heads == 0
    dh = C // num_heads
    assert C % 128 == 0, "channels should be lane-dense (multiple of 128)"
    assert N % 8 == 0, "sequence length must be a multiple of 8 (sublane)"
    # TODO(synk): for ViT sequence lengths like 197, pad N to a multiple of
    # 128 in this wrapper and mask the padded key positions before softmax.

    f32 = jnp.float32
    scale = dh ** -0.5

    # ---- restructure + down-cast weights outside the kernel (pure JAX) ------
    w_qkv = jnp.asarray(params["w_qkv"], f32)
    # Fold the softmax scale into the Q columns (head-major column layout is
    # preserved, so the in-kernel per-head slicing still matches torch).
    w_qkv = jnp.concatenate([w_qkv[:, :C] * scale, w_qkv[:, C:]], axis=1)
    w_qkv = w_qkv.astype(compute_dtype)
    w_proj = params["w_proj"].astype(compute_dtype)
    w_fc1 = params["w_fc1"].astype(compute_dtype)
    w_fc2 = params["w_fc2"].astype(compute_dtype)

    args = (
        x,
        params["ln1_g"], params["ln1_b"],
        w_qkv, w_proj, params["b_proj"],
        params["ln2_g"], params["ln2_b"],
        w_fc1, params["b_fc1"], w_fc2, params["b_fc2"],
    )

    # Constant-index blocks (weights / biases): DMA'd once, stay resident.
    pipeline_mode = pl.Buffered(1) if single_buffer_weights else None

    def const_spec(a):
        nd = a.ndim
        if pipeline_mode is None:
            return pl.BlockSpec(a.shape, lambda b, _nd=nd: (0,) * _nd)
        return pl.BlockSpec(a.shape, lambda b, _nd=nd: (0,) * _nd,
                            pipeline_mode=pipeline_mode)

    in_specs = [pl.BlockSpec((1, N, C), lambda b: (b, 0, 0))] \
        + [const_spec(a) for a in args[1:]]

    kernel = functools.partial(_encoder_block_kernel, num_heads=num_heads)
    return pl.pallas_call(
        kernel,
        out_shape=jax.ShapeDtypeStruct((B, N, C), x.dtype),
        grid=(B,),
        in_specs=in_specs,
        out_specs=pl.BlockSpec((1, N, C), lambda b: (b, 0, 0)),
        compiler_params=pltpu.CompilerParams(
            dimension_semantics=("parallel",),
            vmem_limit_bytes=vmem_limit_bytes,
        ),
    )(*args)


def encoder_block_ref(x, p, *, num_heads, matmul_dtype=jnp.float32):
    """Pure-JAX reference. matmul_dtype=bfloat16 mirrors the kernel's MXU policy."""
    B, N, C = x.shape
    dh = C // num_heads
    f32 = jnp.float32

    def mm(a, b):
        return jnp.matmul(a.astype(matmul_dtype), b.astype(matmul_dtype),
                          preferred_element_type=f32)

    x1 = _layernorm(x.astype(f32), p["ln1_g"], p["ln1_b"])
    qkv = mm(x1, p["w_qkv"])
    q, k, v = jnp.split(qkv, 3, axis=-1)
    q = q.reshape(B, N, num_heads, dh).transpose(0, 2, 1, 3) * dh ** -0.5
    k = k.reshape(B, N, num_heads, dh).transpose(0, 2, 1, 3)
    v = v.reshape(B, N, num_heads, dh).transpose(0, 2, 1, 3)
    s = jnp.einsum("bhnd,bhmd->bhnm", q.astype(matmul_dtype),
                   k.astype(matmul_dtype), preferred_element_type=f32)
    pr = jax.nn.softmax(s, axis=-1)
    o = jnp.einsum("bhnm,bhmd->bhnd", pr.astype(matmul_dtype),
                   v.astype(matmul_dtype), preferred_element_type=f32)
    o = o.transpose(0, 2, 1, 3).reshape(B, N, C)
    attn = mm(o, p["w_proj"]) + p["b_proj"]
    x2 = x + attn
    x3 = _layernorm(x2, p["ln2_g"], p["ln2_b"])
    h1 = _gelu(mm(x3, p["w_fc1"]) + p["b_fc1"])
    mlp = mm(h1, p["w_fc2"]) + p["b_fc2"]
    return x2 + mlp


def init_params(key, chs, num_heads, mlp_ratio=4.0):
    hidden = int(chs * mlp_ratio)
    ks = jax.random.split(key, 8)
    std = 0.02
    return {
        "ln1_g": jnp.ones((1, chs), jnp.float32),
        "ln1_b": jnp.zeros((1, chs), jnp.float32),
        # qkv_bias=False -> no qkv bias. Weights stored (in, out) = W.T of torch Linear.
        "w_qkv": std * jax.random.normal(ks[0], (chs, 3 * chs), jnp.float32),
        "w_proj": std * jax.random.normal(ks[1], (chs, chs), jnp.float32),
        "b_proj": std * jax.random.normal(ks[2], (1, chs), jnp.float32),
        "ln2_g": jnp.ones((1, chs), jnp.float32),
        "ln2_b": jnp.zeros((1, chs), jnp.float32),
        "w_fc1": std * jax.random.normal(ks[3], (chs, hidden), jnp.float32),
        "b_fc1": std * jax.random.normal(ks[4], (1, hidden), jnp.float32),
        "w_fc2": std * jax.random.normal(ks[5], (hidden, chs), jnp.float32),
        "b_fc2": std * jax.random.normal(ks[6], (1, chs), jnp.float32),
    }


if __name__ == "__main__":
    # Small but lane-dense demo shapes (N and C multiples of 128 per review).
    B, N, C = 2, 128, 128
    NUM_HEADS = 4            # head_dim = 32

    key = jax.random.PRNGKey(0)
    kx, kp = jax.random.split(key)
    x = jax.random.normal(kx, (B, N, C), jnp.float32)
    params = init_params(kp, C, NUM_HEADS)

    out = encoder_block(x, params, num_heads=NUM_HEADS)
    out = jax.block_until_ready(out)
    assert out.shape == (B, N, C)

    # Precision-matched reference (bf16 matmul operands, f32 accumulation).
    ref_matched = encoder_block_ref(x, params, num_heads=NUM_HEADS,
                                    matmul_dtype=jnp.bfloat16)
    # Full-f32 reference (module semantics); bf16 MXU operands cost ~1e-3 abs.
    ref_f32 = encoder_block_ref(x, params, num_heads=NUM_HEADS)

    err_matched = float(jnp.max(jnp.abs(out - ref_matched)))
    err_f32 = float(jnp.max(jnp.abs(out - ref_f32)))
    assert err_matched < 5e-3, f"kernel vs precision-matched reference: {err_matched}"
    assert err_f32 < 5e-2, f"kernel vs f32 reference: {err_f32}"

    print("KERNEL_OK")
</pallas_src>

<mosaic_0001>
module attributes {stable_mosaic.version = 11 : i64} {
  func.func @_encoder_block_kernel(%arg0: i32, %arg1: memref<1x128x128xf32, #tpu.memory_space<vmem>>, %arg2: memref<1x128xf32, #tpu.memory_space<vmem>>, %arg3: memref<1x128xf32, #tpu.memory_space<vmem>>, %arg4: memref<128x384xbf16, #tpu.memory_space<vmem>>, %arg5: memref<128x128xbf16, #tpu.memory_space<vmem>>, %arg6: memref<1x128xf32, #tpu.memory_space<vmem>>, %arg7: memref<1x128xf32, #tpu.memory_space<vmem>>, %arg8: memref<1x128xf32, #tpu.memory_space<vmem>>, %arg9: memref<128x512xbf16, #tpu.memory_space<vmem>>, %arg10: memref<1x512xf32, #tpu.memory_space<vmem>>, %arg11: memref<512x128xbf16, #tpu.memory_space<vmem>>, %arg12: memref<1x128xf32, #tpu.memory_space<vmem>>, %arg13: memref<1x128x128xf32, #tpu.memory_space<vmem>>) attributes {dimension_semantics = [#tpu.dimension_semantics<parallel>], iteration_bounds = array<i64: 2>, scalar_prefetch = 0 : i64, scratch_operands = 0 : i64, tpu.core_type = #tpu.core_type<tc>, window_params = [{transform_indices = @transform_0, window_bounds = array<i64: 1, 128, 128>}, {pipeline_mode = #tpu.pipeline_mode<synchronous>, transform_indices = @transform_1, window_bounds = array<i64: 1, 128>}, {pipeline_mode = #tpu.pipeline_mode<synchronous>, transform_indices = @transform_2, window_bounds = array<i64: 1, 128>}, {pipeline_mode = #tpu.pipeline_mode<synchronous>, transform_indices = @transform_3, window_bounds = array<i64: 128, 384>}, {pipeline_mode = #tpu.pipeline_mode<synchronous>, transform_indices = @transform_4, window_bounds = array<i64: 128, 128>}, {pipeline_mode = #tpu.pipeline_mode<synchronous>, transform_indices = @transform_5, window_bounds = array<i64: 1, 128>}, {pipeline_mode = #tpu.pipeline_mode<synchronous>, transform_indices = @transform_6, window_bounds = array<i64: 1, 128>}, {pipeline_mode = #tpu.pipeline_mode<synchronous>, transform_indices = @transform_7, window_bounds = array<i64: 1, 128>}, {pipeline_mode = #tpu.pipeline_mode<synchronous>, transform_indices = @transform_8, window_bounds = array<i64: 128, 512>}, {pipeline_mode = #tpu.pipeline_mode<synchronous>, transform_indices = @transform_9, window_bounds = array<i64: 1, 512>}, {pipeline_mode = #tpu.pipeline_mode<synchronous>, transform_indices = @transform_10, window_bounds = array<i64: 512, 128>}, {pipeline_mode = #tpu.pipeline_mode<synchronous>, transform_indices = @transform_11, window_bounds = array<i64: 1, 128>}, {transform_indices = @transform_12, window_bounds = array<i64: 1, 128, 128>}]} {
    %c0 = arith.constant 0 : index
    %c0_0 = arith.constant 0 : index
    %c0_1 = arith.constant 0 : index
    %0 = vector.load %arg1[%c0, %c0_0, %c0_1] : memref<1x128x128xf32, #tpu.memory_space<vmem>>, vector<1x128x128xf32>
    %1 = vector.shape_cast %0 : vector<1x128x128xf32> to vector<128x128xf32>
    %c0_2 = arith.constant 0 : index
    %c0_3 = arith.constant 0 : index
    %2 = vector.load %arg2[%c0_2, %c0_3] : memref<1x128xf32, #tpu.memory_space<vmem>>, vector<1x128xf32>
    %c0_4 = arith.constant 0 : index
    %c0_5 = arith.constant 0 : index
    %3 = vector.load %arg3[%c0_4, %c0_5] : memref<1x128xf32, #tpu.memory_space<vmem>>, vector<1x128xf32>
    %cst = arith.constant dense<0.000000e+00> : vector<128xf32>
    %4 = vector.multi_reduction <add>, %1, %cst [1] : vector<128x128xf32> to vector<128xf32>
    %5 = vector.shape_cast %4 : vector<128xf32> to vector<128x1xf32>
    %cst_6 = arith.constant 1.280000e+02 : f32
    %6 = vector.broadcast %cst_6 : f32 to vector<128x1xf32>
    %7 = arith.divf %5, %6 : vector<128x1xf32>
    %8 = vector.broadcast %7 : vector<128x1xf32> to vector<128x128xf32>
    %9 = arith.subf %1, %8 : vector<128x128xf32>
    %10 = arith.mulf %9, %9 : vector<128x128xf32>
    %cst_7 = arith.constant dense<0.000000e+00> : vector<128xf32>
    %11 = vector.multi_reduction <add>, %10, %cst_7 [1] : vector<128x128xf32> to vector<128xf32>
    %12 = vector.shape_cast %11 : vector<128xf32> to vector<128x1xf32>
    %cst_8 = arith.constant 1.280000e+02 : f32
    %13 = vector.broadcast %cst_8 : f32 to vector<128x1xf32>
    %14 = arith.divf %12, %13 : vector<128x1xf32>
    %cst_9 = arith.constant 9.99999974E-6 : f32
    %15 = vector.broadcast %cst_9 : f32 to vector<128x1xf32>
    %16 = arith.addf %14, %15 : vector<128x1xf32>
    %17 = math.rsqrt %16 : vector<128x1xf32>
    %18 = vector.broadcast %17 : vector<128x1xf32> to vector<128x128xf32>
    %19 = arith.mulf %9, %18 : vector<128x128xf32>
    %20 = vector.broadcast %2 : vector<1x128xf32> to vector<128x128xf32>
    %21 = arith.mulf %19, %20 : vector<128x128xf32>
    %22 = vector.broadcast %3 : vector<1x128xf32> to vector<128x128xf32>
    %23 = arith.addf %21, %22 : vector<128x128xf32>
    %24 = arith.truncf %23 : vector<128x128xf32> to vector<128x128xbf16>
    %c0_10 = arith.constant 0 : index
    %c0_11 = arith.constant 0 : index
    %25 = vector.load %arg4[%c0_10, %c0_11] : memref<128x384xbf16, #tpu.memory_space<vmem>>, vector<128x384xbf16>
    %cst_12 = arith.constant dense<0.000000e+00> : vector<128x384xf32>
    %26 = tpu.matmul %24, %25, %cst_12 {dimension_numbers = #tpu.dot_dimension_numbers<[1], [0], [0], [1], [0, 0, 1, 1], [], []>} : vector<128x128xbf16>, vector<128x384xbf16>, vector<128x384xf32> -> vector<128x384xf32>
    %27 = vector.extract_strided_slice %26 {offsets = [0, 0], sizes = [128, 32], strides = [1, 1]} : vector<128x384xf32> to vector<128x32xf32>
    %28 = vector.extract_strided_slice %26 {offsets = [0, 32], sizes = [128, 32], strides = [1, 1]} : vector<128x384xf32> to vector<128x32xf32>
    %29 = vector.extract_strided_slice %26 {offsets = [0, 64], sizes = [128, 32], strides = [1, 1]} : vector<128x384xf32> to vector<128x32xf32>
    %30 = vector.extract_strided_slice %26 {offsets = [0, 96], sizes = [128, 32], strides = [1, 1]} : vector<128x384xf32> to vector<128x32xf32>
    %31 = vector.shape_cast %27 : vector<128x32xf32> to vector<1x128x32xf32>
    %32 = vector.shape_cast %28 : vector<128x32xf32> to vector<1x128x32xf32>
    %33 = vector.shape_cast %29 : vector<128x32xf32> to vector<1x128x32xf32>
    %34 = vector.shape_cast %30 : vector<128x32xf32> to vector<1x128x32xf32>
    %35 = tpu.concatenate %31, %32, %33, %34 in 0 : vector<1x128x32xf32>, vector<1x128x32xf32>, vector<1x128x32xf32>, vector<1x128x32xf32> -> vector<4x128x32xf32>
    %36 = arith.truncf %35 : vector<4x128x32xf32> to vector<4x128x32xbf16>
    %37 = vector.extract_strided_slice %26 {offsets = [0, 128], sizes = [128, 32], strides = [1, 1]} : vector<128x384xf32> to vector<128x32xf32>
    %38 = vector.extract_strided_slice %26 {offsets = [0, 160], sizes = [128, 32], strides = [1, 1]} : vector<128x384xf32> to vector<128x32xf32>
    %39 = vector.extract_strided_slice %26 {offsets = [0, 192], sizes = [128, 32], strides = [1, 1]} : vector<128x384xf32> to vector<128x32xf32>
    %40 = vector.extract_strided_slice %26 {offsets = [0, 224], sizes = [128, 32], strides = [1, 1]} : vector<128x384xf32> to vector<128x32xf32>
    %41 = vector.shape_cast %37 : vector<128x32xf32> to vector<1x128x32xf32>
    %42 = vector.shape_cast %38 : vector<128x32xf32> to vector<1x128x32xf32>
    %43 = vector.shape_cast %39 : vector<128x32xf32> to vector<1x128x32xf32>
    %44 = vector.shape_cast %40 : vector<128x32xf32> to vector<1x128x32xf32>
    %45 = tpu.concatenate %41, %42, %43, %44 in 0 : vector<1x128x32xf32>, vector<1x128x32xf32>, vector<1x128x32xf32>, vector<1x128x32xf32> -> vector<4x128x32xf32>
    %46 = arith.truncf %45 : vector<4x128x32xf32> to vector<4x128x32xbf16>
    %47 = vector.extract_strided_slice %26 {offsets = [0, 256], sizes = [128, 32], strides = [1, 1]} : vector<128x384xf32> to vector<128x32xf32>
    %48 = vector.extract_strided_slice %26 {offsets = [0, 288], sizes = [128, 32], strides = [1, 1]} : vector<128x384xf32> to vector<128x32xf32>
    %49 = vector.extract_strided_slice %26 {offsets = [0, 320], sizes = [128, 32], strides = [1, 1]} : vector<128x384xf32> to vector<128x32xf32>
    %50 = vector.extract_strided_slice %26 {offsets = [0, 352], sizes = [128, 32], strides = [1, 1]} : vector<128x384xf32> to vector<128x32xf32>
    %51 = vector.shape_cast %47 : vector<128x32xf32> to vector<1x128x32xf32>
    %52 = vector.shape_cast %48 : vector<128x32xf32> to vector<1x128x32xf32>
    %53 = vector.shape_cast %49 : vector<128x32xf32> to vector<1x128x32xf32>
    %54 = vector.shape_cast %50 : vector<128x32xf32> to vector<1x128x32xf32>
    %55 = tpu.concatenate %51, %52, %53, %54 in 0 : vector<1x128x32xf32>, vector<1x128x32xf32>, vector<1x128x32xf32>, vector<1x128x32xf32> -> vector<4x128x32xf32>
    %56 = arith.truncf %55 : vector<4x128x32xf32> to vector<4x128x32xbf16>
    "tpu.trace_start"() <{level = 10 : i32, message = "hqd,hkd->hqk"}> : () -> ()
    %cst_13 = arith.constant dense<0.000000e+00> : vector<4x128x128xf32>
    %57 = tpu.matmul %36, %46, %cst_13 {dimension_numbers = #tpu.dot_dimension_numbers<[2], [2], [1], [1], [0, 0, 0, 1, 1, 1], [0], [0]>} : vector<4x128x32xbf16>, vector<4x128x32xbf16>, vector<4x128x128xf32> -> vector<4x128x128xf32>
    "tpu.trace_stop"() : () -> ()
    %cst_14 = arith.constant dense<0xFF800000> : vector<4x128xf32>
    %58 = vector.multi_reduction <maximumf>, %57, %cst_14 [2] : vector<4x128x128xf32> to vector<4x128xf32>
    %59 = vector.shape_cast %58 : vector<4x128xf32> to vector<4x128x1xf32>
    %60 = vector.broadcast %59 : vector<4x128x1xf32> to vector<4x128x128xf32>
    %61 = arith.subf %57, %60 : vector<4x128x128xf32>
    %62 = math.exp %61 : vector<4x128x128xf32>
    %cst_15 = arith.constant dense<0.000000e+00> : vector<4x128xf32>
    %63 = vector.multi_reduction <add>, %62, %cst_15 [2] : vector<4x128x128xf32> to vector<4x128xf32>
    %64 = vector.shape_cast %63 : vector<4x128xf32> to vector<4x128x1xf32>
    %65 = tpu.reciprocal %64 {approx = true} : vector<4x128x1xf32> -> vector<4x128x1xf32>
    %66 = vector.broadcast %65 : vector<4x128x1xf32> to vector<4x128x128xf32>
    %67 = arith.mulf %62, %66 : vector<4x128x128xf32>
    %68 = arith.truncf %67 : vector<4x128x128xf32> to vector<4x128x128xbf16>
    "tpu.trace_start"() <{level = 10 : i32, message = "hqk,hkd->hqd"}> : () -> ()
    %cst_16 = arith.constant dense<0.000000e+00> : vector<4x128x32xf32>
    %69 = tpu.matmul %68, %56, %cst_16 {dimension_numbers = #tpu.dot_dimension_numbers<[2], [1], [1], [2], [0, 0, 0, 1, 1, 2], [0], [0]>} : vector<4x128x128xbf16>, vector<4x128x32xbf16>, vector<4x128x32xf32> -> vector<4x128x32xf32>
    "tpu.trace_stop"() : () -> ()
    %70 = vector.extract_strided_slice %69 {offsets = [0, 0, 0], sizes = [1, 128, 32], strides = [1, 1, 1]} : vector<4x128x32xf32> to vector<1x128x32xf32>
    %71 = vector.shape_cast %70 : vector<1x128x32xf32> to vector<128x32xf32>
    %72 = vector.extract_strided_slice %69 {offsets = [1, 0, 0], sizes = [1, 128, 32], strides = [1, 1, 1]} : vector<4x128x32xf32> to vector<1x128x32xf32>
    %73 = vector.shape_cast %72 : vector<1x128x32xf32> to vector<128x32xf32>
    %74 = vector.extract_strided_slice %69 {offsets = [2, 0, 0], sizes = [1, 128, 32], strides = [1, 1, 1]} : vector<4x128x32xf32> to vector<1x128x32xf32>
    %75 = vector.shape_cast %74 : vector<1x128x32xf32> to vector<128x32xf32>
    %76 = vector.extract_strided_slice %69 {offsets = [3, 0, 0], sizes = [1, 128, 32], strides = [1, 1, 1]} : vector<4x128x32xf32> to vector<1x128x32xf32>
    %77 = vector.shape_cast %76 : vector<1x128x32xf32> to vector<128x32xf32>
    %78 = tpu.concatenate %71, %73, %75, %77 in 1 : vector<128x32xf32>, vector<128x32xf32>, vector<128x32xf32>, vector<128x32xf32> -> vector<128x128xf32>
    %79 = arith.truncf %78 : vector<128x128xf32> to vector<128x128xbf16>
    %c0_17 = arith.constant 0 : index
    %c0_18 = arith.constant 0 : index
    %80 = vector.load %arg5[%c0_17, %c0_18] : memref<128x128xbf16, #tpu.memory_space<vmem>>, vector<128x128xbf16>
    %cst_19 = arith.constant dense<0.000000e+00> : vector<128x128xf32>
    %81 = tpu.matmul %79, %80, %cst_19 {dimension_numbers = #tpu.dot_dimension_numbers<[1], [0], [0], [1], [0, 0, 1, 1], [], []>} : vector<128x128xbf16>, vector<128x128xbf16>, vector<128x128xf32> -> vector<128x128xf32>
    %c0_20 = arith.constant 0 : index
    %c0_21 = arith.constant 0 : index
    %82 = vector.load %arg6[%c0_20, %c0_21] : memref<1x128xf32, #tpu.memory_space<vmem>>, vector<1x128xf32>
    %83 = vector.broadcast %82 : vector<1x128xf32> to vector<128x128xf32>
    %84 = arith.addf %81, %83 : vector<128x128xf32>
    %85 = arith.addf %1, %84 : vector<128x128xf32>
    %c0_22 = arith.constant 0 : index
    %c0_23 = arith.constant 0 : index
    %86 = vector.load %arg7[%c0_22, %c0_23] : memref<1x128xf32, #tpu.memory_space<vmem>>, vector<1x128xf32>
    %c0_24 = arith.constant 0 : index
    %c0_25 = arith.constant 0 : index
    %87 = vector.load %arg8[%c0_24, %c0_25] : memref<1x128xf32, #tpu.memory_space<vmem>>, vector<1x128xf32>
    %cst_26 = arith.constant dense<0.000000e+00> : vector<128xf32>
    %88 = vector.multi_reduction <add>, %85, %cst_26 [1] : vector<128x128xf32> to vector<128xf32>
    %89 = vector.shape_cast %88 : vector<128xf32> to vector<128x1xf32>
    %cst_27 = arith.constant 1.280000e+02 : f32
    %90 = vector.broadcast %cst_27 : f32 to vector<128x1xf32>
    %91 = arith.divf %89, %90 : vector<128x1xf32>
    %92 = vector.broadcast %91 : vector<128x1xf32> to vector<128x128xf32>
    %93 = arith.subf %85, %92 : vector<128x128xf32>
    %94 = arith.mulf %93, %93 : vector<128x128xf32>
    %cst_28 = arith.constant dense<0.000000e+00> : vector<128xf32>
    %95 = vector.multi_reduction <add>, %94, %cst_28 [1] : vector<128x128xf32> to vector<128xf32>
    %96 = vector.shape_cast %95 : vector<128xf32> to vector<128x1xf32>
    %cst_29 = arith.constant 1.280000e+02 : f32
    %97 = vector.broadcast %cst_29 : f32 to vector<128x1xf32>
    %98 = arith.divf %96, %97 : vector<128x1xf32>
    %cst_30 = arith.constant 9.99999974E-6 : f32
    %99 = vector.broadcast %cst_30 : f32 to vector<128x1xf32>
    %100 = arith.addf %98, %99 : vector<128x1xf32>
    %101 = math.rsqrt %100 : vector<128x1xf32>
    %102 = vector.broadcast %101 : vector<128x1xf32> to vector<128x128xf32>
    %103 = arith.mulf %93, %102 : vector<128x128xf32>
    %104 = vector.broadcast %86 : vector<1x128xf32> to vector<128x128xf32>
    %105 = arith.mulf %103, %104 : vector<128x128xf32>
    %106 = vector.broadcast %87 : vector<1x128xf32> to vector<128x128xf32>
    %107 = arith.addf %105, %106 : vector<128x128xf32>
    %108 = arith.truncf %107 : vector<128x128xf32> to vector<128x128xbf16>
    %c0_31 = arith.constant 0 : index
    %c0_32 = arith.constant 0 : index
    %109 = vector.load %arg9[%c0_31, %c0_32] : memref<128x512xbf16, #tpu.memory_space<vmem>>, vector<128x512xbf16>
    %cst_33 = arith.constant dense<0.000000e+00> : vector<128x512xf32>
    %110 = tpu.matmul %108, %109, %cst_33 {dimension_numbers = #tpu.dot_dimension_numbers<[1], [0], [0], [1], [0, 0, 1, 1], [], []>} : vector<128x128xbf16>, vector<128x512xbf16>, vector<128x512xf32> -> vector<128x512xf32>
    %c0_34 = arith.constant 0 : index
    %c0_35 = arith.constant 0 : index
    %111 = vector.load %arg10[%c0_34, %c0_35] : memref<1x512xf32, #tpu.memory_space<vmem>>, vector<1x512xf32>
    %112 = vector.broadcast %111 : vector<1x512xf32> to vector<128x512xf32>
    %113 = arith.addf %110, %112 : vector<128x512xf32>
    %114 = arith.mulf %113, %113 : vector<128x512xf32>
    %115 = arith.mulf %113, %114 : vector<128x512xf32>
    %cst_36 = arith.constant 4.471500e-02 : f32
    %116 = vector.broadcast %cst_36 : f32 to vector<128x512xf32>
    %117 = arith.mulf %116, %115 : vector<128x512xf32>
    %118 = arith.addf %113, %117 : vector<128x512xf32>
    %cst_37 = arith.constant 0.797884583 : f32
    %119 = vector.broadcast %cst_37 : f32 to vector<128x512xf32>
    %120 = arith.mulf %119, %118 : vector<128x512xf32>
    %121 = math.tanh %120 : vector<128x512xf32>
    %cst_38 = arith.constant 1.000000e+00 : f32
    %122 = vector.broadcast %cst_38 : f32 to vector<128x512xf32>
    %123 = arith.addf %122, %121 : vector<128x512xf32>
    %cst_39 = arith.constant 5.000000e-01 : f32
    %124 = vector.broadcast %cst_39 : f32 to vector<128x512xf32>
    %125 = arith.mulf %124, %123 : vector<128x512xf32>
    %126 = arith.mulf %113, %125 : vector<128x512xf32>
    %127 = arith.truncf %126 : vector<128x512xf32> to vector<128x512xbf16>
    %c0_40 = arith.constant 0 : index
    %c0_41 = arith.constant 0 : index
    %128 = vector.load %arg11[%c0_40, %c0_41] : memref<512x128xbf16, #tpu.memory_space<vmem>>, vector<512x128xbf16>
    %cst_42 = arith.constant dense<0.000000e+00> : vector<128x128xf32>
    %129 = tpu.matmul %127, %128, %cst_42 {dimension_numbers = #tpu.dot_dimension_numbers<[1], [0], [0], [1], [0, 0, 1, 1], [], []>} : vector<128x512xbf16>, vector<512x128xbf16>, vector<128x128xf32> -> vector<128x128xf32>
    %c0_43 = arith.constant 0 : index
    %c0_44 = arith.constant 0 : index
    %130 = vector.load %arg12[%c0_43, %c0_44] : memref<1x128xf32, #tpu.memory_space<vmem>>, vector<1x128xf32>
    %131 = vector.broadcast %130 : vector<1x128xf32> to vector<128x128xf32>
    %132 = arith.addf %129, %131 : vector<128x128xf32>
    %133 = arith.addf %85, %132 : vector<128x128xf32>
    %c0_45 = arith.constant 0 : index
    %c0_46 = arith.constant 0 : index
    %c0_47 = arith.constant 0 : index
    %134 = vector.load %arg13[%c0_45, %c0_46, %c0_47] : memref<1x128x128xf32, #tpu.memory_space<vmem>>, vector<1x128x128xf32>
    %135 = vector.shape_cast %134 : vector<1x128x128xf32> to vector<128x128xf32>
    %136 = vector.shape_cast %133 : vector<128x128xf32> to vector<1x128x128xf32>
    tpu.vector_store %arg13[%c0_45, %c0_46, %c0_47], %136 {strides = array<i32>} : memref<1x128x128xf32, #tpu.memory_space<vmem>>, vector<1x128x128xf32>,
    return
  }
  func.func @transform_0(%arg0: i32) -> (i32, i32, i32) {
    %c0_i32 = arith.constant 0 : i32
    %c0_i32_0 = arith.constant 0 : i32
    %c0_i32_1 = arith.constant 0 : i32
    return %arg0, %c0_i32, %c0_i32_0 : i32, i32, i32
  }
  func.func @transform_1(%arg0: i32) -> (i32, i32) {
    %c0_i32 = arith.constant 0 : i32
    %c0_i32_0 = arith.constant 0 : i32
    %c0_i32_1 = arith.constant 0 : i32
    return %c0_i32, %c0_i32_0 : i32, i32
  }
  func.func @transform_2(%arg0: i32) -> (i32, i32) {
    %c0_i32 = arith.constant 0 : i32
    %c0_i32_0 = arith.constant 0 : i32
    %c0_i32_1 = arith.constant 0 : i32
    return %c0_i32, %c0_i32_0 : i32, i32
  }
  func.func @transform_3(%arg0: i32) -> (i32, i32) {
    %c0_i32 = arith.constant 0 : i32
    %c0_i32_0 = arith.constant 0 : i32
    %c0_i32_1 = arith.constant 0 : i32
    return %c0_i32, %c0_i32_0 : i32, i32
  }
  func.func @transform_4(%arg0: i32) -> (i32, i32) {
    %c0_i32 = arith.constant 0 : i32
    %c0_i32_0 = arith.constant 0 : i32
    %c0_i32_1 = arith.constant 0 : i32
    return %c0_i32, %c0_i32_0 : i32, i32
  }
  func.func @transform_5(%arg0: i32) -> (i32, i32) {
    %c0_i32 = arith.constant 0 : i32
    %c0_i32_0 = arith.constant 0 : i32
    %c0_i32_1 = arith.constant 0 : i32
    return %c0_i32, %c0_i32_0 : i32, i32
  }
  func.func @transform_6(%arg0: i32) -> (i32, i32) {
    %c0_i32 = arith.constant 0 : i32
    %c0_i32_0 = arith.constant 0 : i32
    %c0_i32_1 = arith.constant 0 : i32
    return %c0_i32, %c0_i32_0 : i32, i32
  }
  func.func @transform_7(%arg0: i32) -> (i32, i32) {
    %c0_i32 = arith.constant 0 : i32
    %c0_i32_0 = arith.constant 0 : i32
    %c0_i32_1 = arith.constant 0 : i32
    return %c0_i32, %c0_i32_0 : i32, i32
  }
  func.func @transform_8(%arg0: i32) -> (i32, i32) {
    %c0_i32 = arith.constant 0 : i32
    %c0_i32_0 = arith.constant 0 : i32
    %c0_i32_1 = arith.constant 0 : i32
    return %c0_i32, %c0_i32_0 : i32, i32
  }
  func.func @transform_9(%arg0: i32) -> (i32, i32) {
    %c0_i32 = arith.constant 0 : i32
    %c0_i32_0 = arith.constant 0 : i32
    %c0_i32_1 = arith.constant 0 : i32
    return %c0_i32, %c0_i32_0 : i32, i32
  }
  func.func @transform_10(%arg0: i32) -> (i32, i32) {
    %c0_i32 = arith.constant 0 : i32
    %c0_i32_0 = arith.constant 0 : i32
    %c0_i32_1 = arith.constant 0 : i32
    return %c0_i32, %c0_i32_0 : i32, i32
  }
  func.func @transform_11(%arg0: i32) -> (i32, i32) {
    %c0_i32 = arith.constant 0 : i32
    %c0_i32_0 = arith.constant 0 : i32
    %c0_i32_1 = arith.constant 0 : i32
    return %c0_i32, %c0_i32_0 : i32, i32
  }
  func.func @transform_12(%arg0: i32) -> (i32, i32, i32) {
    %c0_i32 = arith.constant 0 : i32
    %c0_i32_0 = arith.constant 0 : i32
    %c0_i32_1 = arith.constant 0 : i32
    return %arg0, %c0_i32, %c0_i32_0 : i32, i32, i32
  }
}

</mosaic_0001>

<llo_original>
// kernel: tpu_custom_call.1
$region0: #{tpu_custom_call.1}
  #allocation0 [shape = 'u32[]', space=smem, size = 0x4, offset = 0x4, fixed_abs, tag = 'smem constant byte address 0x4 - core index']
  #allocation1 [shape = 'u32[72,128]{1,0:T(1,128)}', space=vmem, size = 0x9000, scoped, tag = 'internal scratch']
  %s0 = inlined_call_operand.hbm [shape: f32[2,128,128], index: 0, kind: input, shape index: {}]
  %s1 = inlined_call_operand.hbm [shape: f32[1,128], index: 1, kind: input, shape index: {}]
  %s2 = inlined_call_operand.vmem [shape: f32[1,128], index: 2, kind: input, shape index: {}]
  %s3 = inlined_call_operand.hbm [shape: bf16[128,384], index: 3, kind: input, shape index: {}]
  %s4 = inlined_call_operand.hbm [shape: bf16[128,128], index: 4, kind: input, shape index: {}]
  %s5 = inlined_call_operand.vmem [shape: f32[1,128], index: 5, kind: input, shape index: {}]
  %s6 = inlined_call_operand.vmem [shape: f32[1,128], index: 6, kind: input, shape index: {}]
  %s7 = inlined_call_operand.hbm [shape: f32[1,128], index: 7, kind: input, shape index: {}]
  %s8 = inlined_call_operand.hbm [shape: bf16[128,512], index: 8, kind: input, shape index: {}]
  %s9 = inlined_call_operand.vmem [shape: f32[1,512], index: 9, kind: input, shape index: {}]
  %s10 = inlined_call_operand.hbm [shape: bf16[512,128], index: 10, kind: input, shape index: {}]
  %s11 = inlined_call_operand.vmem [shape: f32[1,128], index: 11, kind: input, shape index: {}]
  %s12 = inlined_call_operand.hbm [shape: f32[2,128,128], index: 12, kind: output, shape index: {}]
  %s13 = sld [smem:[#allocation0]]
  $region109: #{tpu_custom_call.1} parent=0
    _
  %s15 = ssub.s32 1, %s13
  %s16 = scalar_select 0, %s15, %s13
  $region1: #{tpu_custom_call.1} parent=0
    #allocation2 [shape = 'u8[131072]{0}', space=vmem, size = 0x20000, scoped, tag = 'input window, operand 0']
    #allocation3 [shape = 's32[2]{0}', space=sflag, size = 0x8, scoped, tag = 'scoped memory for tpu_custom_call.1']
    #allocation4 [shape = 's32[2]{0}', space=sflag, size = 0x8, scoped, tag = 'scoped memory for tpu_custom_call.1']
    #allocation5 [shape = 'u8[512]{0}', space=vmem, size = 0x400, scoped, tag = 'input window, operand 1, single buffered']
    #allocation6 [shape = 's32[1]{0}', space=sflag, size = 0x4, scoped, tag = 'scoped memory for tpu_custom_call.1']
    #allocation7 [shape = 'u8[98304]{0}', space=vmem, size = 0x18000, scoped, tag = 'input window, operand 3, single buffered']
    #allocation8 [shape = 'u8[32768]{0}', space=vmem, size = 0x8000, scoped, tag = 'input window, operand 4, single buffered']
    #allocation9 [shape = 's32[1]{0}', space=sflag, size = 0x4, scoped, tag = 'scoped memory for tpu_custom_call.1']
    #allocation10 [shape = 'u8[512]{0}', space=vmem, size = 0x400, scoped, tag = 'input window, operand 7, single buffered']
    #allocation11 [shape = 'u8[131072]{0}', space=vmem, size = 0x20000, scoped, tag = 'input window, operand 8, single buffered']
    #allocation12 [shape = 's32[1]{0}', space=sflag, size = 0x4, scoped, tag = 'scoped memory for tpu_custom_call.1']
    #allocation13 [shape = 'u8[131072]{0}', space=vmem, size = 0x20000, scoped, tag = 'input window, operand 10, single buffered']
    #allocation14 [shape = 'u8[131072]{0}', space=vmem, size = 0x20000, scoped, tag = 'output window, operand 0']
    %17 = vsyncpa [#allocation3], 0
    %s18 = scalar_lea.sflag [#allocation3], 1
    %19 = vsyncpa %s18, 0
    %20 = vsyncpa [#allocation6], 0
    %21 = vsyncpa [#allocation9], 0
    %22 = vsyncpa [#allocation12], 0
    %23 = vsyncpa [#allocation4], 0
    %s24 = scalar_lea.sflag [#allocation4], 1
    %25 = vsyncpa %s24, 0
    loop: start=0, step=1, limit=4
    $region2: #{tpu_custom_call.1} parent=1 // loop_pre_header
      _
    $region3: #{tpu_custom_call.1} parent=1 // loop_header
      %s27 = sphi 0, %s31
      %p28 = scmp.ge.s32.totalorder %s27, 4
      %s37 = sphi 0, %s39
      %s40 = sphi 0, %s37
      %s41 = sphi 0, %s40
      %s57 = sphi 0, %s41
      %s61 = sphi 0, %s61
      %s63 = sphi 0, %s61
      %s64 = sphi 0, %s63
      %s78 = sphi 0, %s64
      %s82 = sphi 0, %s82
      %s84 = sphi 0, %s82
      %s85 = sphi 0, %s84
      %s99 = sphi 0, %s85
      %s103 = sphi 0, %s103
      %s105 = sphi 0, %s103
      %s106 = sphi 0, %s105
      %s120 = sphi 0, %s106
      %s124 = sphi 0, %s124
      %s126 = sphi 0, %s124
      %s127 = sphi 0, %s126
      %s141 = sphi 0, %s127
      %s145 = sphi 0, %s145
      %s147 = sphi 0, %s145
      %s148 = sphi 0, %s147
      %s162 = sphi 0, %s148
      %s166 = sphi 0, %s166
      %s168 = sphi 0, %s166
      %s169 = sphi 0, %s168
      %s183 = sphi 0, %s169
      %s187 = sphi 0, %s187
      %s189 = sphi 0, %s187
      %s190 = sphi 0, %s189
      %s204 = sphi 0, %s190
      %s208 = sphi 0, %s208
      %s210 = sphi 0, %s208
      %s211 = sphi 0, %s210
      %s225 = sphi 0, %s211
      %s229 = sphi 0, %s229
      %s231 = sphi 0, %s229
      %s232 = sphi 0, %s231
      %s246 = sphi 0, %s232
      %s250 = sphi 0, %s250
      %s252 = sphi 0, %s250
      %s253 = sphi 0, %s252
      %s267 = sphi 0, %s253
      %s271 = sphi 0, %s271
      %s273 = sphi 0, %s271
      %s274 = sphi 0, %s273
      %s288 = sphi 0, %s274
      %s294 = sphi 0, %s296
      %s297 = sphi 0, %s294
      %s298 = sphi 0, %s297
      %s314 = sphi 0, %s298
    $region4: #{tpu_custom_call.1} parent=1 // loop_header_branch
      %30 = sbr.rel (%p28) target = $region8
    $region5: #{tpu_custom_call.1} parent=1 // loop_body
      %s32 = ssub.s32 %s27, 1
      %s33 = ssub.s32 %s27, 2
      %s34 = sadd.s32 %s27, 1
      %s35 = ssub.s32 %s27, %s34
      %p36 = scmp.eq.s32.totalorder %s35, 0
      %s38 = sadd.s32 %s37, 1
      %s39 = scalar_select %p36, %s37, %s38
      %p42 = pneg %p36
      %p43 = scmp.eq.s32.totalorder %s27, 1
      %p44 = por %p42, %p43
      %p45 = scmp.ne.s32.totalorder %s37, %s40
      %p46 = scmp.eq.s32.totalorder %s27, 0
      %p47 = por %p45, %p46
      %p48 = scmp.ne.s32.totalorder %s37, %s40
      %p49 = scmp.eq.s32.totalorder %s32, 1
      %p50 = por %p48, %p49
      %p51 = scmp.ne.s32.totalorder %s40, %s41
      %p52 = scmp.eq.s32.totalorder %s32, 0
      %p53 = por %p51, %p52
      %p54 = scmp.ne.s32.totalorder %s40, %s41
      %p55 = scmp.eq.s32.totalorder %s33, 1
      %p56 = por %p54, %p55
      %p58 = scmp.ne.s32.totalorder %s41, %s57
      %p59 = scmp.eq.s32.totalorder %s33, 0
      %p60 = por %p58, %p59
      %s62 = sadd.s32 %s61, 1
      %p65 = scmp.eq.s32.totalorder %s27, 1
      %p66 = scmp.ne.s32.totalorder %s61, %s63
      %p67 = scmp.eq.s32.totalorder %s27, 0
      %p68 = por %p66, %p67
      %p69 = scmp.ne.s32.totalorder %s61, %s63
      %p70 = scmp.eq.s32.totalorder %s32, 1
      %p71 = por %p69, %p70
      %p72 = scmp.ne.s32.totalorder %s63, %s64
      %p73 = scmp.eq.s32.totalorder %s32, 0
      %p74 = por %p72, %p73
      %p75 = scmp.ne.s32.totalorder %s63, %s64
      %p76 = scmp.eq.s32.totalorder %s33, 1
      %p77 = por %p75, %p76
      %p79 = scmp.ne.s32.totalorder %s64, %s78
      %p80 = scmp.eq.s32.totalorder %s33, 0
      %p81 = por %p79, %p80
      %s83 = sadd.s32 %s82, 1
      %p86 = scmp.eq.s32.totalorder %s27, 1
      %p87 = scmp.ne.s32.totalorder %s82, %s84
      %p88 = scmp.eq.s32.totalorder %s27, 0
      %p89 = por %p87, %p88
      %p90 = scmp.ne.s32.totalorder %s82, %s84
      %p91 = scmp.eq.s32.totalorder %s32, 1
      %p92 = por %p90, %p91
      %p93 = scmp.ne.s32.totalorder %s84, %s85
      %p94 = scmp.eq.s32.totalorder %s32, 0
      %p95 = por %p93, %p94
      %p96 = scmp.ne.s32.totalorder %s84, %s85
      %p97 = scmp.eq.s32.totalorder %s33, 1
      %p98 = por %p96, %p97
      %p100 = scmp.ne.s32.totalorder %s85, %s99
      %p101 = scmp.eq.s32.totalorder %s33, 0
      %p102 = por %p100, %p101
      %s104 = sadd.s32 %s103, 1
      %p107 = scmp.eq.s32.totalorder %s27, 1
      %p108 = scmp.ne.s32.totalorder %s103, %s105
      %p109 = scmp.eq.s32.totalorder %s27, 0
      %p110 = por %p108, %p109
      %p111 = scmp.ne.s32.totalorder %s103, %s105
      %p112 = scmp.eq.s32.totalorder %s32, 1
      %p113 = por %p111, %p112
      %p114 = scmp.ne.s32.totalorder %s105, %s106
      %p115 = scmp.eq.s32.totalorder %s32, 0
      %p116 = por %p114, %p115
      %p117 = scmp.ne.s32.totalorder %s105, %s106
      %p118 = scmp.eq.s32.totalorder %s33, 1
      %p119 = por %p117, %p118
      %p121 = scmp.ne.s32.totalorder %s106, %s120
      %p122 = scmp.eq.s32.totalorder %s33, 0
      %p123 = por %p121, %p122
      %s125 = sadd.s32 %s124, 1
      %p128 = scmp.eq.s32.totalorder %s27, 1
      %p129 = scmp.ne.s32.totalorder %s124, %s126
      %p130 = scmp.eq.s32.totalorder %s27, 0
      %p131 = por %p129, %p130
      %p132 = scmp.ne.s32.totalorder %s124, %s126
      %p133 = scmp.eq.s32.totalorder %s32, 1
      %p134 = por %p132, %p133
      %p135 = scmp.ne.s32.totalorder %s126, %s127
      %p136 = scmp.eq.s32.totalorder %s32, 0
      %p137 = por %p135, %p136
      %p138 = scmp.ne.s32.totalorder %s126, %s127
      %p139 = scmp.eq.s32.totalorder %s33, 1
      %p140 = por %p138, %p139
      %p142 = scmp.ne.s32.totalorder %s127, %s141
      %p143 = scmp.eq.s32.totalorder %s33, 0
      %p144 = por %p142, %p143
      %s146 = sadd.s32 %s145, 1
      %p149 = scmp.eq.s32.totalorder %s27, 1
      %p150 = scmp.ne.s32.totalorder %s145, %s147
      %p151 = scmp.eq.s32.totalorder %s27, 0
      %p152 = por %p150, %p151
      %p153 = scmp.ne.s32.totalorder %s145, %s147
      %p154 = scmp.eq.s32.totalorder %s32, 1
      %p155 = por %p153, %p154
      %p156 = scmp.ne.s32.totalorder %s147, %s148
      %p157 = scmp.eq.s32.totalorder %s32, 0
      %p158 = por %p156, %p157
      %p159 = scmp.ne.s32.totalorder %s147, %s148
      %p160 = scmp.eq.s32.totalorder %s33, 1
      %p161 = por %p159, %p160
      %p163 = scmp.ne.s32.totalorder %s148, %s162
      %p164 = scmp.eq.s32.totalorder %s33, 0
      %p165 = por %p163, %p164
      %s167 = sadd.s32 %s166, 1
      %p170 = scmp.eq.s32.totalorder %s27, 1
      %p171 = scmp.ne.s32.totalorder %s166, %s168
      %p172 = scmp.eq.s32.totalorder %s27, 0
      %p173 = por %p171, %p172
      %p174 = scmp.ne.s32.totalorder %s166, %s168
      %p175 = scmp.eq.s32.totalorder %s32, 1
      %p176 = por %p174, %p175
      %p177 = scmp.ne.s32.totalorder %s168, %s169
      %p178 = scmp.eq.s32.totalorder %s32, 0
      %p179 = por %p177, %p178
      %p180 = scmp.ne.s32.totalorder %s168, %s169
      %p181 = scmp.eq.s32.totalorder %s33, 1
      %p182 = por %p180, %p181
      %p184 = scmp.ne.s32.totalorder %s169, %s183
      %p185 = scmp.eq.s32.totalorder %s33, 0
      %p186 = por %p184, %p185
      %s188 = sadd.s32 %s187, 1
      %p191 = scmp.eq.s32.totalorder %s27, 1
      %p192 = scmp.ne.s32.totalorder %s187, %s189
      %p193 = scmp.eq.s32.totalorder %s27, 0
      %p194 = por %p192, %p193
      %p195 = scmp.ne.s32.totalorder %s187, %s189
      %p196 = scmp.eq.s32.totalorder %s32, 1
      %p197 = por %p195, %p196
      %p198 = scmp.ne.s32.totalorder %s189, %s190
      %p199 = scmp.eq.s32.totalorder %s32, 0
      %p200 = por %p198, %p199
      %p201 = scmp.ne.s32.totalorder %s189, %s190
      %p202 = scmp.eq.s32.totalorder %s33, 1
      %p203 = por %p201, %p202
      %p205 = scmp.ne.s32.totalorder %s190, %s204
      %p206 = scmp.eq.s32.totalorder %s33, 0
      %p207 = por %p205, %p206
      %s209 = sadd.s32 %s208, 1
      %p212 = scmp.eq.s32.totalorder %s27, 1
      %p213 = scmp.ne.s32.totalorder %s208, %s210
      %p214 = scmp.eq.s32.totalorder %s27, 0
      %p215 = por %p213, %p214
      %p216 = scmp.ne.s32.totalorder %s208, %s210
      %p217 = scmp.eq.s32.totalorder %s32, 1
      %p218 = por %p216, %p217
      %p219 = scmp.ne.s32.totalorder %s210, %s211
      %p220 = scmp.eq.s32.totalorder %s32, 0
      %p221 = por %p219, %p220
      %p222 = scmp.ne.s32.totalorder %s210, %s211
      %p223 = scmp.eq.s32.totalorder %s33, 1
      %p224 = por %p222, %p223
      %p226 = scmp.ne.s32.totalorder %s211, %s225
      %p227 = scmp.eq.s32.totalorder %s33, 0
      %p228 = por %p226, %p227
      %s230 = sadd.s32 %s229, 1
      %p233 = scmp.eq.s32.totalorder %s27, 1
      %p234 = scmp.ne.s32.totalorder %s229, %s231
      %p235 = scmp.eq.s32.totalorder %s27, 0
      %p236 = por %p234, %p235
      %p237 = scmp.ne.s32.totalorder %s229, %s231
      %p238 = scmp.eq.s32.totalorder %s32, 1
      %p239 = por %p237, %p238
      %p240 = scmp.ne.s32.totalorder %s231, %s232
      %p241 = scmp.eq.s32.totalorder %s32, 0
      %p242 = por %p240, %p241
      %p243 = scmp.ne.s32.totalorder %s231, %s232
      %p244 = scmp.eq.s32.totalorder %s33, 1
      %p245 = por %p243, %p244
      %p247 = scmp.ne.s32.totalorder %s232, %s246
      %p248 = scmp.eq.s32.totalorder %s33, 0
      %p249 = por %p247, %p248
      %s251 = sadd.s32 %s250, 1
      %p254 = scmp.eq.s32.totalorder %s27, 1
      %p255 = scmp.ne.s32.totalorder %s250, %s252
      %p256 = scmp.eq.s32.totalorder %s27, 0
      %p257 = por %p255, %p256
      %p258 = scmp.ne.s32.totalorder %s250, %s252
      %p259 = scmp.eq.s32.totalorder %s32, 1
      %p260 = por %p258, %p259
      %p261 = scmp.ne.s32.totalorder %s252, %s253
      %p262 = scmp.eq.s32.totalorder %s32, 0
      %p263 = por %p261, %p262
      %p264 = scmp.ne.s32.totalorder %s252, %s253
      %p265 = scmp.eq.s32.totalorder %s33, 1
      %p266 = por %p264, %p265
      %p268 = scmp.ne.s32.totalorder %s253, %s267
      %p269 = scmp.eq.s32.totalorder %s33, 0
      %p270 = por %p268, %p269
      %s272 = sadd.s32 %s271, 1
      %p275 = scmp.eq.s32.totalorder %s27, 1
      %p276 = scmp.ne.s32.totalorder %s271, %s273
      %p277 = scmp.eq.s32.totalorder %s27, 0
      %p278 = por %p276, %p277
      %p279 = scmp.ne.s32.totalorder %s271, %s273
      %p280 = scmp.eq.s32.totalorder %s32, 1
      %p281 = por %p279, %p280
      %p282 = scmp.ne.s32.totalorder %s273, %s274
      %p283 = scmp.eq.s32.totalorder %s32, 0
      %p284 = por %p282, %p283
      %p285 = scmp.ne.s32.totalorder %s273, %s274
      %p286 = scmp.eq.s32.totalorder %s33, 1
      %p287 = por %p285, %p286
      %p289 = scmp.ne.s32.totalorder %s274, %s288
      %p290 = scmp.eq.s32.totalorder %s33, 0
      %p291 = por %p289, %p290
      %s292 = ssub.s32 %s27, %s34
      %p293 = scmp.eq.s32.totalorder %s292, 0
      %s295 = sadd.s32 %s294, 1
      %s296 = scalar_select %p293, %s294, %s295
      %p299 = pneg %p293
      %p300 = scmp.eq.s32.totalorder %s27, 1
      %p301 = por %p299, %p300
      %p302 = scmp.ne.s32.totalorder %s294, %s297
      %p303 = scmp.eq.s32.totalorder %s27, 0
      %p304 = por %p302, %p303
      %p305 = scmp.ne.s32.totalorder %s294, %s297
      %p306 = scmp.eq.s32.totalorder %s32, 1
      %p307 = por %p305, %p306
      %p308 = scmp.ne.s32.totalorder %s297, %s298
      %p309 = scmp.eq.s32.totalorder %s32, 0
      %p310 = por %p308, %p309
      %p311 = scmp.ne.s32.totalorder %s297, %s298
      %p312 = scmp.eq.s32.totalorder %s33, 1
      %p313 = por %p311, %p312
      %p315 = scmp.ne.s32.totalorder %s298, %s314
      %p316 = scmp.eq.s32.totalorder %s33, 0
      %p317 = por %p315, %p316
      %p318 = scmp.le.s32.totalorder 1, %s27
      %p319 = scmp.lt.s32.totalorder %s27, 3
      %p320 = pnand %p318, %p319
      %p321 = pneg %p320
      // Predicated region
      $region9: #{tpu_custom_call.1} parent=5 // pred_check
        _
      $region10: #{tpu_custom_call.1} parent=5 // pred_check_branch
        %323 = sbr.rel (%p320) target = $region12
      $region11: #{tpu_custom_call.1} parent=5 // pred_region
        %s324 = ssub.s32 %s27, 1
        // Predicated region
        $region13: #{tpu_custom_call.1} parent=11 // pred_check
          %p325 = pneg %p74
        $region14: #{tpu_custom_call.1} parent=11 // pred_check_branch
          %327 = sbr.rel (%p325) target = $region16
        $region15: #{tpu_custom_call.1} parent=11 // pred_region
          %329 = vsyncadd [#allocation6], 0
          %s331 = sshll.u32 %s1, 4
          %s332 = int_to_ptr.hbm [resolvable:$true] %s331
          %s333 = sshll.u32 [#allocation5], 4
          %s334 = int_to_ptr.vmem [resolvable:$true] %s333
          %336 = dma.hbm_to_vmem [thread:$0]  %s332, 16, %s334, [#allocation6]
        $region16: #{tpu_custom_call.1} parent=11 // pred_fallthru
          _
        // Predicated region
        $region17: #{tpu_custom_call.1} parent=11 // pred_check
          %p337 = pneg %p95
        $region18: #{tpu_custom_call.1} parent=11 // pred_check_branch
          %339 = sbr.rel (%p337) target = $region20
        $region19: #{tpu_custom_call.1} parent=11 // pred_region
          _
        $region20: #{tpu_custom_call.1} parent=11 // pred_fallthru
          _
        // Predicated region
        $region21: #{tpu_custom_call.1} parent=11 // pred_check
          %p340 = pneg %p116
        $region22: #{tpu_custom_call.1} parent=11 // pred_check_branch
          %342 = sbr.rel (%p340) target = $region24
        $region23: #{tpu_custom_call.1} parent=11 // pred_region
          %344 = vsyncadd [#allocation6], 0
          %s345 = sshll.u32 %s3, 4
          %s346 = int_to_ptr.hbm [resolvable:$true] %s345
          %s347 = sshll.u32 [#allocation7], 4
          %s348 = int_to_ptr.vmem [resolvable:$true] %s347
          %353 = dma.hbm_to_vmem [thread:$0]  %s346, 3072, %s348, [#allocation6], 192, 192, 12
        $region24: #{tpu_custom_call.1} parent=11 // pred_fallthru
          _
        // Predicated region
        $region25: #{tpu_custom_call.1} parent=11 // pred_check
          %p354 = pneg %p137
        $region26: #{tpu_custom_call.1} parent=11 // pred_check_branch
          %356 = sbr.rel (%p354) target = $region28
        $region27: #{tpu_custom_call.1} parent=11 // pred_region
          %358 = vsyncadd [#allocation9], 0
          %s359 = sshll.u32 %s4, 4
          %s360 = int_to_ptr.hbm [resolvable:$true] %s359
          %s361 = sshll.u32 [#allocation8], 4
          %s362 = int_to_ptr.vmem [resolvable:$true] %s361
          %367 = dma.hbm_to_vmem [thread:$0]  %s360, 1024, %s362, [#allocation9], 64, 64, 4
        $region28: #{tpu_custom_call.1} parent=11 // pred_fallthru
          _
        // Predicated region
        $region29: #{tpu_custom_call.1} parent=11 // pred_check
          %p368 = pneg %p158
        $region30: #{tpu_custom_call.1} parent=11 // pred_check_branch
          %370 = sbr.rel (%p368) target = $region32
        $region31: #{tpu_custom_call.1} parent=11 // pred_region
          _
        $region32: #{tpu_custom_call.1} parent=11 // pred_fallthru
          _
        // Predicated region
        $region33: #{tpu_custom_call.1} parent=11 // pred_check
          %p371 = pneg %p179
        $region34: #{tpu_custom_call.1} parent=11 // pred_check_branch
          %373 = sbr.rel (%p371) target = $region36
        $region35: #{tpu_custom_call.1} parent=11 // pred_region
          _
        $region36: #{tpu_custom_call.1} parent=11 // pred_fallthru
          _
        // Predicated region
        $region37: #{tpu_custom_call.1} parent=11 // pred_check
          %p374 = pneg %p200
        $region38: #{tpu_custom_call.1} parent=11 // pred_check_branch
          %376 = sbr.rel (%p374) target = $region40
        $region39: #{tpu_custom_call.1} parent=11 // pred_region
          %378 = vsyncadd [#allocation9], 0
          %s380 = sshll.u32 %s7, 4
          %s381 = int_to_ptr.hbm [resolvable:$true] %s380
          %s382 = sshll.u32 [#allocation10], 4
          %s383 = int_to_ptr.vmem [resolvable:$true] %s382
          %385 = dma.hbm_to_vmem [thread:$0]  %s381, 16, %s383, [#allocation9]
        $region40: #{tpu_custom_call.1} parent=11 // pred_fallthru
          _
        // Predicated region
        $region41: #{tpu_custom_call.1} parent=11 // pred_check
          %p386 = pneg %p221
        $region42: #{tpu_custom_call.1} parent=11 // pred_check_branch
          %388 = sbr.rel (%p386) target = $region44
        $region43: #{tpu_custom_call.1} parent=11 // pred_region
          %390 = vsyncadd [#allocation12], 0
          %s391 = sshll.u32 %s8, 4
          %s392 = int_to_ptr.hbm [resolvable:$true] %s391
          %s393 = sshll.u32 [#allocation11], 4
          %s394 = int_to_ptr.vmem [resolvable:$true] %s393
          %399 = dma.hbm_to_vmem [thread:$0]  %s392, 4096, %s394, [#allocation12], 256, 256, 16
        $region44: #{tpu_custom_call.1} parent=11 // pred_fallthru
          _
        // Predicated region
        $region45: #{tpu_custom_call.1} parent=11 // pred_check
          %p400 = pneg %p242
        $region46: #{tpu_custom_call.1} parent=11 // pred_check_branch
          %402 = sbr.rel (%p400) target = $region48
        $region47: #{tpu_custom_call.1} parent=11 // pred_region
          _
        $region48: #{tpu_custom_call.1} parent=11 // pred_fallthru
          _
        // Predicated region
        $region49: #{tpu_custom_call.1} parent=11 // pred_check
          %p403 = pneg %p263
        $region50: #{tpu_custom_call.1} parent=11 // pred_check_branch
          %405 = sbr.rel (%p403) target = $region52
        $region51: #{tpu_custom_call.1} parent=11 // pred_region
          %407 = vsyncadd [#allocation12], 0
          %s408 = sshll.u32 %s10, 4
          %s409 = int_to_ptr.hbm [resolvable:$true] %s408
          %s410 = sshll.u32 [#allocation13], 4
          %s411 = int_to_ptr.vmem [resolvable:$true] %s410
          %416 = dma.hbm_to_vmem [thread:$0]  %s409, 4096, %s411, [#allocation12], 64, 64, 4
        $region52: #{tpu_custom_call.1} parent=11 // pred_fallthru
          _
        // Predicated region
        $region53: #{tpu_custom_call.1} parent=11 // pred_check
          %p417 = pneg %p284
        $region54: #{tpu_custom_call.1} parent=11 // pred_check_branch
          %419 = sbr.rel (%p417) target = $region56
        $region55: #{tpu_custom_call.1} parent=11 // pred_region
          _
        $region56: #{tpu_custom_call.1} parent=11 // pred_fallthru
          _
      $region12: #{tpu_custom_call.1} parent=5 // pred_fallthru
        _
      %p420 = scmp.lt.s32.totalorder %s27, 2
      // Predicated region
      $region57: #{tpu_custom_call.1} parent=5 // pred_check
        %p421 = pneg %p420
      $region58: #{tpu_custom_call.1} parent=5 // pred_check_branch
        %423 = sbr.rel (%p421) target = $region60
      $region59: #{tpu_custom_call.1} parent=5 // pred_region
        // Predicated region
        $region61: #{tpu_custom_call.1} parent=59 // pred_check
          %p424 = pneg %p47
        $region62: #{tpu_custom_call.1} parent=59 // pred_check_branch
          %426 = sbr.rel (%p424) target = $region64
        $region63: #{tpu_custom_call.1} parent=59 // pred_region
          %s427 = sand.u32 %s37, 1
          %s428 = scalar_lea.sflag [#allocation3], %s427
          %s429 = sand.u32 %s37, 1
          %s430 = smul.addr %s429, 128
          %s431 = scalar_lea.vmem [#allocation2], %s430
          %433 = vsyncadd %s428, 0
          %s434 = smul.addr %s27, 16
          %s435 = smul.addr %s434, 8
          %s436 = scalar_lea.hbm %s0, %s435
          %s437 = sshll.u32 %s436, 4
          %s438 = int_to_ptr.hbm [resolvable:$true] %s437
          %s439 = sshll.u32 %s431, 4
          %s440 = int_to_ptr.vmem [resolvable:$true] %s439
          %445 = dma.hbm_to_vmem [thread:$0]  %s438, 2048, %s440, %s428, 128, 128, 8
        $region64: #{tpu_custom_call.1} parent=59 // pred_fallthru
          _
      $region60: #{tpu_custom_call.1} parent=5 // pred_fallthru
        _
      %p446 = scmp.le.s32.totalorder 1, %s27
      %p447 = scmp.lt.s32.totalorder %s27, 3
      %p448 = pnand %p446, %p447
      %p449 = pneg %p448
      // Predicated region
      $region65: #{tpu_custom_call.1} parent=5 // pred_check
        _
      $region66: #{tpu_custom_call.1} parent=5 // pred_check_branch
        %451 = sbr.rel (%p448) target = $region68
      $region67: #{tpu_custom_call.1} parent=5 // pred_region
        %s452 = ssub.s32 %s27, 1
        %s453 = sand.u32 %s40, 1
        %s454 = scalar_lea.sflag [#allocation3], %s453
        %s455 = sand.u32 %s40, 1
        %s456 = smul.addr %s455, 128
        %s457 = scalar_lea.vmem [#allocation2], %s456
        // Predicated region
        $region69: #{tpu_custom_call.1} parent=67 // pred_check
          %p458 = pneg %p53
        $region70: #{tpu_custom_call.1} parent=67 // pred_check_branch
          %460 = sbr.rel (%p458) target = $region72
        $region71: #{tpu_custom_call.1} parent=67 // pred_region
          %462 = dma.done %s454, 2048
        $region72: #{tpu_custom_call.1} parent=67 // pred_fallthru
          _
        // Predicated region
        $region73: #{tpu_custom_call.1} parent=67 // pred_check
          %p463 = pneg %p74
        $region74: #{tpu_custom_call.1} parent=67 // pred_check_branch
          %465 = sbr.rel (%p463) target = $region76
        $region75: #{tpu_custom_call.1} parent=67 // pred_region
          %467 = dma.done [#allocation6], 16
        $region76: #{tpu_custom_call.1} parent=67 // pred_fallthru
          _
        // Predicated region
        $region77: #{tpu_custom_call.1} parent=67 // pred_check
          %p468 = pneg %p116
        $region78: #{tpu_custom_call.1} parent=67 // pred_check_branch
          %470 = sbr.rel (%p468) target = $region80
        $region79: #{tpu_custom_call.1} parent=67 // pred_region
          %472 = dma.done [#allocation6], 3072
        $region80: #{tpu_custom_call.1} parent=67 // pred_fallthru
          _
        // Predicated region
        $region81: #{tpu_custom_call.1} parent=67 // pred_check
          %p473 = pneg %p137
        $region82: #{tpu_custom_call.1} parent=67 // pred_check_branch
          %475 = sbr.rel (%p473) target = $region84
        $region83: #{tpu_custom_call.1} parent=67 // pred_region
          %477 = dma.done [#allocation9], 1024
        $region84: #{tpu_custom_call.1} parent=67 // pred_fallthru
          _
        // Predicated region
        $region85: #{tpu_custom_call.1} parent=67 // pred_check
          %p478 = pneg %p200
        $region86: #{tpu_custom_call.1} parent=67 // pred_check_branch
          %480 = sbr.rel (%p478) target = $region88
        $region87: #{tpu_custom_call.1} parent=67 // pred_region
          %482 = dma.done [#allocation9], 16
        $region88: #{tpu_custom_call.1} parent=67 // pred_fallthru
          _
        // Predicated region
        $region89: #{tpu_custom_call.1} parent=67 // pred_check
          %p483 = pneg %p221
        $region90: #{tpu_custom_call.1} parent=67 // pred_check_branch
          %485 = sbr.rel (%p483) target = $region92
        $region91: #{tpu_custom_call.1} parent=67 // pred_region
          %487 = dma.done [#allocation12], 4096
        $region92: #{tpu_custom_call.1} parent=67 // pred_fallthru
          _
        // Predicated region
        $region93: #{tpu_custom_call.1} parent=67 // pred_check
          %p488 = pneg %p263
        $region94: #{tpu_custom_call.1} parent=67 // pred_check_branch
          %490 = sbr.rel (%p488) target = $region96
        $region95: #{tpu_custom_call.1} parent=67 // pred_region
          %492 = dma.done [#allocation12], 4096
        $region96: #{tpu_custom_call.1} parent=67 // pred_fallthru
          _
        %s493 = sand.u32 %s40, 1
        %s494 = scalar_lea.sflag [#allocation3], %s493
        %s495 = sand.u32 %s40, 1
        %s496 = smul.addr %s495, 128
        %s497 = scalar_lea.vmem [#allocation2], %s496
        %p498 = pneg %p53
        %p499 = pneg %p50
        %p500 = pneg %p74
        %p501 = pneg %p71
        %p502 = pneg %p95
        %p503 = pneg %p92
        %p504 = pneg %p116
        %p505 = pneg %p113
        %p506 = pneg %p137
        %p507 = pneg %p134
        %p508 = pneg %p158
        %p509 = pneg %p155
        %p510 = pneg %p179
        %p511 = pneg %p176
        %p512 = pneg %p200
        %p513 = pneg %p197
        %p514 = pneg %p221
        %p515 = pneg %p218
        %p516 = pneg %p242
        %p517 = pneg %p239
        %p518 = pneg %p263
        %p519 = pneg %p260
        %p520 = pneg %p284
        %p521 = pneg %p281
        %p522 = pneg %p310
        %p523 = pneg %p307
        %s524 = sand.u32 %s297, 1
        %s525 = scalar_lea.sflag [#allocation4], %s524
        %s526 = sand.u32 %s297, 1
        %s527 = smul.addr %s526, 128
        %s528 = scalar_lea.vmem [#allocation14], %s527
        %v529 = vld [vmem:[%s457] sm:$0xff]
        %v530 = vld [vmem:[%s457 + $0x8] sm:$0xff]
        %v531 = vld [vmem:[%s457 + $0x10] sm:$0xff]
        %v532 = vld [vmem:[%s457 + $0x18] sm:$0xff]
        %v533 = vld [vmem:[%s457 + $0x20] sm:$0xff]
        %v534 = vld [vmem:[%s457 + $0x28] sm:$0xff]
        %v535 = vld [vmem:[%s457 + $0x30] sm:$0xff]
        %v536 = vld [vmem:[%s457 + $0x38] sm:$0xff]
        %v537 = vld [vmem:[%s457 + $0x40] sm:$0xff]
        %v538 = vld [vmem:[%s457 + $0x48] sm:$0xff]
        %v539 = vld [vmem:[%s457 + $0x50] sm:$0xff]
        %v540 = vld [vmem:[%s457 + $0x58] sm:$0xff]
        %v541 = vld [vmem:[%s457 + $0x60] sm:$0xff]
        %v542 = vld [vmem:[%s457 + $0x68] sm:$0xff]
        %v543 = vld [vmem:[%s457 + $0x70] sm:$0xff]
        %v544 = vld [vmem:[%s457 + $0x78] sm:$0xff]
        %v545 = vld [vmem:[#allocation5] sm:$0x1]
        %v546 = vld [vmem:[%s2] sm:$0x1]
        %547 = vadd.xlane.f32.xlu0 %v529
        %v548 = vpop.xlane.xlu0 %547
        %549 = vadd.xlane.f32.xlu0 %v530
        %v550 = vpop.xlane.xlu0 %549
        %551 = vadd.xlane.f32.xlu0 %v531
        %v552 = vpop.xlane.xlu0 %551
        %553 = vadd.xlane.f32.xlu0 %v532
        %v554 = vpop.xlane.xlu0 %553
        %555 = vadd.xlane.f32.xlu0 %v533
        %v556 = vpop.xlane.xlu0 %555
        %557 = vadd.xlane.f32.xlu0 %v534
        %v558 = vpop.xlane.xlu0 %557
        %559 = vadd.xlane.f32.xlu0 %v535
        %v560 = vpop.xlane.xlu0 %559
        %561 = vadd.xlane.f32.xlu0 %v536
        %v562 = vpop.xlane.xlu0 %561
        %563 = vadd.xlane.f32.xlu0 %v537
        %v564 = vpop.xlane.xlu0 %563
        %565 = vadd.xlane.f32.xlu0 %v538
        %v566 = vpop.xlane.xlu0 %565
        %567 = vadd.xlane.f32.xlu0 %v539
        %v568 = vpop.xlane.xlu0 %567
        %569 = vadd.xlane.f32.xlu0 %v540
        %v570 = vpop.xlane.xlu0 %569
        %571 = vadd.xlane.f32.xlu0 %v541
        %v572 = vpop.xlane.xlu0 %571
        %573 = vadd.xlane.f32.xlu0 %v542
        %v574 = vpop.xlane.xlu0 %573
        %575 = vadd.xlane.f32.xlu0 %v543
        %v576 = vpop.xlane.xlu0 %575
        %577 = vadd.xlane.f32.xlu0 %v544
        %v578 = vpop.xlane.xlu0 %577
        %v579 = vrcp.pop 128.0
        %v580 = vmul.f32 128.0, %v579
        %v581 = vsub.f32 1.0, %v580
        %v582 = vmul.f32 %v579, %v581
        %v583 = vadd.f32 %v579, %v582
        %vm584 = vweird.f32 %v579
        %v585 = vsel %vm584, %v579, %v583
        %v586 = vmul.f32 %v548, %v585
        %v587 = vmul.f32 %v550, %v585
        %v588 = vmul.f32 %v552, %v585
        %v589 = vmul.f32 %v554, %v585
        %v590 = vmul.f32 %v556, %v585
        %v591 = vmul.f32 %v558, %v585
        %v592 = vmul.f32 %v560, %v585
        %v593 = vmul.f32 %v562, %v585
        %v594 = vmul.f32 %v564, %v585
        %v595 = vmul.f32 %v566, %v585
        %v596 = vmul.f32 %v568, %v585
        %v597 = vmul.f32 %v570, %v585
        %v598 = vmul.f32 %v572, %v585
        %v599 = vmul.f32 %v574, %v585
        %v600 = vmul.f32 %v576, %v585
        %v601 = vmul.f32 %v578, %v585
        %v602 = vsub.f32 %v529, %v586
        %v603 = vsub.f32 %v530, %v587
        %v604 = vsub.f32 %v531, %v588
        %v605 = vsub.f32 %v532, %v589
        %v606 = vsub.f32 %v533, %v590
        %v607 = vsub.f32 %v534, %v591
        %v608 = vsub.f32 %v535, %v592
        %v609 = vsub.f32 %v536, %v593
        %v610 = vsub.f32 %v537, %v594
        %v611 = vsub.f32 %v538, %v595
        %v612 = vsub.f32 %v539, %v596
        %v613 = vsub.f32 %v540, %v597
        %v614 = vsub.f32 %v541, %v598
        %v615 = vsub.f32 %v542, %v599
        %v616 = vsub.f32 %v543, %v600
        %v617 = vsub.f32 %v544, %v601
        %v618 = vmul.f32 %v602, %v602
        %v619 = vmul.f32 %v603, %v603
        %v620 = vmul.f32 %v604, %v604
        %v621 = vmul.f32 %v605, %v605
        %v622 = vmul.f32 %v606, %v606
        %v623 = vmul.f32 %v607, %v607
        %v624 = vmul.f32 %v608, %v608
        %v625 = vmul.f32 %v609, %v609
        %v626 = vmul.f32 %v610, %v610
        %v627 = vmul.f32 %v611, %v611
        %v628 = vmul.f32 %v612, %v612
        %v629 = vmul.f32 %v613, %v613
        %v630 = vmul.f32 %v614, %v614
        %v631 = vmul.f32 %v615, %v615
        %v632 = vmul.f32 %v616, %v616
        %v633 = vmul.f32 %v617, %v617
        %634 = vadd.xlane.f32.xlu0 %v618
        %v635 = vpop.xlane.xlu0 %634
        %636 = vadd.xlane.f32.xlu0 %v619
        %v637 = vpop.xlane.xlu0 %636
        %638 = vadd.xlane.f32.xlu0 %v620
        %v639 = vpop.xlane.xlu0 %638
        %640 = vadd.xlane.f32.xlu0 %v621
        %v641 = vpop.xlane.xlu0 %640
        %642 = vadd.xlane.f32.xlu0 %v622
        %v643 = vpop.xlane.xlu0 %642
        %644 = vadd.xlane.f32.xlu0 %v623
        %v645 = vpop.xlane.xlu0 %644
        %646 = vadd.xlane.f32.xlu0 %v624
        %v647 = vpop.xlane.xlu0 %646
        %648 = vadd.xlane.f32.xlu0 %v625
        %v649 = vpop.xlane.xlu0 %648
        %650 = vadd.xlane.f32.xlu0 %v626
        %v651 = vpop.xlane.xlu0 %650
        %652 = vadd.xlane.f32.xlu0 %v627
        %v653 = vpop.xlane.xlu0 %652
        %654 = vadd.xlane.f32.xlu0 %v628
        %v655 = vpop.xlane.xlu0 %654
        %656 = vadd.xlane.f32.xlu0 %v629
        %v657 = vpop.xlane.xlu0 %656
        %658 = vadd.xlane.f32.xlu0 %v630
        %v659 = vpop.xlane.xlu0 %658
        %660 = vadd.xlane.f32.xlu0 %v631
        %v661 = vpop.xlane.xlu0 %660
        %662 = vadd.xlane.f32.xlu0 %v632
        %v663 = vpop.xlane.xlu0 %662
        %664 = vadd.xlane.f32.xlu0 %v633
        %v665 = vpop.xlane.xlu0 %664
        %v666 = vmul.f32 %v635, %v585
        %v667 = vmul.f32 %v637, %v585
        %v668 = vmul.f32 %v639, %v585
        %v669 = vmul.f32 %v641, %v585
        %v670 = vmul.f32 %v643, %v585
        %v671 = vmul.f32 %v645, %v585
        %v672 = vmul.f32 %v647, %v585
        %v673 = vmul.f32 %v649, %v585
        %v674 = vmul.f32 %v651, %v585
        %v675 = vmul.f32 %v653, %v585
        %v676 = vmul.f32 %v655, %v585
        %v677 = vmul.f32 %v657, %v585
        %v678 = vmul.f32 %v659, %v585
        %v679 = vmul.f32 %v661, %v585
        %v680 = vmul.f32 %v663, %v585
        %v681 = vmul.f32 %v665, %v585
        %v682 = vadd.f32 %v666, 1e-05
        %v683 = vadd.f32 %v667, 1e-05
        %v684 = vadd.f32 %v668, 1e-05
        %v685 = vadd.f32 %v669, 1e-05
        %v686 = vadd.f32 %v670, 1e-05
        %v687 = vadd.f32 %v671, 1e-05
        %v688 = vadd.f32 %v672, 1e-05
        %v689 = vadd.f32 %v673, 1e-05
        %v690 = vadd.f32 %v674, 1e-05
        %v691 = vadd.f32 %v675, 1e-05
        %v692 = vadd.f32 %v676, 1e-05
        %v693 = vadd.f32 %v677, 1e-05
        %v694 = vadd.f32 %v678, 1e-05
        %v695 = vadd.f32 %v679, 1e-05
        %v696 = vadd.f32 %v680, 1e-05
        %v697 = vadd.f32 %v681, 1e-05
        %v698 = vrsqrt.pop %v682
        %v699 = vmul.f32 %v698, %v682
        %v700 = vmul.f32 %v699, %v698
        %v701 = vmul.f32 0.5, %v700
        %v702 = vsub.f32 1.5, %v701
        %v703 = vmul.f32 %v698, %v702
        %vm704 = vweird.f32 %v682
        %vm705 = vweird.f32 %v698
        %vm706 = vmor %vm704, %vm705
        %v707 = vsel %vm706, %v698, %v703
        %v708 = vrsqrt.pop %v683
        %v709 = vmul.f32 %v708, %v683
        %v710 = vmul.f32 %v709, %v708
        %v711 = vmul.f32 0.5, %v710
        %v712 = vsub.f32 1.5, %v711
        %v713 = vmul.f32 %v708, %v712
        %vm714 = vweird.f32 %v683
        %vm715 = vweird.f32 %v708
        %vm716 = vmor %vm714, %vm715
        %v717 = vsel %vm716, %v708, %v713
        %v718 = vrsqrt.pop %v684
        %v719 = vmul.f32 %v718, %v684
        %v720 = vmul.f32 %v719, %v718
        %v721 = vmul.f32 0.5, %v720
        %v722 = vsub.f32 1.5, %v721
        %v723 = vmul.f32 %v718, %v722
        %vm724 = vweird.f32 %v684
        %vm725 = vweird.f32 %v718
        %vm726 = vmor %vm724, %vm725
        %v727 = vsel %vm726, %v718, %v723
        %v728 = vrsqrt.pop %v685
        %v729 = vmul.f32 %v728, %v685
        %v730 = vmul.f32 %v729, %v728
        %v731 = vmul.f32 0.5, %v730
        %v732 = vsub.f32 1.5, %v731
        %v733 = vmul.f32 %v728, %v732
        %vm734 = vweird.f32 %v685
        %vm735 = vweird.f32 %v728
        %vm736 = vmor %vm734, %vm735
        %v737 = vsel %vm736, %v728, %v733
        %v738 = vrsqrt.pop %v686
        %v739 = vmul.f32 %v738, %v686
        %v740 = vmul.f32 %v739, %v738
        %v741 = vmul.f32 0.5, %v740
        %v742 = vsub.f32 1.5, %v741
        %v743 = vmul.f32 %v738, %v742
        %vm744 = vweird.f32 %v686
        %vm745 = vweird.f32 %v738
        %vm746 = vmor %vm744, %vm745
        %v747 = vsel %vm746, %v738, %v743
        %v748 = vrsqrt.pop %v687
        %v749 = vmul.f32 %v748, %v687
        %v750 = vmul.f32 %v749, %v748
        %v751 = vmul.f32 0.5, %v750
        %v752 = vsub.f32 1.5, %v751
        %v753 = vmul.f32 %v748, %v752
        %vm754 = vweird.f32 %v687
        %vm755 = vweird.f32 %v748
        %vm756 = vmor %vm754, %vm755
        %v757 = vsel %vm756, %v748, %v753
        %v758 = vrsqrt.pop %v688
        %v759 = vmul.f32 %v758, %v688
        %v760 = vmul.f32 %v759, %v758
        %v761 = vmul.f32 0.5, %v760
        %v762 = vsub.f32 1.5, %v761
        %v763 = vmul.f32 %v758, %v762
        %vm764 = vweird.f32 %v688
        %vm765 = vweird.f32 %v758
        %vm766 = vmor %vm764, %vm765
        %v767 = vsel %vm766, %v758, %v763
        %v768 = vrsqrt.pop %v689
        %v769 = vmul.f32 %v768, %v689
        %v770 = vmul.f32 %v769, %v768
        %v771 = vmul.f32 0.5, %v770
        %v772 = vsub.f32 1.5, %v771
        %v773 = vmul.f32 %v768, %v772
        %vm774 = vweird.f32 %v689
        %vm775 = vweird.f32 %v768
        %vm776 = vmor %vm774, %vm775
        %v777 = vsel %vm776, %v768, %v773
        %v778 = vrsqrt.pop %v690
        %v779 = vmul.f32 %v778, %v690
        %v780 = vmul.f32 %v779, %v778
        %v781 = vmul.f32 0.5, %v780
        %v782 = vsub.f32 1.5, %v781
        %v783 = vmul.f32 %v778, %v782
        %vm784 = vweird.f32 %v690
        %vm785 = vweird.f32 %v778
        %vm786 = vmor %vm784, %vm785
        %v787 = vsel %vm786, %v778, %v783
        %v788 = vrsqrt.pop %v691
        %v789 = vmul.f32 %v788, %v691
        %v790 = vmul.f32 %v789, %v788
        %v791 = vmul.f32 0.5, %v790
        %v792 = vsub.f32 1.5, %v791
        %v793 = vmul.f32 %v788, %v792
        %vm794 = vweird.f32 %v691
        %vm795 = vweird.f32 %v788
        %vm796 = vmor %vm794, %vm795
        %v797 = vsel %vm796, %v788, %v793
        %v798 = vrsqrt.pop %v692
        %v799 = vmul.f32 %v798, %v692
        %v800 = vmul.f32 %v799, %v798
        %v801 = vmul.f32 0.5, %v800
        %v802 = vsub.f32 1.5, %v801
        %v803 = vmul.f32 %v798, %v802
        %vm804 = vweird.f32 %v692
        %vm805 = vweird.f32 %v798
        %vm806 = vmor %vm804, %vm805
        %v807 = vsel %vm806, %v798, %v803
        %v808 = vrsqrt.pop %v693
        %v809 = vmul.f32 %v808, %v693
        %v810 = vmul.f32 %v809, %v808
        %v811 = vmul.f32 0.5, %v810
        %v812 = vsub.f32 1.5, %v811
        %v813 = vmul.f32 %v808, %v812
        %vm814 = vweird.f32 %v693
        %vm815 = vweird.f32 %v808
        %vm816 = vmor %vm814, %vm815
        %v817 = vsel %vm816, %v808, %v813
        %v818 = vrsqrt.pop %v694
        %v819 = vmul.f32 %v818, %v694
        %v820 = vmul.f32 %v819, %v818
        %v821 = vmul.f32 0.5, %v820
        %v822 = vsub.f32 1.5, %v821
        %v823 = vmul.f32 %v818, %v822
        %vm824 = vweird.f32 %v694
        %vm825 = vweird.f32 %v818
        %vm826 = vmor %vm824, %vm825
        %v827 = vsel %vm826, %v818, %v823
        %v828 = vrsqrt.pop %v695
        %v829 = vmul.f32 %v828, %v695
        %v830 = vmul.f32 %v829, %v828
        %v831 = vmul.f32 0.5, %v830
        %v832 = vsub.f32 1.5, %v831
        %v833 = vmul.f32 %v828, %v832
        %vm834 = vweird.f32 %v695
        %vm835 = vweird.f32 %v828
        %vm836 = vmor %vm834, %vm835
        %v837 = vsel %vm836, %v828, %v833
        %v838 = vrsqrt.pop %v696
        %v839 = vmul.f32 %v838, %v696
        %v840 = vmul.f32 %v839, %v838
        %v841 = vmul.f32 0.5, %v840
        %v842 = vsub.f32 1.5, %v841
        %v843 = vmul.f32 %v838, %v842
        %vm844 = vweird.f32 %v696
        %vm845 = vweird.f32 %v838
        %vm846 = vmor %vm844, %vm845
        %v847 = vsel %vm846, %v838, %v843
        %v848 = vrsqrt.pop %v697
        %v849 = vmul.f32 %v848, %v697
        %v850 = vmul.f32 %v849, %v848
        %v851 = vmul.f32 0.5, %v850
        %v852 = vsub.f32 1.5, %v851
        %v853 = vmul.f32 %v848, %v852
        %vm854 = vweird.f32 %v697
        %vm855 = vweird.f32 %v848
        %vm856 = vmor %vm854, %vm855
        %v857 = vsel %vm856, %v848, %v853
        %v858 = vmul.f32 %v602, %v707
        %v859 = vmul.f32 %v603, %v717
        %v860 = vmul.f32 %v604, %v727
        %v861 = vmul.f32 %v605, %v737
        %v862 = vmul.f32 %v606, %v747
        %v863 = vmul.f32 %v607, %v757
        %v864 = vmul.f32 %v608, %v767
        %v865 = vmul.f32 %v609, %v777
        %v866 = vmul.f32 %v610, %v787
        %v867 = vmul.f32 %v611, %v797
        %v868 = vmul.f32 %v612, %v807
        %v869 = vmul.f32 %v613, %v817
        %v870 = vmul.f32 %v614, %v827
        %v871 = vmul.f32 %v615, %v837
        %v872 = vmul.f32 %v616, %v847
        %v873 = vmul.f32 %v617, %v857
        %v875 = vperm.slane %v545, 0
        %v877 = vmul.f32 %v858, %v875
        %v878 = vmul.f32 %v859, %v875
        %v879 = vmul.f32 %v860, %v875
        %v880 = vmul.f32 %v861, %v875
        %v881 = vmul.f32 %v862, %v875
        %v882 = vmul.f32 %v863, %v875
        %v883 = vmul.f32 %v864, %v875
        %v884 = vmul.f32 %v865, %v875
        %v885 = vmul.f32 %v866, %v875
        %v886 = vmul.f32 %v867, %v875
        %v887 = vmul.f32 %v868, %v875
        %v888 = vmul.f32 %v869, %v875
        %v889 = vmul.f32 %v870, %v875
        %v890 = vmul.f32 %v871, %v875
        %v891 = vmul.f32 %v872, %v875
        %v892 = vmul.f32 %v873, %v875
        %v894 = vperm.slane %v546, 0
        %v896 = vadd.f32 %v877, %v894
        %v897 = vadd.f32 %v878, %v894
        %v898 = vadd.f32 %v879, %v894
        %v899 = vadd.f32 %v880, %v894
        %v900 = vadd.f32 %v881, %v894
        %v901 = vadd.f32 %v882, %v894
        %v902 = vadd.f32 %v883, %v894
        %v903 = vadd.f32 %v884, %v894
        %v904 = vadd.f32 %v885, %v894
        %v905 = vadd.f32 %v886, %v894
        %v906 = vadd.f32 %v887, %v894
        %v907 = vadd.f32 %v888, %v894
        %v908 = vadd.f32 %v889, %v894
        %v909 = vadd.f32 %v890, %v894
        %v910 = vadd.f32 %v891, %v894
        %v911 = vadd.f32 %v892, %v894
        %v912 = vpack.c.bf16 %v897, %v896
        %v913 = vpack.c.bf16 %v899, %v898
        %v914 = vpack.c.bf16 %v901, %v900
        %v915 = vpack.c.bf16 %v903, %v902
        %v916 = vpack.c.bf16 %v905, %v904
        %v917 = vpack.c.bf16 %v907, %v906
        %v918 = vpack.c.bf16 %v909, %v908
        %v919 = vpack.c.bf16 %v911, %v910
        %v920 = vld [vmem:[#allocation7] sm:$0xff]
        %v921 = vld [vmem:[#allocation7 + $0x8] sm:$0xf]
        %v922 = vld [vmem:[#allocation7 + $0xc] sm:$0xff]
        %v923 = vld [vmem:[#allocation7 + $0x14] sm:$0xf]
        %v924 = vld [vmem:[#allocation7 + $0x18] sm:$0xff]
        %v925 = vld [vmem:[#allocation7 + $0x20] sm:$0xf]
        %v926 = vld [vmem:[#allocation7 + $0x24] sm:$0xff]
        %v927 = vld [vmem:[#allocation7 + $0x2c] sm:$0xf]
        %v928 = vld [vmem:[#allocation7 + $0x30] sm:$0xff]
        %v929 = vld [vmem:[#allocation7 + $0x38] sm:$0xf]
        %v930 = vld [vmem:[#allocation7 + $0x3c] sm:$0xff]
        %v931 = vld [vmem:[#allocation7 + $0x44] sm:$0xf]
        %v932 = vld [vmem:[#allocation7 + $0x48] sm:$0xff]
        %v933 = vld [vmem:[#allocation7 + $0x50] sm:$0xf]
        %v934 = vld [vmem:[#allocation7 + $0x54] sm:$0xff]
        %v935 = vld [vmem:[#allocation7 + $0x5c] sm:$0xf]
        %v936 = vld [vmem:[#allocation7 + $0x60] sm:$0xff]
        %v937 = vld [vmem:[#allocation7 + $0x68] sm:$0xf]
        %v938 = vld [vmem:[#allocation7 + $0x6c] sm:$0xff]
        %v939 = vld [vmem:[#allocation7 + $0x74] sm:$0xf]
        %v940 = vld [vmem:[#allocation7 + $0x78] sm:$0xff]
        %v941 = vld [vmem:[#allocation7 + $0x80] sm:$0xf]
        %v942 = vld [vmem:[#allocation7 + $0x84] sm:$0xff]
        %v943 = vld [vmem:[#allocation7 + $0x8c] sm:$0xf]
        %v944 = vld [vmem:[#allocation7 + $0x90] sm:$0xff]
        %v945 = vld [vmem:[#allocation7 + $0x98] sm:$0xf]
        %v946 = vld [vmem:[#allocation7 + $0x9c] sm:$0xff]
        %v947 = vld [vmem:[#allocation7 + $0xa4] sm:$0xf]
        %v948 = vld [vmem:[#allocation7 + $0xa8] sm:$0xff]
        %v949 = vld [vmem:[#allocation7 + $0xb0] sm:$0xf]
        %v950 = vld [vmem:[#allocation7 + $0xb4] sm:$0xff]
        %v951 = vld [vmem:[#allocation7 + $0xbc] sm:$0xf]
        %v984 = vunpack.c.l.b16 %v920
        %v985 = vunpack.c.h.b16 %v920
        %v986 = vunpack.c.l.b16 %v921
        %v987 = vunpack.c.l.b16 %v922
        %v988 = vunpack.c.h.b16 %v922
        %v989 = vunpack.c.l.b16 %v923
        %v990 = vunpack.c.l.b16 %v924
        %v991 = vunpack.c.h.b16 %v924
        %v992 = vunpack.c.l.b16 %v925
        %v993 = vunpack.c.l.b16 %v926
        %v994 = vunpack.c.h.b16 %v926
        %v995 = vunpack.c.l.b16 %v927
        %v996 = vunpack.c.l.b16 %v928
        %v997 = vunpack.c.h.b16 %v928
        %v998 = vunpack.c.l.b16 %v929
        %v999 = vunpack.c.l.b16 %v930
        %v1000 = vunpack.c.h.b16 %v930
        %v1001 = vunpack.c.l.b16 %v931
        %v1002 = vunpack.c.l.b16 %v932
        %v1003 = vunpack.c.h.b16 %v932
        %v1004 = vunpack.c.l.b16 %v933
        %v1005 = vunpack.c.l.b16 %v934
        %v1006 = vunpack.c.h.b16 %v934
        %v1007 = vunpack.c.l.b16 %v935
        %v1008 = vunpack.c.l.b16 %v936
        %v1009 = vunpack.c.h.b16 %v936
        %v1010 = vunpack.c.l.b16 %v937
        %v1011 = vunpack.c.l.b16 %v938
        %v1012 = vunpack.c.h.b16 %v938
        %v1013 = vunpack.c.l.b16 %v939
        %v1014 = vunpack.c.l.b16 %v940
        %v1015 = vunpack.c.h.b16 %v940
        %v1016 = vunpack.c.l.b16 %v941
        %v1017 = vunpack.c.l.b16 %v942
        %v1018 = vunpack.c.h.b16 %v942
        %v1019 = vunpack.c.l.b16 %v943
        %v1020 = vunpack.c.l.b16 %v944
        %v1021 = vunpack.c.h.b16 %v944
        %v1022 = vunpack.c.l.b16 %v945
        %v1023 = vunpack.c.l.b16 %v946
        %v1024 = vunpack.c.h.b16 %v946
        %v1025 = vunpack.c.l.b16 %v947
        %v1026 = vunpack.c.l.b16 %v948
        %v1027 = vunpack.c.h.b16 %v948
        %v1028 = vunpack.c.l.b16 %v949
        %v1029 = vunpack.c.l.b16 %v950
        %v1030 = vunpack.c.h.b16 %v950
        %v1031 = vunpack.c.l.b16 %v951
        %v1032 = vpack.c.b16 %v987, %v984
        %v1033 = vpack.c.b16 %v988, %v985
        %v1034 = vpack.c.b16 %v989, %v986
        %v1035 = vpack.c.b16 %v993, %v990
        %v1036 = vpack.c.b16 %v994, %v991
        %v1037 = vpack.c.b16 %v995, %v992
        %v1038 = vpack.c.b16 %v999, %v996
        %v1039 = vpack.c.b16 %v1000, %v997
        %v1040 = vpack.c.b16 %v1001, %v998
        %v1041 = vpack.c.b16 %v1005, %v1002
        %v1042 = vpack.c.b16 %v1006, %v1003
        %v1043 = vpack.c.b16 %v1007, %v1004
        %v1044 = vpack.c.b16 %v1011, %v1008
        %v1045 = vpack.c.b16 %v1012, %v1009
        %v1046 = vpack.c.b16 %v1013, %v1010
        %v1047 = vpack.c.b16 %v1017, %v1014
        %v1048 = vpack.c.b16 %v1018, %v1015
        %v1049 = vpack.c.b16 %v1019, %v1016
        %v1050 = vpack.c.b16 %v1023, %v1020
        %v1051 = vpack.c.b16 %v1024, %v1021
        %v1052 = vpack.c.b16 %v1025, %v1022
        %v1053 = vpack.c.b16 %v1029, %v1026
        %v1054 = vpack.c.b16 %v1030, %v1027
        %v1055 = vpack.c.b16 %v1031, %v1028
        %1080 = vmatpush.bf16.msra.mxu0 %v1053
        %1081 = vmatpush.bf16.msra.mxu0 %v1050
        %1082 = vmatpush.bf16.msra.mxu0 %v1047
        %1083 = vmatpush.bf16.msra.mxu0 %v1044
        %1084 = vmatpush.bf16.msra.mxu0 %v1041
        %1085 = vmatpush.bf16.msra.mxu0 %v1038
        %1086 = vmatpush.bf16.msra.mxu0 %v1035
        %1087 = vmatpush.bf16.msra.mxu0 %v1032
        %1088 = vmatmul.bf16.gmra.mxu0 %v912
        %v1089 = vpop.f32.mrf.mxu0
        %v1090 = vadd.f32 0.0, %v1089
        %v1091 = vpop.f32.mrf.mxu0
        %v1092 = vadd.f32 0.0, %v1091
        %1093 = vmatmul.bf16.gmra.mxu0 %v913
        %v1094 = vpop.f32.mrf.mxu0
        %v1095 = vadd.f32 0.0, %v1094
        %v1096 = vpop.f32.mrf.mxu0
        %v1097 = vadd.f32 0.0, %v1096
        %1098 = vmatmul.bf16.gmra.mxu0 %v914
        %v1099 = vpop.f32.mrf.mxu0
        %v1100 = vadd.f32 0.0, %v1099
        %v1101 = vpop.f32.mrf.mxu0
        %v1102 = vadd.f32 0.0, %v1101
        %1103 = vmatmul.bf16.gmra.mxu0 %v915
        %v1104 = vpop.f32.mrf.mxu0
        %v1105 = vadd.f32 0.0, %v1104
        %v1106 = vpop.f32.mrf.mxu0
        %v1107 = vadd.f32 0.0, %v1106
        %1108 = vmatmul.bf16.gmra.mxu0 %v916
        %v1109 = vpop.f32.mrf.mxu0
        %v1110 = vadd.f32 0.0, %v1109
        %v1111 = vpop.f32.mrf.mxu0
        %v1112 = vadd.f32 0.0, %v1111
        %1113 = vmatmul.bf16.gmra.mxu0 %v917
        %v1114 = vpop.f32.mrf.mxu0
        %v1115 = vadd.f32 0.0, %v1114
        %v1116 = vpop.f32.mrf.mxu0
        %v1117 = vadd.f32 0.0, %v1116
        %1118 = vmatmul.bf16.gmra.mxu0 %v918
        %v1119 = vpop.f32.mrf.mxu0
        %v1120 = vadd.f32 0.0, %v1119
        %v1121 = vpop.f32.mrf.mxu0
        %v1122 = vadd.f32 0.0, %v1121
        %1123 = vmatmul.bf16.gmra.mxu0 %v919
        %v1124 = vpop.f32.mrf.mxu0
        %v1125 = vadd.f32 0.0, %v1124
        %v1126 = vpop.f32.mrf.mxu0
        %v1127 = vadd.f32 0.0, %v1126
        %1128 = vdwg.mxu0
        %1129 = vmatpush.bf16.msra.mxu0 %v1054
        %1130 = vmatpush.bf16.msra.mxu0 %v1051
        %1131 = vmatpush.bf16.msra.mxu0 %v1048
        %1132 = vmatpush.bf16.msra.mxu0 %v1045
        %1133 = vmatpush.bf16.msra.mxu0 %v1042
        %1134 = vmatpush.bf16.msra.mxu0 %v1039
        %1135 = vmatpush.bf16.msra.mxu0 %v1036
        %1136 = vmatpush.bf16.msra.mxu0 %v1033
        %1137 = vmatmul.bf16.gmra.mxu0 %v912
        %v1138 = vpop.f32.mrf.mxu0
        %v1139 = vadd.f32 0.0, %v1138
        %v1140 = vpop.f32.mrf.mxu0
        %v1141 = vadd.f32 0.0, %v1140
        %1142 = vmatmul.bf16.gmra.mxu0 %v913
        %v1143 = vpop.f32.mrf.mxu0
        %v1144 = vadd.f32 0.0, %v1143
        %v1145 = vpop.f32.mrf.mxu0
        %v1146 = vadd.f32 0.0, %v1145
        %1147 = vmatmul.bf16.gmra.mxu0 %v914
        %v1148 = vpop.f32.mrf.mxu0
        %v1149 = vadd.f32 0.0, %v1148
        %v1150 = vpop.f32.mrf.mxu0
        %v1151 = vadd.f32 0.0, %v1150
        %1152 = vmatmul.bf16.gmra.mxu0 %v915
        %v1153 = vpop.f32.mrf.mxu0
        %v1154 = vadd.f32 0.0, %v1153
        %v1155 = vpop.f32.mrf.mxu0
        %v1156 = vadd.f32 0.0, %v1155
        %1157 = vmatmul.bf16.gmra.mxu0 %v916
        %v1158 = vpop.f32.mrf.mxu0
        %v1159 = vadd.f32 0.0, %v1158
        %v1160 = vpop.f32.mrf.mxu0
        %v1161 = vadd.f32 0.0, %v1160
        %1162 = vmatmul.bf16.gmra.mxu0 %v917
        %v1163 = vpop.f32.mrf.mxu0
        %v1164 = vadd.f32 0.0, %v1163
        %v1165 = vpop.f32.mrf.mxu0
        %v1166 = vadd.f32 0.0, %v1165
        %1167 = vmatmul.bf16.gmra.mxu0 %v918
        %v1168 = vpop.f32.mrf.mxu0
        %v1169 = vadd.f32 0.0, %v1168
        %v1170 = vpop.f32.mrf.mxu0
        %v1171 = vadd.f32 0.0, %v1170
        %1172 = vmatmul.bf16.gmra.mxu0 %v919
        %v1173 = vpop.f32.mrf.mxu0
        %v1174 = vadd.f32 0.0, %v1173
        %v1175 = vpop.f32.mrf.mxu0
        %v1176 = vadd.f32 0.0, %v1175
        %1177 = vdwg.mxu0
        %1178 = vmatpush.bf16.msra.mxu0 %v1055
        %1179 = vmatpush.bf16.msra.mxu0 %v1052
        %1180 = vmatpush.bf16.msra.mxu0 %v1049
        %1181 = vmatpush.bf16.msra.mxu0 %v1046
        %1182 = vmatpush.bf16.msra.mxu0 %v1043
        %1183 = vmatpush.bf16.msra.mxu0 %v1040
        %1184 = vmatpush.bf16.msra.mxu0 %v1037
        %1185 = vmatpush.bf16.msra.mxu0 %v1034
        %1186 = vmatmul.bf16.gmra.mxu0 %v912
        %v1187 = vpop.f32.mrf.mxu0
        %v1188 = vadd.f32 0.0, %v1187
        %v1189 = vpop.f32.mrf.mxu0
        %v1190 = vadd.f32 0.0, %v1189
        %1191 = vmatmul.bf16.gmra.mxu0 %v913
        %v1192 = vpop.f32.mrf.mxu0
        %v1193 = vadd.f32 0.0, %v1192
        %v1194 = vpop.f32.mrf.mxu0
        %v1195 = vadd.f32 0.0, %v1194
        %1196 = vmatmul.bf16.gmra.mxu0 %v914
        %v1197 = vpop.f32.mrf.mxu0
        %v1198 = vadd.f32 0.0, %v1197
        %v1199 = vpop.f32.mrf.mxu0
        %v1200 = vadd.f32 0.0, %v1199
        %1201 = vmatmul.bf16.gmra.mxu0 %v915
        %v1202 = vpop.f32.mrf.mxu0
        %v1203 = vadd.f32 0.0, %v1202
        %v1204 = vpop.f32.mrf.mxu0
        %v1205 = vadd.f32 0.0, %v1204
        %1206 = vmatmul.bf16.gmra.mxu0 %v916
        %v1207 = vpop.f32.mrf.mxu0
        %v1208 = vadd.f32 0.0, %v1207
        %v1209 = vpop.f32.mrf.mxu0
        %v1210 = vadd.f32 0.0, %v1209
        %1211 = vmatmul.bf16.gmra.mxu0 %v917
        %v1212 = vpop.f32.mrf.mxu0
        %v1213 = vadd.f32 0.0, %v1212
        %v1214 = vpop.f32.mrf.mxu0
        %v1215 = vadd.f32 0.0, %v1214
        %1216 = vmatmul.bf16.gmra.mxu0 %v918
        %v1217 = vpop.f32.mrf.mxu0
        %v1218 = vadd.f32 0.0, %v1217
        %v1219 = vpop.f32.mrf.mxu0
        %v1220 = vadd.f32 0.0, %v1219
        %1221 = vmatmul.bf16.gmra.mxu0 %v919
        %v1222 = vpop.f32.mrf.mxu0
        %v1223 = vadd.f32 0.0, %v1222
        %v1224 = vpop.f32.mrf.mxu0
        %v1225 = vadd.f32 0.0, %v1224
        %1226 = vdwg.mxu0
        %1243 = vrot.lane.b32.xlu0 %v1090, 96
        %v1244 = vpop.permute.xlu0 %1243
        %1245 = vrot.lane.b32.xlu0 %v1092, 96
        %v1246 = vpop.permute.xlu0 %1245
        %1247 = vrot.lane.b32.xlu0 %v1095, 96
        %v1248 = vpop.permute.xlu0 %1247
        %1249 = vrot.lane.b32.xlu0 %v1097, 96
        %v1250 = vpop.permute.xlu0 %1249
        %1251 = vrot.lane.b32.xlu0 %v1100, 96
        %v1252 = vpop.permute.xlu0 %1251
        %1253 = vrot.lane.b32.xlu0 %v1102, 96
        %v1254 = vpop.permute.xlu0 %1253
        %1255 = vrot.lane.b32.xlu0 %v1105, 96
        %v1256 = vpop.permute.xlu0 %1255
        %1257 = vrot.lane.b32.xlu0 %v1107, 96
        %v1258 = vpop.permute.xlu0 %1257
        %1259 = vrot.lane.b32.xlu0 %v1110, 96
        %v1260 = vpop.permute.xlu0 %1259
        %1261 = vrot.lane.b32.xlu0 %v1112, 96
        %v1262 = vpop.permute.xlu0 %1261
        %1263 = vrot.lane.b32.xlu0 %v1115, 96
        %v1264 = vpop.permute.xlu0 %1263
        %1265 = vrot.lane.b32.xlu0 %v1117, 96
        %v1266 = vpop.permute.xlu0 %1265
        %1267 = vrot.lane.b32.xlu0 %v1120, 96
        %v1268 = vpop.permute.xlu0 %1267
        %1269 = vrot.lane.b32.xlu0 %v1122, 96
        %v1270 = vpop.permute.xlu0 %1269
        %1271 = vrot.lane.b32.xlu0 %v1125, 96
        %v1272 = vpop.permute.xlu0 %1271
        %1273 = vrot.lane.b32.xlu0 %v1127, 96
        %v1274 = vpop.permute.xlu0 %1273
        %1291 = vrot.lane.b32.xlu0 %v1090, 64
        %v1292 = vpop.permute.xlu0 %1291
        %1293 = vrot.lane.b32.xlu0 %v1092, 64
        %v1294 = vpop.permute.xlu0 %1293
        %1295 = vrot.lane.b32.xlu0 %v1095, 64
        %v1296 = vpop.permute.xlu0 %1295
        %1297 = vrot.lane.b32.xlu0 %v1097, 64
        %v1298 = vpop.permute.xlu0 %1297
        %1299 = vrot.lane.b32.xlu0 %v1100, 64
        %v1300 = vpop.permute.xlu0 %1299
        %1301 = vrot.lane.b32.xlu0 %v1102, 64
        %v1302 = vpop.permute.xlu0 %1301
        %1303 = vrot.lane.b32.xlu0 %v1105, 64
        %v1304 = vpop.permute.xlu0 %1303
        %1305 = vrot.lane.b32.xlu0 %v1107, 64
        %v1306 = vpop.permute.xlu0 %1305
        %1307 = vrot.lane.b32.xlu0 %v1110, 64
        %v1308 = vpop.permute.xlu0 %1307
        %1309 = vrot.lane.b32.xlu0 %v1112, 64
        %v1310 = vpop.permute.xlu0 %1309
        %1311 = vrot.lane.b32.xlu0 %v1115, 64
        %v1312 = vpop.permute.xlu0 %1311
        %1313 = vrot.lane.b32.xlu0 %v1117, 64
        %v1314 = vpop.permute.xlu0 %1313
        %1315 = vrot.lane.b32.xlu0 %v1120, 64
        %v1316 = vpop.permute.xlu0 %1315
        %1317 = vrot.lane.b32.xlu0 %v1122, 64
        %v1318 = vpop.permute.xlu0 %1317
        %1319 = vrot.lane.b32.xlu0 %v1125, 64
        %v1320 = vpop.permute.xlu0 %1319
        %1321 = vrot.lane.b32.xlu0 %v1127, 64
        %v1322 = vpop.permute.xlu0 %1321
        %1339 = vrot.lane.b32.xlu0 %v1090, 32
        %v1340 = vpop.permute.xlu0 %1339
        %1341 = vrot.lane.b32.xlu0 %v1092, 32
        %v1342 = vpop.permute.xlu0 %1341
        %1343 = vrot.lane.b32.xlu0 %v1095, 32
        %v1344 = vpop.permute.xlu0 %1343
        %1345 = vrot.lane.b32.xlu0 %v1097, 32
        %v1346 = vpop.permute.xlu0 %1345
        %1347 = vrot.lane.b32.xlu0 %v1100, 32
        %v1348 = vpop.permute.xlu0 %1347
        %1349 = vrot.lane.b32.xlu0 %v1102, 32
        %v1350 = vpop.permute.xlu0 %1349
        %1351 = vrot.lane.b32.xlu0 %v1105, 32
        %v1352 = vpop.permute.xlu0 %1351
        %1353 = vrot.lane.b32.xlu0 %v1107, 32
        %v1354 = vpop.permute.xlu0 %1353
        %1355 = vrot.lane.b32.xlu0 %v1110, 32
        %v1356 = vpop.permute.xlu0 %1355
        %1357 = vrot.lane.b32.xlu0 %v1112, 32
        %v1358 = vpop.permute.xlu0 %1357
        %1359 = vrot.lane.b32.xlu0 %v1115, 32
        %v1360 = vpop.permute.xlu0 %1359
        %1361 = vrot.lane.b32.xlu0 %v1117, 32
        %v1362 = vpop.permute.xlu0 %1361
        %1363 = vrot.lane.b32.xlu0 %v1120, 32
        %v1364 = vpop.permute.xlu0 %1363
        %1365 = vrot.lane.b32.xlu0 %v1122, 32
        %v1366 = vpop.permute.xlu0 %1365
        %1367 = vrot.lane.b32.xlu0 %v1125, 32
        %v1368 = vpop.permute.xlu0 %1367
        %1369 = vrot.lane.b32.xlu0 %v1127, 32
        %v1370 = vpop.permute.xlu0 %1369
        %v1387 = vpack.c.bf16 %v1090, %v1090
        %v1388 = vpack.c.bf16 %v1092, %v1092
        %v1389 = vpack.c.bf16 %v1095, %v1095
        %v1390 = vpack.c.bf16 %v1097, %v1097
        %v1391 = vpack.c.bf16 %v1100, %v1100
        %v1392 = vpack.c.bf16 %v1102, %v1102
        %v1393 = vpack.c.bf16 %v1105, %v1105
        %v1394 = vpack.c.bf16 %v1107, %v1107
        %v1395 = vpack.c.bf16 %v1110, %v1110
        %v1396 = vpack.c.bf16 %v1112, %v1112
        %v1397 = vpack.c.bf16 %v1115, %v1115
        %v1398 = vpack.c.bf16 %v1117, %v1117
        %v1399 = vpack.c.bf16 %v1120, %v1120
        %v1400 = vpack.c.bf16 %v1122, %v1122
        %v1401 = vpack.c.bf16 %v1125, %v1125
        %v1402 = vpack.c.bf16 %v1127, %v1127
        %v1403 = vpack.c.bf16 %v1244, %v1244
        %v1404 = vpack.c.bf16 %v1246, %v1246
        %v1405 = vpack.c.bf16 %v1248, %v1248
        %v1406 = vpack.c.bf16 %v1250, %v1250
        %v1407 = vpack.c.bf16 %v1252, %v1252
        %v1408 = vpack.c.bf16 %v1254, %v1254
        %v1409 = vpack.c.bf16 %v1256, %v1256
        %v1410 = vpack.c.bf16 %v1258, %v1258
        %v1411 = vpack.c.bf16 %v1260, %v1260
        %v1412 = vpack.c.bf16 %v1262, %v1262
        %v1413 = vpack.c.bf16 %v1264, %v1264
        %v1414 = vpack.c.bf16 %v1266, %v1266
        %v1415 = vpack.c.bf16 %v1268, %v1268
        %v1416 = vpack.c.bf16 %v1270, %v1270
        %v1417 = vpack.c.bf16 %v1272, %v1272
        %v1418 = vpack.c.bf16 %v1274, %v1274
        %v1419 = vpack.c.bf16 %v1292, %v1292
        %v1420 = vpack.c.bf16 %v1294, %v1294
        %v1421 = vpack.c.bf16 %v1296, %v1296
        %v1422 = vpack.c.bf16 %v1298, %v1298
        %v1423 = vpack.c.bf16 %v1300, %v1300
        %v1424 = vpack.c.bf16 %v1302, %v1302
        %v1425 = vpack.c.bf16 %v1304, %v1304
        %v1426 = vpack.c.bf16 %v1306, %v1306
        %v1427 = vpack.c.bf16 %v1308, %v1308
        %v1428 = vpack.c.bf16 %v1310, %v1310
        %v1429 = vpack.c.bf16 %v1312, %v1312
        %v1430 = vpack.c.bf16 %v1314, %v1314
        %v1431 = vpack.c.bf16 %v1316, %v1316
        %v1432 = vpack.c.bf16 %v1318, %v1318
        %v1433 = vpack.c.bf16 %v1320, %v1320
        %v1434 = vpack.c.bf16 %v1322, %v1322
        %v1435 = vpack.c.bf16 %v1340, %v1340
        %v1436 = vpack.c.bf16 %v1342, %v1342
        %v1437 = vpack.c.bf16 %v1344, %v1344
        %v1438 = vpack.c.bf16 %v1346, %v1346
        %v1439 = vpack.c.bf16 %v1348, %v1348
        %v1440 = vpack.c.bf16 %v1350, %v1350
        %v1441 = vpack.c.bf16 %v1352, %v1352
        %v1442 = vpack.c.bf16 %v1354, %v1354
        %v1443 = vpack.c.bf16 %v1356, %v1356
        %v1444 = vpack.c.bf16 %v1358, %v1358
        %v1445 = vpack.c.bf16 %v1360, %v1360
        %v1446 = vpack.c.bf16 %v1362, %v1362
        %v1447 = vpack.c.bf16 %v1364, %v1364
        %v1448 = vpack.c.bf16 %v1366, %v1366
        %v1449 = vpack.c.bf16 %v1368, %v1368
        %v1450 = vpack.c.bf16 %v1370, %v1370
        %1467 = vrot.lane.b32.xlu0 %v1139, 96
        %v1468 = vpop.permute.xlu0 %1467
        %1469 = vrot.lane.b32.xlu0 %v1141, 96
        %v1470 = vpop.permute.xlu0 %1469
        %1471 = vrot.lane.b32.xlu0 %v1144, 96
        %v1472 = vpop.permute.xlu0 %1471
        %1473 = vrot.lane.b32.xlu0 %v1146, 96
        %v1474 = vpop.permute.xlu0 %1473
        %1475 = vrot.lane.b32.xlu0 %v1149, 96
        %v1476 = vpop.permute.xlu0 %1475
        %1477 = vrot.lane.b32.xlu0 %v1151, 96
        %v1478 = vpop.permute.xlu0 %1477
        %1479 = vrot.lane.b32.xlu0 %v1154, 96
        %v1480 = vpop.permute.xlu0 %1479
        %1481 = vrot.lane.b32.xlu0 %v1156, 96
        %v1482 = vpop.permute.xlu0 %1481
        %1483 = vrot.lane.b32.xlu0 %v1159, 96
        %v1484 = vpop.permute.xlu0 %1483
        %1485 = vrot.lane.b32.xlu0 %v1161, 96
        %v1486 = vpop.permute.xlu0 %1485
        %1487 = vrot.lane.b32.xlu0 %v1164, 96
        %v1488 = vpop.permute.xlu0 %1487
        %1489 = vrot.lane.b32.xlu0 %v1166, 96
        %v1490 = vpop.permute.xlu0 %1489
        %1491 = vrot.lane.b32.xlu0 %v1169, 96
        %v1492 = vpop.permute.xlu0 %1491
        %1493 = vrot.lane.b32.xlu0 %v1171, 96
        %v1494 = vpop.permute.xlu0 %1493
        %1495 = vrot.lane.b32.xlu0 %v1174, 96
        %v1496 = vpop.permute.xlu0 %1495
        %1497 = vrot.lane.b32.xlu0 %v1176, 96
        %v1498 = vpop.permute.xlu0 %1497
        %1515 = vrot.lane.b32.xlu0 %v1139, 64
        %v1516 = vpop.permute.xlu0 %1515
        %1517 = vrot.lane.b32.xlu0 %v1141, 64
        %v1518 = vpop.permute.xlu0 %1517
        %1519 = vrot.lane.b32.xlu0 %v1144, 64
        %v1520 = vpop.permute.xlu0 %1519
        %1521 = vrot.lane.b32.xlu0 %v1146, 64
        %v1522 = vpop.permute.xlu0 %1521
        %1523 = vrot.lane.b32.xlu0 %v1149, 64
        %v1524 = vpop.permute.xlu0 %1523
        %1525 = vrot.lane.b32.xlu0 %v1151, 64
        %v1526 = vpop.permute.xlu0 %1525
        %1527 = vrot.lane.b32.xlu0 %v1154, 64
        %v1528 = vpop.permute.xlu0 %1527
        %1529 = vrot.lane.b32.xlu0 %v1156, 64
        %v1530 = vpop.permute.xlu0 %1529
        %1531 = vrot.lane.b32.xlu0 %v1159, 64
        %v1532 = vpop.permute.xlu0 %1531
        %1533 = vrot.lane.b32.xlu0 %v1161, 64
        %v1534 = vpop.permute.xlu0 %1533
        %1535 = vrot.lane.b32.xlu0 %v1164, 64
        %v1536 = vpop.permute.xlu0 %1535
        %1537 = vrot.lane.b32.xlu0 %v1166, 64
        %v1538 = vpop.permute.xlu0 %1537
        %1539 = vrot.lane.b32.xlu0 %v1169, 64
        %v1540 = vpop.permute.xlu0 %1539
        %1541 = vrot.lane.b32.xlu0 %v1171, 64
        %v1542 = vpop.permute.xlu0 %1541
        %1543 = vrot.lane.b32.xlu0 %v1174, 64
        %v1544 = vpop.permute.xlu0 %1543
        %1545 = vrot.lane.b32.xlu0 %v1176, 64
        %v1546 = vpop.permute.xlu0 %1545
        %1563 = vrot.lane.b32.xlu0 %v1139, 32
        %v1564 = vpop.permute.xlu0 %1563
        %1565 = vrot.lane.b32.xlu0 %v1141, 32
        %v1566 = vpop.permute.xlu0 %1565
        %1567 = vrot.lane.b32.xlu0 %v1144, 32
        %v1568 = vpop.permute.xlu0 %1567
        %1569 = vrot.lane.b32.xlu0 %v1146, 32
        %v1570 = vpop.permute.xlu0 %1569
        %1571 = vrot.lane.b32.xlu0 %v1149, 32
        %v1572 = vpop.permute.xlu0 %1571
        %1573 = vrot.lane.b32.xlu0 %v1151, 32
        %v1574 = vpop.permute.xlu0 %1573
        %1575 = vrot.lane.b32.xlu0 %v1154, 32
        %v1576 = vpop.permute.xlu0 %1575
        %1577 = vrot.lane.b32.xlu0 %v1156, 32
        %v1578 = vpop.permute.xlu0 %1577
        %1579 = vrot.lane.b32.xlu0 %v1159, 32
        %v1580 = vpop.permute.xlu0 %1579
        %1581 = vrot.lane.b32.xlu0 %v1161, 32
        %v1582 = vpop.permute.xlu0 %1581
        %1583 = vrot.lane.b32.xlu0 %v1164, 32
        %v1584 = vpop.permute.xlu0 %1583
        %1585 = vrot.lane.b32.xlu0 %v1166, 32
        %v1586 = vpop.permute.xlu0 %1585
        %1587 = vrot.lane.b32.xlu0 %v1169, 32
        %v1588 = vpop.permute.xlu0 %1587
        %1589 = vrot.lane.b32.xlu0 %v1171, 32
        %v1590 = vpop.permute.xlu0 %1589
        %1591 = vrot.lane.b32.xlu0 %v1174, 32
        %v1592 = vpop.permute.xlu0 %1591
        %1593 = vrot.lane.b32.xlu0 %v1176, 32
        %v1594 = vpop.permute.xlu0 %1593
        %v1611 = vpack.c.bf16 %v1139, %v1139
        %v1612 = vpack.c.bf16 %v1141, %v1141
        %v1613 = vpack.c.bf16 %v1144, %v1144
        %v1614 = vpack.c.bf16 %v1146, %v1146
        %v1615 = vpack.c.bf16 %v1149, %v1149
        %v1616 = vpack.c.bf16 %v1151, %v1151
        %v1617 = vpack.c.bf16 %v1154, %v1154
        %v1618 = vpack.c.bf16 %v1156, %v1156
        %v1619 = vpack.c.bf16 %v1159, %v1159
        %v1620 = vpack.c.bf16 %v1161, %v1161
        %v1621 = vpack.c.bf16 %v1164, %v1164
        %v1622 = vpack.c.bf16 %v1166, %v1166
        %v1623 = vpack.c.bf16 %v1169, %v1169
        %v1624 = vpack.c.bf16 %v1171, %v1171
        %v1625 = vpack.c.bf16 %v1174, %v1174
        %v1626 = vpack.c.bf16 %v1176, %v1176
        %v1627 = vpack.c.bf16 %v1468, %v1468
        %v1628 = vpack.c.bf16 %v1470, %v1470
        %v1629 = vpack.c.bf16 %v1472, %v1472
        %v1630 = vpack.c.bf16 %v1474, %v1474
        %v1631 = vpack.c.bf16 %v1476, %v1476
        %v1632 = vpack.c.bf16 %v1478, %v1478
        %v1633 = vpack.c.bf16 %v1480, %v1480
        %v1634 = vpack.c.bf16 %v1482, %v1482
        %v1635 = vpack.c.bf16 %v1484, %v1484
        %v1636 = vpack.c.bf16 %v1486, %v1486
        %v1637 = vpack.c.bf16 %v1488, %v1488
        %v1638 = vpack.c.bf16 %v1490, %v1490
        %v1639 = vpack.c.bf16 %v1492, %v1492
        %v1640 = vpack.c.bf16 %v1494, %v1494
        %v1641 = vpack.c.bf16 %v1496, %v1496
        %v1642 = vpack.c.bf16 %v1498, %v1498
        %v1643 = vpack.c.bf16 %v1516, %v1516
        %v1644 = vpack.c.bf16 %v1518, %v1518
        %v1645 = vpack.c.bf16 %v1520, %v1520
        %v1646 = vpack.c.bf16 %v1522, %v1522
        %v1647 = vpack.c.bf16 %v1524, %v1524
        %v1648 = vpack.c.bf16 %v1526, %v1526
        %v1649 = vpack.c.bf16 %v1528, %v1528
        %v1650 = vpack.c.bf16 %v1530, %v1530
        %v1651 = vpack.c.bf16 %v1532, %v1532
        %v1652 = vpack.c.bf16 %v1534, %v1534
        %v1653 = vpack.c.bf16 %v1536, %v1536
        %v1654 = vpack.c.bf16 %v1538, %v1538
        %v1655 = vpack.c.bf16 %v1540, %v1540
        %v1656 = vpack.c.bf16 %v1542, %v1542
        %v1657 = vpack.c.bf16 %v1544, %v1544
        %v1658 = vpack.c.bf16 %v1546, %v1546
        %v1659 = vpack.c.bf16 %v1564, %v1564
        %v1660 = vpack.c.bf16 %v1566, %v1566
        %v1661 = vpack.c.bf16 %v1568, %v1568
        %v1662 = vpack.c.bf16 %v1570, %v1570
        %v1663 = vpack.c.bf16 %v1572, %v1572
        %v1664 = vpack.c.bf16 %v1574, %v1574
        %v1665 = vpack.c.bf16 %v1576, %v1576
        %v1666 = vpack.c.bf16 %v1578, %v1578
        %v1667 = vpack.c.bf16 %v1580, %v1580
        %v1668 = vpack.c.bf16 %v1582, %v1582
        %v1669 = vpack.c.bf16 %v1584, %v1584
        %v1670 = vpack.c.bf16 %v1586, %v1586
        %v1671 = vpack.c.bf16 %v1588, %v1588
        %v1672 = vpack.c.bf16 %v1590, %v1590
        %v1673 = vpack.c.bf16 %v1592, %v1592
        %v1674 = vpack.c.bf16 %v1594, %v1594
        %1691 = vrot.lane.b32.xlu0 %v1188, 96
        %v1692 = vpop.permute.xlu0 %1691
        %1693 = vrot.lane.b32.xlu0 %v1190, 96
        %v1694 = vpop.permute.xlu0 %1693
        %1695 = vrot.lane.b32.xlu0 %v1193, 96
        %v1696 = vpop.permute.xlu0 %1695
        %1697 = vrot.lane.b32.xlu0 %v1195, 96
        %v1698 = vpop.permute.xlu0 %1697
        %1699 = vrot.lane.b32.xlu0 %v1198, 96
        %v1700 = vpop.permute.xlu0 %1699
        %1701 = vrot.lane.b32.xlu0 %v1200, 96
        %v1702 = vpop.permute.xlu0 %1701
        %1703 = vrot.lane.b32.xlu0 %v1203, 96
        %v1704 = vpop.permute.xlu0 %1703
        %1705 = vrot.lane.b32.xlu0 %v1205, 96
        %v1706 = vpop.permute.xlu0 %1705
        %1707 = vrot.lane.b32.xlu0 %v1208, 96
        %v1708 = vpop.permute.xlu0 %1707
        %1709 = vrot.lane.b32.xlu0 %v1210, 96
        %v1710 = vpop.permute.xlu0 %1709
        %1711 = vrot.lane.b32.xlu0 %v1213, 96
        %v1712 = vpop.permute.xlu0 %1711
        %1713 = vrot.lane.b32.xlu0 %v1215, 96
        %v1714 = vpop.permute.xlu0 %1713
        %1715 = vrot.lane.b32.xlu0 %v1218, 96
        %v1716 = vpop.permute.xlu0 %1715
        %1717 = vrot.lane.b32.xlu0 %v1220, 96
        %v1718 = vpop.permute.xlu0 %1717
        %1719 = vrot.lane.b32.xlu0 %v1223, 96
        %v1720 = vpop.permute.xlu0 %1719
        %1721 = vrot.lane.b32.xlu0 %v1225, 96
        %v1722 = vpop.permute.xlu0 %1721
        %1739 = vrot.lane.b32.xlu0 %v1188, 64
        %v1740 = vpop.permute.xlu0 %1739
        %1741 = vrot.lane.b32.xlu0 %v1190, 64
        %v1742 = vpop.permute.xlu0 %1741
        %1743 = vrot.lane.b32.xlu0 %v1193, 64
        %v1744 = vpop.permute.xlu0 %1743
        %1745 = vrot.lane.b32.xlu0 %v1195, 64
        %v1746 = vpop.permute.xlu0 %1745
        %1747 = vrot.lane.b32.xlu0 %v1198, 64
        %v1748 = vpop.permute.xlu0 %1747
        %1749 = vrot.lane.b32.xlu0 %v1200, 64
        %v1750 = vpop.permute.xlu0 %1749
        %1751 = vrot.lane.b32.xlu0 %v1203, 64
        %v1752 = vpop.permute.xlu0 %1751
        %1753 = vrot.lane.b32.xlu0 %v1205, 64
        %v1754 = vpop.permute.xlu0 %1753
        %1755 = vrot.lane.b32.xlu0 %v1208, 64
        %v1756 = vpop.permute.xlu0 %1755
        %1757 = vrot.lane.b32.xlu0 %v1210, 64
        %v1758 = vpop.permute.xlu0 %1757
        %1759 = vrot.lane.b32.xlu0 %v1213, 64
        %v1760 = vpop.permute.xlu0 %1759
        %1761 = vrot.lane.b32.xlu0 %v1215, 64
        %v1762 = vpop.permute.xlu0 %1761
        %1763 = vrot.lane.b32.xlu0 %v1218, 64
        %v1764 = vpop.permute.xlu0 %1763
        %1765 = vrot.lane.b32.xlu0 %v1220, 64
        %v1766 = vpop.permute.xlu0 %1765
        %1767 = vrot.lane.b32.xlu0 %v1223, 64
        %v1768 = vpop.permute.xlu0 %1767
        %1769 = vrot.lane.b32.xlu0 %v1225, 64
        %v1770 = vpop.permute.xlu0 %1769
        %1787 = vrot.lane.b32.xlu0 %v1188, 32
        %v1788 = vpop.permute.xlu0 %1787
        %1789 = vrot.lane.b32.xlu0 %v1190, 32
        %v1790 = vpop.permute.xlu0 %1789
        %1791 = vrot.lane.b32.xlu0 %v1193, 32
        %v1792 = vpop.permute.xlu0 %1791
        %1793 = vrot.lane.b32.xlu0 %v1195, 32
        %v1794 = vpop.permute.xlu0 %1793
        %1795 = vrot.lane.b32.xlu0 %v1198, 32
        %v1796 = vpop.permute.xlu0 %1795
        %1797 = vrot.lane.b32.xlu0 %v1200, 32
        %v1798 = vpop.permute.xlu0 %1797
        %1799 = vrot.lane.b32.xlu0 %v1203, 32
        %v1800 = vpop.permute.xlu0 %1799
        %1801 = vrot.lane.b32.xlu0 %v1205, 32
        %v1802 = vpop.permute.xlu0 %1801
        %1803 = vrot.lane.b32.xlu0 %v1208, 32
        %v1804 = vpop.permute.xlu0 %1803
        %1805 = vrot.lane.b32.xlu0 %v1210, 32
        %v1806 = vpop.permute.xlu0 %1805
        %1807 = vrot.lane.b32.xlu0 %v1213, 32
        %v1808 = vpop.permute.xlu0 %1807
        %1809 = vrot.lane.b32.xlu0 %v1215, 32
        %v1810 = vpop.permute.xlu0 %1809
        %1811 = vrot.lane.b32.xlu0 %v1218, 32
        %v1812 = vpop.permute.xlu0 %1811
        %1813 = vrot.lane.b32.xlu0 %v1220, 32
        %v1814 = vpop.permute.xlu0 %1813
        %1815 = vrot.lane.b32.xlu0 %v1223, 32
        %v1816 = vpop.permute.xlu0 %1815
        %1817 = vrot.lane.b32.xlu0 %v1225, 32
        %v1818 = vpop.permute.xlu0 %1817
        %v1835 = vpack.c.bf16 %v1188, %v1188
        %v1836 = vpack.c.bf16 %v1190, %v1190
        %v1837 = vpack.c.bf16 %v1193, %v1193
        %v1838 = vpack.c.bf16 %v1195, %v1195
        %v1839 = vpack.c.bf16 %v1198, %v1198
        %v1840 = vpack.c.bf16 %v1200, %v1200
        %v1841 = vpack.c.bf16 %v1203, %v1203
        %v1842 = vpack.c.bf16 %v1205, %v1205
        %v1843 = vpack.c.bf16 %v1208, %v1208
        %v1844 = vpack.c.bf16 %v1210, %v1210
        %v1845 = vpack.c.bf16 %v1213, %v1213
        %v1846 = vpack.c.bf16 %v1215, %v1215
        %v1847 = vpack.c.bf16 %v1218, %v1218
        %v1848 = vpack.c.bf16 %v1220, %v1220
        %v1849 = vpack.c.bf16 %v1223, %v1223
        %v1850 = vpack.c.bf16 %v1225, %v1225
        %v1851 = vpack.c.bf16 %v1692, %v1692
        %v1852 = vpack.c.bf16 %v1694, %v1694
        %v1853 = vpack.c.bf16 %v1696, %v1696
        %v1854 = vpack.c.bf16 %v1698, %v1698
        %v1855 = vpack.c.bf16 %v1700, %v1700
        %v1856 = vpack.c.bf16 %v1702, %v1702
        %v1857 = vpack.c.bf16 %v1704, %v1704
        %v1858 = vpack.c.bf16 %v1706, %v1706
        %v1859 = vpack.c.bf16 %v1708, %v1708
        %v1860 = vpack.c.bf16 %v1710, %v1710
        %v1861 = vpack.c.bf16 %v1712, %v1712
        %v1862 = vpack.c.bf16 %v1714, %v1714
        %v1863 = vpack.c.bf16 %v1716, %v1716
        %v1864 = vpack.c.bf16 %v1718, %v1718
        %v1865 = vpack.c.bf16 %v1720, %v1720
        %v1866 = vpack.c.bf16 %v1722, %v1722
        %v1867 = vpack.c.bf16 %v1740, %v1740
        %v1868 = vpack.c.bf16 %v1742, %v1742
        %v1869 = vpack.c.bf16 %v1744, %v1744
        %v1870 = vpack.c.bf16 %v1746, %v1746
        %v1871 = vpack.c.bf16 %v1748, %v1748
        %v1872 = vpack.c.bf16 %v1750, %v1750
        %v1873 = vpack.c.bf16 %v1752, %v1752
        %v1874 = vpack.c.bf16 %v1754, %v1754
        %v1875 = vpack.c.bf16 %v1756, %v1756
        %v1876 = vpack.c.bf16 %v1758, %v1758
        %v1877 = vpack.c.bf16 %v1760, %v1760
        %v1878 = vpack.c.bf16 %v1762, %v1762
        %v1879 = vpack.c.bf16 %v1764, %v1764
        %v1880 = vpack.c.bf16 %v1766, %v1766
        %v1881 = vpack.c.bf16 %v1768, %v1768
        %v1882 = vpack.c.bf16 %v1770, %v1770
        %v1883 = vpack.c.bf16 %v1788, %v1788
        %v1884 = vpack.c.bf16 %v1790, %v1790
        %v1885 = vpack.c.bf16 %v1792, %v1792
        %v1886 = vpack.c.bf16 %v1794, %v1794
        %v1887 = vpack.c.bf16 %v1796, %v1796
        %v1888 = vpack.c.bf16 %v1798, %v1798
        %v1889 = vpack.c.bf16 %v1800, %v1800
        %v1890 = vpack.c.bf16 %v1802, %v1802
        %v1891 = vpack.c.bf16 %v1804, %v1804
        %v1892 = vpack.c.bf16 %v1806, %v1806
        %v1893 = vpack.c.bf16 %v1808, %v1808
        %v1894 = vpack.c.bf16 %v1810, %v1810
        %v1895 = vpack.c.bf16 %v1812, %v1812
        %v1896 = vpack.c.bf16 %v1814, %v1814
        %v1897 = vpack.c.bf16 %v1816, %v1816
        %v1898 = vpack.c.bf16 %v1818, %v1818
        %v1915 = vunpack.c.l.b16 %v1387
        %v1916 = vunpack.c.l.b16 %v1388
        %v1917 = vunpack.c.l.b16 %v1389
        %v1918 = vunpack.c.l.b16 %v1390
        %v1919 = vunpack.c.l.b16 %v1391
        %v1920 = vunpack.c.l.b16 %v1392
        %v1921 = vunpack.c.l.b16 %v1393
        %v1922 = vunpack.c.l.b16 %v1394
        %v1923 = vunpack.c.l.b16 %v1395
        %v1924 = vunpack.c.l.b16 %v1396
        %v1925 = vunpack.c.l.b16 %v1397
        %v1926 = vunpack.c.l.b16 %v1398
        %v1927 = vunpack.c.l.b16 %v1399
        %v1928 = vunpack.c.l.b16 %v1400
        %v1929 = vunpack.c.l.b16 %v1401
        %v1930 = vunpack.c.l.b16 %v1402
        %v1931 = vpack.c.b16 %v1916, %v1915
        %v1932 = vpack.c.b16 %v1918, %v1917
        %v1933 = vpack.c.b16 %v1920, %v1919
        %v1934 = vpack.c.b16 %v1922, %v1921
        %v1935 = vpack.c.b16 %v1924, %v1923
        %v1936 = vpack.c.b16 %v1926, %v1925
        %v1937 = vpack.c.b16 %v1928, %v1927
        %v1938 = vpack.c.b16 %v1930, %v1929
        %v1955 = vunpack.c.l.b16 %v1611
        %v1956 = vunpack.c.l.b16 %v1612
        %v1957 = vunpack.c.l.b16 %v1613
        %v1958 = vunpack.c.l.b16 %v1614
        %v1959 = vunpack.c.l.b16 %v1615
        %v1960 = vunpack.c.l.b16 %v1616
        %v1961 = vunpack.c.l.b16 %v1617
        %v1962 = vunpack.c.l.b16 %v1618
        %v1963 = vunpack.c.l.b16 %v1619
        %v1964 = vunpack.c.l.b16 %v1620
        %v1965 = vunpack.c.l.b16 %v1621
        %v1966 = vunpack.c.l.b16 %v1622
        %v1967 = vunpack.c.l.b16 %v1623
        %v1968 = vunpack.c.l.b16 %v1624
        %v1969 = vunpack.c.l.b16 %v1625
        %v1970 = vunpack.c.l.b16 %v1626
        %v1971 = vpack.c.b16 %v1956, %v1955
        %v1972 = vpack.c.b16 %v1958, %v1957
        %v1973 = vpack.c.b16 %v1960, %v1959
        %v1974 = vpack.c.b16 %v1962, %v1961
        %v1975 = vpack.c.b16 %v1964, %v1963
        %v1976 = vpack.c.b16 %v1966, %v1965
        %v1977 = vpack.c.b16 %v1968, %v1967
        %v1978 = vpack.c.b16 %v1970, %v1969
        %vm1979 = vcmask 261120
        %v1981 = vsel %vm1979, %v1931, 0
        %v1984 = vsel %vm1979, %v1932, 0
        %v1987 = vsel %vm1979, %v1933, 0
        %v1990 = vsel %vm1979, %v1934, 0
        %v1993 = vsel %vm1979, %v1935, 0
        %v1996 = vsel %vm1979, %v1936, 0
        %v1999 = vsel %vm1979, %v1937, 0
        %v2002 = vsel %vm1979, %v1938, 0
        %v2005 = vsel %vm1979, %v1971, 0
        %v2008 = vsel %vm1979, %v1972, 0
        %v2011 = vsel %vm1979, %v1973, 0
        %v2014 = vsel %vm1979, %v1974, 0
        %v2017 = vsel %vm1979, %v1975, 0
        %v2020 = vsel %vm1979, %v1976, 0
        %v2023 = vsel %vm1979, %v1977, 0
        %v2026 = vsel %vm1979, %v1978, 0
        %2028 = vmatpush.bf16.xpose.msra.mxu0 %v2026
        %2029 = vmatpush.bf16.xpose.msra.mxu0 %v2023
        %2030 = vmatpush.bf16.xpose.msra.mxu0 %v2020
        %2031 = vmatpush.bf16.xpose.msra.mxu0 %v2017
        %2032 = vmatpush.bf16.xpose.msra.mxu0 %v2014
        %2033 = vmatpush.bf16.xpose.msra.mxu0 %v2011
        %2034 = vmatpush.bf16.xpose.msra.mxu0 %v2008
        %2035 = vmatpush.bf16.xpose.msra.mxu0 %v2005
        %2036 = vmatmul.bf16.gmra.mxu0 %v1981
        %v2037 = vpop.f32.mrf.mxu0
        %v2038 = vadd.f32 0.0, %v2037
        %v2039 = vpop.f32.mrf.mxu0
        %v2040 = vadd.f32 0.0, %v2039
        %2041 = vmatmul.bf16.gmra.mxu0 %v1984
        %v2042 = vpop.f32.mrf.mxu0
        %v2043 = vadd.f32 0.0, %v2042
        %v2044 = vpop.f32.mrf.mxu0
        %v2045 = vadd.f32 0.0, %v2044
        %2046 = vmatmul.bf16.gmra.mxu0 %v1987
        %v2047 = vpop.f32.mrf.mxu0
        %v2048 = vadd.f32 0.0, %v2047
        %v2049 = vpop.f32.mrf.mxu0
        %v2050 = vadd.f32 0.0, %v2049
        %2051 = vmatmul.bf16.gmra.mxu0 %v1990
        %v2052 = vpop.f32.mrf.mxu0
        %v2053 = vadd.f32 0.0, %v2052
        %v2054 = vpop.f32.mrf.mxu0
        %v2055 = vadd.f32 0.0, %v2054
        %2056 = vmatmul.bf16.gmra.mxu0 %v1993
        %v2057 = vpop.f32.mrf.mxu0
        %v2058 = vadd.f32 0.0, %v2057
        %v2059 = vpop.f32.mrf.mxu0
        %v2060 = vadd.f32 0.0, %v2059
        %2061 = vmatmul.bf16.gmra.mxu0 %v1996
        %v2062 = vpop.f32.mrf.mxu0
        %v2063 = vadd.f32 0.0, %v2062
        %v2064 = vpop.f32.mrf.mxu0
        %v2065 = vadd.f32 0.0, %v2064
        %2066 = vmatmul.bf16.gmra.mxu0 %v1999
        %v2067 = vpop.f32.mrf.mxu0
        %v2068 = vadd.f32 0.0, %v2067
        %v2069 = vpop.f32.mrf.mxu0
        %v2070 = vadd.f32 0.0, %v2069
        %2071 = vmatmul.bf16.gmra.mxu0 %v2002
        %v2072 = vpop.f32.mrf.mxu0
        %v2073 = vadd.f32 0.0, %v2072
        %v2074 = vpop.f32.mrf.mxu0
        %v2075 = vadd.f32 0.0, %v2074
        %2076 = vdwg.mxu0
        %v2093 = vunpack.c.l.b16 %v1403
        %v2094 = vunpack.c.l.b16 %v1404
        %v2095 = vunpack.c.l.b16 %v1405
        %v2096 = vunpack.c.l.b16 %v1406
        %v2097 = vunpack.c.l.b16 %v1407
        %v2098 = vunpack.c.l.b16 %v1408
        %v2099 = vunpack.c.l.b16 %v1409
        %v2100 = vunpack.c.l.b16 %v1410
        %v2101 = vunpack.c.l.b16 %v1411
        %v2102 = vunpack.c.l.b16 %v1412
        %v2103 = vunpack.c.l.b16 %v1413
        %v2104 = vunpack.c.l.b16 %v1414
        %v2105 = vunpack.c.l.b16 %v1415
        %v2106 = vunpack.c.l.b16 %v1416
        %v2107 = vunpack.c.l.b16 %v1417
        %v2108 = vunpack.c.l.b16 %v1418
        %v2109 = vpack.c.b16 %v2094, %v2093
        %v2110 = vpack.c.b16 %v2096, %v2095
        %v2111 = vpack.c.b16 %v2098, %v2097
        %v2112 = vpack.c.b16 %v2100, %v2099
        %v2113 = vpack.c.b16 %v2102, %v2101
        %v2114 = vpack.c.b16 %v2104, %v2103
        %v2115 = vpack.c.b16 %v2106, %v2105
        %v2116 = vpack.c.b16 %v2108, %v2107
        %v2133 = vunpack.c.l.b16 %v1627
        %v2134 = vunpack.c.l.b16 %v1628
        %v2135 = vunpack.c.l.b16 %v1629
        %v2136 = vunpack.c.l.b16 %v1630
        %v2137 = vunpack.c.l.b16 %v1631
        %v2138 = vunpack.c.l.b16 %v1632
        %v2139 = vunpack.c.l.b16 %v1633
        %v2140 = vunpack.c.l.b16 %v1634
        %v2141 = vunpack.c.l.b16 %v1635
        %v2142 = vunpack.c.l.b16 %v1636
        %v2143 = vunpack.c.l.b16 %v1637
        %v2144 = vunpack.c.l.b16 %v1638
        %v2145 = vunpack.c.l.b16 %v1639
        %v2146 = vunpack.c.l.b16 %v1640
        %v2147 = vunpack.c.l.b16 %v1641
        %v2148 = vunpack.c.l.b16 %v1642
        %v2149 = vpack.c.b16 %v2134, %v2133
        %v2150 = vpack.c.b16 %v2136, %v2135
        %v2151 = vpack.c.b16 %v2138, %v2137
        %v2152 = vpack.c.b16 %v2140, %v2139
        %v2153 = vpack.c.b16 %v2142, %v2141
        %v2154 = vpack.c.b16 %v2144, %v2143
        %v2155 = vpack.c.b16 %v2146, %v2145
        %v2156 = vpack.c.b16 %v2148, %v2147
        %v2158 = vsel %vm1979, %v2109, 0
        %v2161 = vsel %vm1979, %v2110, 0
        %v2164 = vsel %vm1979, %v2111, 0
        %v2167 = vsel %vm1979, %v2112, 0
        %v2170 = vsel %vm1979, %v2113, 0
        %v2173 = vsel %vm1979, %v2114, 0
        %v2176 = vsel %vm1979, %v2115, 0
        %v2179 = vsel %vm1979, %v2116, 0
        %v2182 = vsel %vm1979, %v2149, 0
        %v2185 = vsel %vm1979, %v2150, 0
        %v2188 = vsel %vm1979, %v2151, 0
        %v2191 = vsel %vm1979, %v2152, 0
        %v2194 = vsel %vm1979, %v2153, 0
        %v2197 = vsel %vm1979, %v2154, 0
        %v2200 = vsel %vm1979, %v2155, 0
        %v2203 = vsel %vm1979, %v2156, 0
        %2205 = vmatpush.bf16.xpose.msra.mxu0 %v2203
        %2206 = vmatpush.bf16.xpose.msra.mxu0 %v2200
        %2207 = vmatpush.bf16.xpose.msra.mxu0 %v2197
        %2208 = vmatpush.bf16.xpose.msra.mxu0 %v2194
        %2209 = vmatpush.bf16.xpose.msra.mxu0 %v2191
        %2210 = vmatpush.bf16.xpose.msra.mxu0 %v2188
        %2211 = vmatpush.bf16.xpose.msra.mxu0 %v2185
        %2212 = vmatpush.bf16.xpose.msra.mxu0 %v2182
        %2213 = vmatmul.bf16.gmra.mxu0 %v2158
        %v2214 = vpop.f32.mrf.mxu0
        %v2215 = vadd.f32 0.0, %v2214
        %v2216 = vpop.f32.mrf.mxu0
        %v2217 = vadd.f32 0.0, %v2216
        %2218 = vmatmul.bf16.gmra.mxu0 %v2161
        %v2219 = vpop.f32.mrf.mxu0
        %v2220 = vadd.f32 0.0, %v2219
        %v2221 = vpop.f32.mrf.mxu0
        %v2222 = vadd.f32 0.0, %v2221
        %2223 = vmatmul.bf16.gmra.mxu0 %v2164
        %v2224 = vpop.f32.mrf.mxu0
        %v2225 = vadd.f32 0.0, %v2224
        %v2226 = vpop.f32.mrf.mxu0
        %v2227 = vadd.f32 0.0, %v2226
        %2228 = vmatmul.bf16.gmra.mxu0 %v2167
        %v2229 = vpop.f32.mrf.mxu0
        %v2230 = vadd.f32 0.0, %v2229
        %v2231 = vpop.f32.mrf.mxu0
        %v2232 = vadd.f32 0.0, %v2231
        %2233 = vmatmul.bf16.gmra.mxu0 %v2170
        %v2234 = vpop.f32.mrf.mxu0
        %v2235 = vadd.f32 0.0, %v2234
        %v2236 = vpop.f32.mrf.mxu0
        %v2237 = vadd.f32 0.0, %v2236
        %2238 = vmatmul.bf16.gmra.mxu0 %v2173
        %v2239 = vpop.f32.mrf.mxu0
        %v2240 = vadd.f32 0.0, %v2239
        %v2241 = vpop.f32.mrf.mxu0
        %v2242 = vadd.f32 0.0, %v2241
        %2243 = vmatmul.bf16.gmra.mxu0 %v2176
        %v2244 = vpop.f32.mrf.mxu0
        %v2245 = vadd.f32 0.0, %v2244
        %v2246 = vpop.f32.mrf.mxu0
        %v2247 = vadd.f32 0.0, %v2246
        %2248 = vmatmul.bf16.gmra.mxu0 %v2179
        %v2249 = vpop.f32.mrf.mxu0
        %v2250 = vadd.f32 0.0, %v2249
        %v2251 = vpop.f32.mrf.mxu0
        %v2252 = vadd.f32 0.0, %v2251
        %2253 = vdwg.mxu0
        %v2270 = vunpack.c.l.b16 %v1419
        %v2271 = vunpack.c.l.b16 %v1420
        %v2272 = vunpack.c.l.b16 %v1421
        %v2273 = vunpack.c.l.b16 %v1422
        %v2274 = vunpack.c.l.b16 %v1423
        %v2275 = vunpack.c.l.b16 %v1424
        %v2276 = vunpack.c.l.b16 %v1425
        %v2277 = vunpack.c.l.b16 %v1426
        %v2278 = vunpack.c.l.b16 %v1427
        %v2279 = vunpack.c.l.b16 %v1428
        %v2280 = vunpack.c.l.b16 %v1429
        %v2281 = vunpack.c.l.b16 %v1430
        %v2282 = vunpack.c.l.b16 %v1431
        %v2283 = vunpack.c.l.b16 %v1432
        %v2284 = vunpack.c.l.b16 %v1433
        %v2285 = vunpack.c.l.b16 %v1434
        %v2286 = vpack.c.b16 %v2271, %v2270
        %v2287 = vpack.c.b16 %v2273, %v2272
        %v2288 = vpack.c.b16 %v2275, %v2274
        %v2289 = vpack.c.b16 %v2277, %v2276
        %v2290 = vpack.c.b16 %v2279, %v2278
        %v2291 = vpack.c.b16 %v2281, %v2280
        %v2292 = vpack.c.b16 %v2283, %v2282
        %v2293 = vpack.c.b16 %v2285, %v2284
        %v2310 = vunpack.c.l.b16 %v1643
        %v2311 = vunpack.c.l.b16 %v1644
        %v2312 = vunpack.c.l.b16 %v1645
        %v2313 = vunpack.c.l.b16 %v1646
        %v2314 = vunpack.c.l.b16 %v1647
        %v2315 = vunpack.c.l.b16 %v1648
        %v2316 = vunpack.c.l.b16 %v1649
        %v2317 = vunpack.c.l.b16 %v1650
        %v2318 = vunpack.c.l.b16 %v1651
        %v2319 = vunpack.c.l.b16 %v1652
        %v2320 = vunpack.c.l.b16 %v1653
        %v2321 = vunpack.c.l.b16 %v1654
        %v2322 = vunpack.c.l.b16 %v1655
        %v2323 = vunpack.c.l.b16 %v1656
        %v2324 = vunpack.c.l.b16 %v1657
        %v2325 = vunpack.c.l.b16 %v1658
        %v2326 = vpack.c.b16 %v2311, %v2310
        %v2327 = vpack.c.b16 %v2313, %v2312
        %v2328 = vpack.c.b16 %v2315, %v2314
        %v2329 = vpack.c.b16 %v2317, %v2316
        %v2330 = vpack.c.b16 %v2319, %v2318
        %v2331 = vpack.c.b16 %v2321, %v2320
        %v2332 = vpack.c.b16 %v2323, %v2322
        %v2333 = vpack.c.b16 %v2325, %v2324
        %v2335 = vsel %vm1979, %v2286, 0
        %v2338 = vsel %vm1979, %v2287, 0
        %v2341 = vsel %vm1979, %v2288, 0
        %v2344 = vsel %vm1979, %v2289, 0
        %v2347 = vsel %vm1979, %v2290, 0
        %v2350 = vsel %vm1979, %v2291, 0
        %v2353 = vsel %vm1979, %v2292, 0
        %v2356 = vsel %vm1979, %v2293, 0
        %v2359 = vsel %vm1979, %v2326, 0
        %v2362 = vsel %vm1979, %v2327, 0
        %v2365 = vsel %vm1979, %v2328, 0
        %v2368 = vsel %vm1979, %v2329, 0
        %v2371 = vsel %vm1979, %v2330, 0
        %v2374 = vsel %vm1979, %v2331, 0
        %v2377 = vsel %vm1979, %v2332, 0
        %v2380 = vsel %vm1979, %v2333, 0
        %2382 = vmatpush.bf16.xpose.msra.mxu0 %v2380
        %2383 = vmatpush.bf16.xpose.msra.mxu0 %v2377
        %2384 = vmatpush.bf16.xpose.msra.mxu0 %v2374
        %2385 = vmatpush.bf16.xpose.msra.mxu0 %v2371
        %2386 = vmatpush.bf16.xpose.msra.mxu0 %v2368
        %2387 = vmatpush.bf16.xpose.msra.mxu0 %v2365
        %2388 = vmatpush.bf16.xpose.msra.mxu0 %v2362
        %2389 = vmatpush.bf16.xpose.msra.mxu0 %v2359
        %2390 = vmatmul.bf16.gmra.mxu0 %v2335
        %v2391 = vpop.f32.mrf.mxu0
        %v2392 = vadd.f32 0.0, %v2391
        %v2393 = vpop.f32.mrf.mxu0
        %v2394 = vadd.f32 0.0, %v2393
        %2395 = vmatmul.bf16.gmra.mxu0 %v2338
        %v2396 = vpop.f32.mrf.mxu0
        %v2397 = vadd.f32 0.0, %v2396
        %v2398 = vpop.f32.mrf.mxu0
        %v2399 = vadd.f32 0.0, %v2398
        %2400 = vmatmul.bf16.gmra.mxu0 %v2341
        %v2401 = vpop.f32.mrf.mxu0
        %v2402 = vadd.f32 0.0, %v2401
        %v2403 = vpop.f32.mrf.mxu0
        %v2404 = vadd.f32 0.0, %v2403
        %2405 = vmatmul.bf16.gmra.mxu0 %v2344
        %v2406 = vpop.f32.mrf.mxu0
        %v2407 = vadd.f32 0.0, %v2406
        %v2408 = vpop.f32.mrf.mxu0
        %v2409 = vadd.f32 0.0, %v2408
        %2410 = vmatmul.bf16.gmra.mxu0 %v2347
        %v2411 = vpop.f32.mrf.mxu0
        %v2412 = vadd.f32 0.0, %v2411
        %v2413 = vpop.f32.mrf.mxu0
        %v2414 = vadd.f32 0.0, %v2413
        %2415 = vmatmul.bf16.gmra.mxu0 %v2350
        %v2416 = vpop.f32.mrf.mxu0
        %v2417 = vadd.f32 0.0, %v2416
        %v2418 = vpop.f32.mrf.mxu0
        %v2419 = vadd.f32 0.0, %v2418
        %2420 = vmatmul.bf16.gmra.mxu0 %v2353
        %v2421 = vpop.f32.mrf.mxu0
        %v2422 = vadd.f32 0.0, %v2421
        %v2423 = vpop.f32.mrf.mxu0
        %v2424 = vadd.f32 0.0, %v2423
        %2425 = vmatmul.bf16.gmra.mxu0 %v2356
        %v2426 = vpop.f32.mrf.mxu0
        %v2427 = vadd.f32 0.0, %v2426
        %v2428 = vpop.f32.mrf.mxu0
        %v2429 = vadd.f32 0.0, %v2428
        %2430 = vdwg.mxu0
        %v2447 = vunpack.c.l.b16 %v1435
        %v2448 = vunpack.c.l.b16 %v1436
        %v2449 = vunpack.c.l.b16 %v1437
        %v2450 = vunpack.c.l.b16 %v1438
        %v2451 = vunpack.c.l.b16 %v1439
        %v2452 = vunpack.c.l.b16 %v1440
        %v2453 = vunpack.c.l.b16 %v1441
        %v2454 = vunpack.c.l.b16 %v1442
        %v2455 = vunpack.c.l.b16 %v1443
        %v2456 = vunpack.c.l.b16 %v1444
        %v2457 = vunpack.c.l.b16 %v1445
        %v2458 = vunpack.c.l.b16 %v1446
        %v2459 = vunpack.c.l.b16 %v1447
        %v2460 = vunpack.c.l.b16 %v1448
        %v2461 = vunpack.c.l.b16 %v1449
        %v2462 = vunpack.c.l.b16 %v1450
        %v2463 = vpack.c.b16 %v2448, %v2447
        %v2464 = vpack.c.b16 %v2450, %v2449
        %v2465 = vpack.c.b16 %v2452, %v2451
        %v2466 = vpack.c.b16 %v2454, %v2453
        %v2467 = vpack.c.b16 %v2456, %v2455
        %v2468 = vpack.c.b16 %v2458, %v2457
        %v2469 = vpack.c.b16 %v2460, %v2459
        %v2470 = vpack.c.b16 %v2462, %v2461
        %v2487 = vunpack.c.l.b16 %v1659
        %v2488 = vunpack.c.l.b16 %v1660
        %v2489 = vunpack.c.l.b16 %v1661
        %v2490 = vunpack.c.l.b16 %v1662
        %v2491 = vunpack.c.l.b16 %v1663
        %v2492 = vunpack.c.l.b16 %v1664
        %v2493 = vunpack.c.l.b16 %v1665
        %v2494 = vunpack.c.l.b16 %v1666
        %v2495 = vunpack.c.l.b16 %v1667
        %v2496 = vunpack.c.l.b16 %v1668
        %v2497 = vunpack.c.l.b16 %v1669
        %v2498 = vunpack.c.l.b16 %v1670
        %v2499 = vunpack.c.l.b16 %v1671
        %v2500 = vunpack.c.l.b16 %v1672
        %v2501 = vunpack.c.l.b16 %v1673
        %v2502 = vunpack.c.l.b16 %v1674
        %v2503 = vpack.c.b16 %v2488, %v2487
        %v2504 = vpack.c.b16 %v2490, %v2489
        %v2505 = vpack.c.b16 %v2492, %v2491
        %v2506 = vpack.c.b16 %v2494, %v2493
        %v2507 = vpack.c.b16 %v2496, %v2495
        %v2508 = vpack.c.b16 %v2498, %v2497
        %v2509 = vpack.c.b16 %v2500, %v2499
        %v2510 = vpack.c.b16 %v2502, %v2501
        %v2512 = vsel %vm1979, %v2463, 0
        %v2515 = vsel %vm1979, %v2464, 0
        %v2518 = vsel %vm1979, %v2465, 0
        %v2521 = vsel %vm1979, %v2466, 0
        %v2524 = vsel %vm1979, %v2467, 0
        %v2527 = vsel %vm1979, %v2468, 0
        %v2530 = vsel %vm1979, %v2469, 0
        %v2533 = vsel %vm1979, %v2470, 0
        %v2536 = vsel %vm1979, %v2503, 0
        %v2539 = vsel %vm1979, %v2504, 0
        %v2542 = vsel %vm1979, %v2505, 0
        %v2545 = vsel %vm1979, %v2506, 0
        %v2548 = vsel %vm1979, %v2507, 0
        %v2551 = vsel %vm1979, %v2508, 0
        %v2554 = vsel %vm1979, %v2509, 0
        %v2557 = vsel %vm1979, %v2510, 0
        %2559 = vmatpush.bf16.xpose.msra.mxu0 %v2557
        %2560 = vmatpush.bf16.xpose.msra.mxu0 %v2554
        %2561 = vmatpush.bf16.xpose.msra.mxu0 %v2551
        %2562 = vmatpush.bf16.xpose.msra.mxu0 %v2548
        %2563 = vmatpush.bf16.xpose.msra.mxu0 %v2545
        %2564 = vmatpush.bf16.xpose.msra.mxu0 %v2542
        %2565 = vmatpush.bf16.xpose.msra.mxu0 %v2539
        %2566 = vmatpush.bf16.xpose.msra.mxu0 %v2536
        %2567 = vmatmul.bf16.gmra.mxu0 %v2512
        %v2568 = vpop.f32.mrf.mxu0
        %v2569 = vadd.f32 0.0, %v2568
        %v2570 = vpop.f32.mrf.mxu0
        %v2571 = vadd.f32 0.0, %v2570
        %2572 = vmatmul.bf16.gmra.mxu0 %v2515
        %v2573 = vpop.f32.mrf.mxu0
        %v2574 = vadd.f32 0.0, %v2573
        %v2575 = vpop.f32.mrf.mxu0
        %v2576 = vadd.f32 0.0, %v2575
        %2577 = vmatmul.bf16.gmra.mxu0 %v2518
        %v2578 = vpop.f32.mrf.mxu0
        %v2579 = vadd.f32 0.0, %v2578
        %v2580 = vpop.f32.mrf.mxu0
        %v2581 = vadd.f32 0.0, %v2580
        %2582 = vmatmul.bf16.gmra.mxu0 %v2521
        %v2583 = vpop.f32.mrf.mxu0
        %v2584 = vadd.f32 0.0, %v2583
        %v2585 = vpop.f32.mrf.mxu0
        %v2586 = vadd.f32 0.0, %v2585
        %2587 = vmatmul.bf16.gmra.mxu0 %v2524
        %v2588 = vpop.f32.mrf.mxu0
        %v2589 = vadd.f32 0.0, %v2588
        %v2590 = vpop.f32.mrf.mxu0
        %v2591 = vadd.f32 0.0, %v2590
        %2592 = vmatmul.bf16.gmra.mxu0 %v2527
        %v2593 = vpop.f32.mrf.mxu0
        %v2594 = vadd.f32 0.0, %v2593
        %v2595 = vpop.f32.mrf.mxu0
        %v2596 = vadd.f32 0.0, %v2595
        %2597 = vmatmul.bf16.gmra.mxu0 %v2530
        %v2598 = vpop.f32.mrf.mxu0
        %v2599 = vadd.f32 0.0, %v2598
        %v2600 = vpop.f32.mrf.mxu0
        %v2601 = vadd.f32 0.0, %v2600
        %2602 = vmatmul.bf16.gmra.mxu0 %v2533
        %v2603 = vpop.f32.mrf.mxu0
        %v2604 = vadd.f32 0.0, %v2603
        %v2605 = vpop.f32.mrf.mxu0
        %v2606 = vadd.f32 0.0, %v2605
        %2607 = vdwg.mxu0
        %2608 = vmax.xlane.f32.xlu0 %v2038
        %v2609 = vpop.xlane.xlu0 %2608
        %2610 = vmax.xlane.f32.xlu0 %v2040
        %v2611 = vpop.xlane.xlu0 %2610
        %2612 = vmax.xlane.f32.xlu0 %v2043
        %v2613 = vpop.xlane.xlu0 %2612
        %2614 = vmax.xlane.f32.xlu0 %v2045
        %v2615 = vpop.xlane.xlu0 %2614
        %2616 = vmax.xlane.f32.xlu0 %v2048
        %v2617 = vpop.xlane.xlu0 %2616
        %2618 = vmax.xlane.f32.xlu0 %v2050
        %v2619 = vpop.xlane.xlu0 %2618
        %2620 = vmax.xlane.f32.xlu0 %v2053
        %v2621 = vpop.xlane.xlu0 %2620
        %2622 = vmax.xlane.f32.xlu0 %v2055
        %v2623 = vpop.xlane.xlu0 %2622
        %2624 = vmax.xlane.f32.xlu0 %v2058
        %v2625 = vpop.xlane.xlu0 %2624
        %2626 = vmax.xlane.f32.xlu0 %v2060
        %v2627 = vpop.xlane.xlu0 %2626
        %2628 = vmax.xlane.f32.xlu0 %v2063
        %v2629 = vpop.xlane.xlu0 %2628
        %2630 = vmax.xlane.f32.xlu0 %v2065
        %v2631 = vpop.xlane.xlu0 %2630
        %2632 = vmax.xlane.f32.xlu0 %v2068
        %v2633 = vpop.xlane.xlu0 %2632
        %2634 = vmax.xlane.f32.xlu0 %v2070
        %v2635 = vpop.xlane.xlu0 %2634
        %2636 = vmax.xlane.f32.xlu0 %v2073
        %v2637 = vpop.xlane.xlu0 %2636
        %2638 = vmax.xlane.f32.xlu0 %v2075
        %v2639 = vpop.xlane.xlu0 %2638
        %2640 = vmax.xlane.f32.xlu0 %v2215
        %v2641 = vpop.xlane.xlu0 %2640
        %2642 = vmax.xlane.f32.xlu0 %v2217
        %v2643 = vpop.xlane.xlu0 %2642
        %2644 = vmax.xlane.f32.xlu0 %v2220
        %v2645 = vpop.xlane.xlu0 %2644
        %2646 = vmax.xlane.f32.xlu0 %v2222
        %v2647 = vpop.xlane.xlu0 %2646
        %2648 = vmax.xlane.f32.xlu0 %v2225
        %v2649 = vpop.xlane.xlu0 %2648
        %2650 = vmax.xlane.f32.xlu0 %v2227
        %v2651 = vpop.xlane.xlu0 %2650
        %2652 = vmax.xlane.f32.xlu0 %v2230
        %v2653 = vpop.xlane.xlu0 %2652
        %2654 = vmax.xlane.f32.xlu0 %v2232
        %v2655 = vpop.xlane.xlu0 %2654
        %2656 = vmax.xlane.f32.xlu0 %v2235
        %v2657 = vpop.xlane.xlu0 %2656
        %2658 = vmax.xlane.f32.xlu0 %v2237
        %v2659 = vpop.xlane.xlu0 %2658
        %2660 = vmax.xlane.f32.xlu0 %v2240
        %v2661 = vpop.xlane.xlu0 %2660
        %2662 = vmax.xlane.f32.xlu0 %v2242
        %v2663 = vpop.xlane.xlu0 %2662
        %2664 = vmax.xlane.f32.xlu0 %v2245
        %v2665 = vpop.xlane.xlu0 %2664
        %2666 = vmax.xlane.f32.xlu0 %v2247
        %v2667 = vpop.xlane.xlu0 %2666
        %2668 = vmax.xlane.f32.xlu0 %v2250
        %v2669 = vpop.xlane.xlu0 %2668
        %2670 = vmax.xlane.f32.xlu0 %v2252
        %v2671 = vpop.xlane.xlu0 %2670
        %2672 = vmax.xlane.f32.xlu0 %v2392
        %v2673 = vpop.xlane.xlu0 %2672
        %2674 = vmax.xlane.f32.xlu0 %v2394
        %v2675 = vpop.xlane.xlu0 %2674
        %2676 = vmax.xlane.f32.xlu0 %v2397
        %v2677 = vpop.xlane.xlu0 %2676
        %2678 = vmax.xlane.f32.xlu0 %v2399
        %v2679 = vpop.xlane.xlu0 %2678
        %2680 = vmax.xlane.f32.xlu0 %v2402
        %v2681 = vpop.xlane.xlu0 %2680
        %2682 = vmax.xlane.f32.xlu0 %v2404
        %v2683 = vpop.xlane.xlu0 %2682
        %2684 = vmax.xlane.f32.xlu0 %v2407
        %v2685 = vpop.xlane.xlu0 %2684
        %2686 = vmax.xlane.f32.xlu0 %v2409
        %v2687 = vpop.xlane.xlu0 %2686
        %2688 = vmax.xlane.f32.xlu0 %v2412
        %v2689 = vpop.xlane.xlu0 %2688
        %2690 = vmax.xlane.f32.xlu0 %v2414
        %v2691 = vpop.xlane.xlu0 %2690
        %2692 = vmax.xlane.f32.xlu0 %v2417
        %v2693 = vpop.xlane.xlu0 %2692
        %2694 = vmax.xlane.f32.xlu0 %v2419
        %v2695 = vpop.xlane.xlu0 %2694
        %2696 = vmax.xlane.f32.xlu0 %v2422
        %v2697 = vpop.xlane.xlu0 %2696
        %2698 = vmax.xlane.f32.xlu0 %v2424
        %v2699 = vpop.xlane.xlu0 %2698
        %2700 = vmax.xlane.f32.xlu0 %v2427
        %v2701 = vpop.xlane.xlu0 %2700
        %2702 = vmax.xlane.f32.xlu0 %v2429
        %v2703 = vpop.xlane.xlu0 %2702
        %2704 = vmax.xlane.f32.xlu0 %v2569
        %v2705 = vpop.xlane.xlu0 %2704
        %2706 = vmax.xlane.f32.xlu0 %v2571
        %v2707 = vpop.xlane.xlu0 %2706
        %2708 = vmax.xlane.f32.xlu0 %v2574
        %v2709 = vpop.xlane.xlu0 %2708
        %2710 = vmax.xlane.f32.xlu0 %v2576
        %v2711 = vpop.xlane.xlu0 %2710
        %2712 = vmax.xlane.f32.xlu0 %v2579
        %v2713 = vpop.xlane.xlu0 %2712
        %2714 = vmax.xlane.f32.xlu0 %v2581
        %v2715 = vpop.xlane.xlu0 %2714
        %2716 = vmax.xlane.f32.xlu0 %v2584
        %v2717 = vpop.xlane.xlu0 %2716
        %2718 = vmax.xlane.f32.xlu0 %v2586
        %v2719 = vpop.xlane.xlu0 %2718
        %2720 = vmax.xlane.f32.xlu0 %v2589
        %v2721 = vpop.xlane.xlu0 %2720
        %2722 = vmax.xlane.f32.xlu0 %v2591
        %v2723 = vpop.xlane.xlu0 %2722
        %2724 = vmax.xlane.f32.xlu0 %v2594
        %v2725 = vpop.xlane.xlu0 %2724
        %2726 = vmax.xlane.f32.xlu0 %v2596
        %v2727 = vpop.xlane.xlu0 %2726
        %2728 = vmax.xlane.f32.xlu0 %v2599
        %v2729 = vpop.xlane.xlu0 %2728
        %2730 = vmax.xlane.f32.xlu0 %v2601
        %v2731 = vpop.xlane.xlu0 %2730
        %2732 = vmax.xlane.f32.xlu0 %v2604
        %v2733 = vpop.xlane.xlu0 %2732
        %2734 = vmax.xlane.f32.xlu0 %v2606
        %v2735 = vpop.xlane.xlu0 %2734
        %v2736 = vsub.f32 %v2038, %v2609
        %v2737 = vsub.f32 %v2040, %v2611
        %v2738 = vsub.f32 %v2043, %v2613
        %v2739 = vsub.f32 %v2045, %v2615
        %v2740 = vsub.f32 %v2048, %v2617
        %v2741 = vsub.f32 %v2050, %v2619
        %v2742 = vsub.f32 %v2053, %v2621
        %v2743 = vsub.f32 %v2055, %v2623
        %v2744 = vsub.f32 %v2058, %v2625
        %v2745 = vsub.f32 %v2060, %v2627
        %v2746 = vsub.f32 %v2063, %v2629
        %v2747 = vsub.f32 %v2065, %v2631
        %v2748 = vsub.f32 %v2068, %v2633
        %v2749 = vsub.f32 %v2070, %v2635
        %v2750 = vsub.f32 %v2073, %v2637
        %v2751 = vsub.f32 %v2075, %v2639
        %v2752 = vsub.f32 %v2215, %v2641
        %v2753 = vsub.f32 %v2217, %v2643
        %v2754 = vsub.f32 %v2220, %v2645
        %v2755 = vsub.f32 %v2222, %v2647
        %v2756 = vsub.f32 %v2225, %v2649
        %v2757 = vsub.f32 %v2227, %v2651
        %v2758 = vsub.f32 %v2230, %v2653
        %v2759 = vsub.f32 %v2232, %v2655
        %v2760 = vsub.f32 %v2235, %v2657
        %v2761 = vsub.f32 %v2237, %v2659
        %v2762 = vsub.f32 %v2240, %v2661
        %v2763 = vsub.f32 %v2242, %v2663
        %v2764 = vsub.f32 %v2245, %v2665
        %v2765 = vsub.f32 %v2247, %v2667
        %v2766 = vsub.f32 %v2250, %v2669
        %v2767 = vsub.f32 %v2252, %v2671
        %v2768 = vsub.f32 %v2392, %v2673
        %v2769 = vsub.f32 %v2394, %v2675
        %v2770 = vsub.f32 %v2397, %v2677
        %v2771 = vsub.f32 %v2399, %v2679
        %v2772 = vsub.f32 %v2402, %v2681
        %v2773 = vsub.f32 %v2404, %v2683
        %v2774 = vsub.f32 %v2407, %v2685
        %v2775 = vsub.f32 %v2409, %v2687
        %v2776 = vsub.f32 %v2412, %v2689
        %v2777 = vsub.f32 %v2414, %v2691
        %v2778 = vsub.f32 %v2417, %v2693
        %v2779 = vsub.f32 %v2419, %v2695
        %v2780 = vsub.f32 %v2422, %v2697
        %v2781 = vsub.f32 %v2424, %v2699
        %v2782 = vsub.f32 %v2427, %v2701
        %v2783 = vsub.f32 %v2429, %v2703
        %v2784 = vsub.f32 %v2569, %v2705
        %v2785 = vsub.f32 %v2571, %v2707
        %v2786 = vsub.f32 %v2574, %v2709
        %v2787 = vsub.f32 %v2576, %v2711
        %v2788 = vsub.f32 %v2579, %v2713
        %v2789 = vsub.f32 %v2581, %v2715
        %v2790 = vsub.f32 %v2584, %v2717
        %v2791 = vsub.f32 %v2586, %v2719
        %v2792 = vsub.f32 %v2589, %v2721
        %v2793 = vsub.f32 %v2591, %v2723
        %v2794 = vsub.f32 %v2594, %v2725
        %v2795 = vsub.f32 %v2596, %v2727
        %v2796 = vsub.f32 %v2599, %v2729
        %v2797 = vsub.f32 %v2601, %v2731
        %v2798 = vsub.f32 %v2604, %v2733
        %v2799 = vsub.f32 %v2606, %v2735
        %v2800 = vmul.f32 %v2736, 1.442695
        %v2801 = vpow.pop %v2800
        %v2802 = vmul.f32 %v2737, 1.442695
        %v2803 = vpow.pop %v2802
        %v2804 = vmul.f32 %v2738, 1.442695
        %v2805 = vpow.pop %v2804
        %v2806 = vmul.f32 %v2739, 1.442695
        %v2807 = vpow.pop %v2806
        %v2808 = vmul.f32 %v2740, 1.442695
        %v2809 = vpow.pop %v2808
        %v2810 = vmul.f32 %v2741, 1.442695
        %v2811 = vpow.pop %v2810
        %v2812 = vmul.f32 %v2742, 1.442695
        %v2813 = vpow.pop %v2812
        %v2814 = vmul.f32 %v2743, 1.442695
        %v2815 = vpow.pop %v2814
        %v2816 = vmul.f32 %v2744, 1.442695
        %v2817 = vpow.pop %v2816
        %v2818 = vmul.f32 %v2745, 1.442695
        %v2819 = vpow.pop %v2818
        %v2820 = vmul.f32 %v2746, 1.442695
        %v2821 = vpow.pop %v2820
        %v2822 = vmul.f32 %v2747, 1.442695
        %v2823 = vpow.pop %v2822
        %v2824 = vmul.f32 %v2748, 1.442695
        %v2825 = vpow.pop %v2824
        %v2826 = vmul.f32 %v2749, 1.442695
        %v2827 = vpow.pop %v2826
        %v2828 = vmul.f32 %v2750, 1.442695
        %v2829 = vpow.pop %v2828
        %v2830 = vmul.f32 %v2751, 1.442695
        %v2831 = vpow.pop %v2830
        %v2832 = vmul.f32 %v2752, 1.442695
        %v2833 = vpow.pop %v2832
        %v2834 = vmul.f32 %v2753, 1.442695
        %v2835 = vpow.pop %v2834
        %v2836 = vmul.f32 %v2754, 1.442695
        %v2837 = vpow.pop %v2836
        %v2838 = vmul.f32 %v2755, 1.442695
        %v2839 = vpow.pop %v2838
        %v2840 = vmul.f32 %v2756, 1.442695
        %v2841 = vpow.pop %v2840
        %v2842 = vmul.f32 %v2757, 1.442695
        %v2843 = vpow.pop %v2842
        %v2844 = vmul.f32 %v2758, 1.442695
        %v2845 = vpow.pop %v2844
        %v2846 = vmul.f32 %v2759, 1.442695
        %v2847 = vpow.pop %v2846
        %v2848 = vmul.f32 %v2760, 1.442695
        %v2849 = vpow.pop %v2848
        %v2850 = vmul.f32 %v2761, 1.442695
        %v2851 = vpow.pop %v2850
        %v2852 = vmul.f32 %v2762, 1.442695
        %v2853 = vpow.pop %v2852
        %v2854 = vmul.f32 %v2763, 1.442695
        %v2855 = vpow.pop %v2854
        %v2856 = vmul.f32 %v2764, 1.442695
        %v2857 = vpow.pop %v2856
        %v2858 = vmul.f32 %v2765, 1.442695
        %v2859 = vpow.pop %v2858
        %v2860 = vmul.f32 %v2766, 1.442695
        %v2861 = vpow.pop %v2860
        %v2862 = vmul.f32 %v2767, 1.442695
        %v2863 = vpow.pop %v2862
        %v2864 = vmul.f32 %v2768, 1.442695
        %v2865 = vpow.pop %v2864
        %v2866 = vmul.f32 %v2769, 1.442695
        %v2867 = vpow.pop %v2866
        %v2868 = vmul.f32 %v2770, 1.442695
        %v2869 = vpow.pop %v2868
        %v2870 = vmul.f32 %v2771, 1.442695
        %v2871 = vpow.pop %v2870
        %v2872 = vmul.f32 %v2772, 1.442695
        %v2873 = vpow.pop %v2872
        %v2874 = vmul.f32 %v2773, 1.442695
        %v2875 = vpow.pop %v2874
        %v2876 = vmul.f32 %v2774, 1.442695
        %v2877 = vpow.pop %v2876
        %v2878 = vmul.f32 %v2775, 1.442695
        %v2879 = vpow.pop %v2878
        %v2880 = vmul.f32 %v2776, 1.442695
        %v2881 = vpow.pop %v2880
        %v2882 = vmul.f32 %v2777, 1.442695
        %v2883 = vpow.pop %v2882
        %v2884 = vmul.f32 %v2778, 1.442695
        %v2885 = vpow.pop %v2884
        %v2886 = vmul.f32 %v2779, 1.442695
        %v2887 = vpow.pop %v2886
        %v2888 = vmul.f32 %v2780, 1.442695
        %v2889 = vpow.pop %v2888
        %v2890 = vmul.f32 %v2781, 1.442695
        %v2891 = vpow.pop %v2890
        %v2892 = vmul.f32 %v2782, 1.442695
        %v2893 = vpow.pop %v2892
        %v2894 = vmul.f32 %v2783, 1.442695
        %v2895 = vpow.pop %v2894
        %v2896 = vmul.f32 %v2784, 1.442695
        %v2897 = vpow.pop %v2896
        %v2898 = vmul.f32 %v2785, 1.442695
        %v2899 = vpow.pop %v2898
        %v2900 = vmul.f32 %v2786, 1.442695
        %v2901 = vpow.pop %v2900
        %v2902 = vmul.f32 %v2787, 1.442695
        %v2903 = vpow.pop %v2902
        %v2904 = vmul.f32 %v2788, 1.442695
        %v2905 = vpow.pop %v2904
        %v2906 = vmul.f32 %v2789, 1.442695
        %v2907 = vpow.pop %v2906
        %v2908 = vmul.f32 %v2790, 1.442695
        %v2909 = vpow.pop %v2908
        %v2910 = vmul.f32 %v2791, 1.442695
        %v2911 = vpow.pop %v2910
        %v2912 = vmul.f32 %v2792, 1.442695
        %v2913 = vpow.pop %v2912
        %v2914 = vmul.f32 %v2793, 1.442695
        %v2915 = vpow.pop %v2914
        %v2916 = vmul.f32 %v2794, 1.442695
        %v2917 = vpow.pop %v2916
        %v2918 = vmul.f32 %v2795, 1.442695
        %v2919 = vpow.pop %v2918
        %v2920 = vmul.f32 %v2796, 1.442695
        %v2921 = vpow.pop %v2920
        %v2922 = vmul.f32 %v2797, 1.442695
        %v2923 = vpow.pop %v2922
        %v2924 = vmul.f32 %v2798, 1.442695
        %v2925 = vpow.pop %v2924
        %v2926 = vmul.f32 %v2799, 1.442695
        %v2927 = vpow.pop %v2926
        %2928 = vadd.xlane.f32.xlu0 %v2801
        %v2929 = vpop.xlane.xlu0 %2928
        %2930 = vadd.xlane.f32.xlu0 %v2803
        %v2931 = vpop.xlane.xlu0 %2930
        %2932 = vadd.xlane.f32.xlu0 %v2805
        %v2933 = vpop.xlane.xlu0 %2932
        %2934 = vadd.xlane.f32.xlu0 %v2807
        %v2935 = vpop.xlane.xlu0 %2934
        %2936 = vadd.xlane.f32.xlu0 %v2809
        %v2937 = vpop.xlane.xlu0 %2936
        %2938 = vadd.xlane.f32.xlu0 %v2811
        %v2939 = vpop.xlane.xlu0 %2938
        %2940 = vadd.xlane.f32.xlu0 %v2813
        %v2941 = vpop.xlane.xlu0 %2940
        %2942 = vadd.xlane.f32.xlu0 %v2815
        %v2943 = vpop.xlane.xlu0 %2942
        %2944 = vadd.xlane.f32.xlu0 %v2817
        %v2945 = vpop.xlane.xlu0 %2944
        %2946 = vadd.xlane.f32.xlu0 %v2819
        %v2947 = vpop.xlane.xlu0 %2946
        %2948 = vadd.xlane.f32.xlu0 %v2821
        %v2949 = vpop.xlane.xlu0 %2948
        %2950 = vadd.xlane.f32.xlu0 %v2823
        %v2951 = vpop.xlane.xlu0 %2950
        %2952 = vadd.xlane.f32.xlu0 %v2825
        %v2953 = vpop.xlane.xlu0 %2952
        %2954 = vadd.xlane.f32.xlu0 %v2827
        %v2955 = vpop.xlane.xlu0 %2954
        %2956 = vadd.xlane.f32.xlu0 %v2829
        %v2957 = vpop.xlane.xlu0 %2956
        %2958 = vadd.xlane.f32.xlu0 %v2831
        %v2959 = vpop.xlane.xlu0 %2958
        %2960 = vadd.xlane.f32.xlu0 %v2833
        %v2961 = vpop.xlane.xlu0 %2960
        %2962 = vadd.xlane.f32.xlu0 %v2835
        %v2963 = vpop.xlane.xlu0 %2962
        %2964 = vadd.xlane.f32.xlu0 %v2837
        %v2965 = vpop.xlane.xlu0 %2964
        %2966 = vadd.xlane.f32.xlu0 %v2839
        %v2967 = vpop.xlane.xlu0 %2966
        %2968 = vadd.xlane.f32.xlu0 %v2841
        %v2969 = vpop.xlane.xlu0 %2968
        %2970 = vadd.xlane.f32.xlu0 %v2843
        %v2971 = vpop.xlane.xlu0 %2970
        %2972 = vadd.xlane.f32.xlu0 %v2845
        %v2973 = vpop.xlane.xlu0 %2972
        %2974 = vadd.xlane.f32.xlu0 %v2847
        %v2975 = vpop.xlane.xlu0 %2974
        %2976 = vadd.xlane.f32.xlu0 %v2849
        %v2977 = vpop.xlane.xlu0 %2976
        %2978 = vadd.xlane.f32.xlu0 %v2851
        %v2979 = vpop.xlane.xlu0 %2978
        %2980 = vadd.xlane.f32.xlu0 %v2853
        %v2981 = vpop.xlane.xlu0 %2980
        %2982 = vadd.xlane.f32.xlu0 %v2855
        %v2983 = vpop.xlane.xlu0 %2982
        %2984 = vadd.xlane.f32.xlu0 %v2857
        %v2985 = vpop.xlane.xlu0 %2984
        %2986 = vadd.xlane.f32.xlu0 %v2859
        %v2987 = vpop.xlane.xlu0 %2986
        %2988 = vadd.xlane.f32.xlu0 %v2861
        %v2989 = vpop.xlane.xlu0 %2988
        %2990 = vadd.xlane.f32.xlu0 %v2863
        %v2991 = vpop.xlane.xlu0 %2990
        %2992 = vadd.xlane.f32.xlu0 %v2865
        %v2993 = vpop.xlane.xlu0 %2992
        %2994 = vadd.xlane.f32.xlu0 %v2867
        %v2995 = vpop.xlane.xlu0 %2994
        %2996 = vadd.xlane.f32.xlu0 %v2869
        %v2997 = vpop.xlane.xlu0 %2996
        %2998 = vadd.xlane.f32.xlu0 %v2871
        %v2999 = vpop.xlane.xlu0 %2998
        %3000 = vadd.xlane.f32.xlu0 %v2873
        %v3001 = vpop.xlane.xlu0 %3000
        %3002 = vadd.xlane.f32.xlu0 %v2875
        %v3003 = vpop.xlane.xlu0 %3002
        %3004 = vadd.xlane.f32.xlu0 %v2877
        %v3005 = vpop.xlane.xlu0 %3004
        %3006 = vadd.xlane.f32.xlu0 %v2879
        %v3007 = vpop.xlane.xlu0 %3006
        %3008 = vadd.xlane.f32.xlu0 %v2881
        %v3009 = vpop.xlane.xlu0 %3008
        %3010 = vadd.xlane.f32.xlu0 %v2883
        %v3011 = vpop.xlane.xlu0 %3010
        %3012 = vadd.xlane.f32.xlu0 %v2885
        %v3013 = vpop.xlane.xlu0 %3012
        %3014 = vadd.xlane.f32.xlu0 %v2887
        %v3015 = vpop.xlane.xlu0 %3014
        %3016 = vadd.xlane.f32.xlu0 %v2889
        %v3017 = vpop.xlane.xlu0 %3016
        %3018 = vadd.xlane.f32.xlu0 %v2891
        %v3019 = vpop.xlane.xlu0 %3018
        %3020 = vadd.xlane.f32.xlu0 %v2893
        %v3021 = vpop.xlane.xlu0 %3020
        %3022 = vadd.xlane.f32.xlu0 %v2895
        %v3023 = vpop.xlane.xlu0 %3022
        %3024 = vadd.xlane.f32.xlu0 %v2897
        %v3025 = vpop.xlane.xlu0 %3024
        %3026 = vadd.xlane.f32.xlu0 %v2899
        %v3027 = vpop.xlane.xlu0 %3026
        %3028 = vadd.xlane.f32.xlu0 %v2901
        %v3029 = vpop.xlane.xlu0 %3028
        %3030 = vadd.xlane.f32.xlu0 %v2903
        %v3031 = vpop.xlane.xlu0 %3030
        %3032 = vadd.xlane.f32.xlu0 %v2905
        %v3033 = vpop.xlane.xlu0 %3032
        %3034 = vadd.xlane.f32.xlu0 %v2907
        %v3035 = vpop.xlane.xlu0 %3034
        %3036 = vadd.xlane.f32.xlu0 %v2909
        %v3037 = vpop.xlane.xlu0 %3036
        %3038 = vadd.xlane.f32.xlu0 %v2911
        %v3039 = vpop.xlane.xlu0 %3038
        %3040 = vadd.xlane.f32.xlu0 %v2913
        %v3041 = vpop.xlane.xlu0 %3040
        %3042 = vadd.xlane.f32.xlu0 %v2915
        %v3043 = vpop.xlane.xlu0 %3042
        %3044 = vadd.xlane.f32.xlu0 %v2917
        %v3045 = vpop.xlane.xlu0 %3044
        %3046 = vadd.xlane.f32.xlu0 %v2919
        %v3047 = vpop.xlane.xlu0 %3046
        %3048 = vadd.xlane.f32.xlu0 %v2921
        %v3049 = vpop.xlane.xlu0 %3048
        %3050 = vadd.xlane.f32.xlu0 %v2923
        %v3051 = vpop.xlane.xlu0 %3050
        %3052 = vadd.xlane.f32.xlu0 %v2925
        %v3053 = vpop.xlane.xlu0 %3052
        %3054 = vadd.xlane.f32.xlu0 %v2927
        %v3055 = vpop.xlane.xlu0 %3054
        %v3056 = vrcp.pop %v2929
        %v3057 = vrcp.pop %v2931
        %v3058 = vrcp.pop %v2933
        %v3059 = vrcp.pop %v2935
        %v3060 = vrcp.pop %v2937
        %v3061 = vrcp.pop %v2939
        %v3062 = vrcp.pop %v2941
        %v3063 = vrcp.pop %v2943
        %v3064 = vrcp.pop %v2945
        %v3065 = vrcp.pop %v2947
        %v3066 = vrcp.pop %v2949
        %v3067 = vrcp.pop %v2951
        %v3068 = vrcp.pop %v2953
        %v3069 = vrcp.pop %v2955
        %v3070 = vrcp.pop %v2957
        %v3071 = vrcp.pop %v2959
        %v3072 = vrcp.pop %v2961
        %v3073 = vrcp.pop %v2963
        %v3074 = vrcp.pop %v2965
        %v3075 = vrcp.pop %v2967
        %v3076 = vrcp.pop %v2969
        %v3077 = vrcp.pop %v2971
        %v3078 = vrcp.pop %v2973
        %v3079 = vrcp.pop %v2975
        %v3080 = vrcp.pop %v2977
        %v3081 = vrcp.pop %v2979
        %v3082 = vrcp.pop %v2981
        %v3083 = vrcp.pop %v2983
        %v3084 = vrcp.pop %v2985
        %v3085 = vrcp.pop %v2987
        %v3086 = vrcp.pop %v2989
        %v3087 = vrcp.pop %v2991
        %v3088 = vrcp.pop %v2993
        %v3089 = vrcp.pop %v2995
        %v3090 = vrcp.pop %v2997
        %v3091 = vrcp.pop %v2999
        %v3092 = vrcp.pop %v3001
        %v3093 = vrcp.pop %v3003
        %v3094 = vrcp.pop %v3005
        %v3095 = vrcp.pop %v3007
        %v3096 = vrcp.pop %v3009
        %v3097 = vrcp.pop %v3011
        %v3098 = vrcp.pop %v3013
        %v3099 = vrcp.pop %v3015
        %v3100 = vrcp.pop %v3017
        %v3101 = vrcp.pop %v3019
        %v3102 = vrcp.pop %v3021
        %v3103 = vrcp.pop %v3023
        %v3104 = vrcp.pop %v3025
        %v3105 = vrcp.pop %v3027
        %v3106 = vrcp.pop %v3029
        %v3107 = vrcp.pop %v3031
        %v3108 = vrcp.pop %v3033
        %v3109 = vrcp.pop %v3035
        %v3110 = vrcp.pop %v3037
        %v3111 = vrcp.pop %v3039
        %v3112 = vrcp.pop %v3041
        %v3113 = vrcp.pop %v3043
        %v3114 = vrcp.pop %v3045
        %v3115 = vrcp.pop %v3047
        %v3116 = vrcp.pop %v3049
        %v3117 = vrcp.pop %v3051
        %v3118 = vrcp.pop %v3053
        %v3119 = vrcp.pop %v3055
        %v3120 = vmul.f32 %v2801, %v3056
        %v3121 = vmul.f32 %v2803, %v3057
        %v3122 = vmul.f32 %v2805, %v3058
        %v3123 = vmul.f32 %v2807, %v3059
        %v3124 = vmul.f32 %v2809, %v3060
        %v3125 = vmul.f32 %v2811, %v3061
        %v3126 = vmul.f32 %v2813, %v3062
        %v3127 = vmul.f32 %v2815, %v3063
        %v3128 = vmul.f32 %v2817, %v3064
        %v3129 = vmul.f32 %v2819, %v3065
        %v3130 = vmul.f32 %v2821, %v3066
        %v3131 = vmul.f32 %v2823, %v3067
        %v3132 = vmul.f32 %v2825, %v3068
        %v3133 = vmul.f32 %v2827, %v3069
        %v3134 = vmul.f32 %v2829, %v3070
        %v3135 = vmul.f32 %v2831, %v3071
        %v3136 = vmul.f32 %v2833, %v3072
        %v3137 = vmul.f32 %v2835, %v3073
        %v3138 = vmul.f32 %v2837, %v3074
        %v3139 = vmul.f32 %v2839, %v3075
        %v3140 = vmul.f32 %v2841, %v3076
        %v3141 = vmul.f32 %v2843, %v3077
        %v3142 = vmul.f32 %v2845, %v3078
        %v3143 = vmul.f32 %v2847, %v3079
        %v3144 = vmul.f32 %v2849, %v3080
        %v3145 = vmul.f32 %v2851, %v3081
        %v3146 = vmul.f32 %v2853, %v3082
        %v3147 = vmul.f32 %v2855, %v3083
        %v3148 = vmul.f32 %v2857, %v3084
        %v3149 = vmul.f32 %v2859, %v3085
        %v3150 = vmul.f32 %v2861, %v3086
        %v3151 = vmul.f32 %v2863, %v3087
        %v3152 = vmul.f32 %v2865, %v3088
        %v3153 = vmul.f32 %v2867, %v3089
        %v3154 = vmul.f32 %v2869, %v3090
        %v3155 = vmul.f32 %v2871, %v3091
        %v3156 = vmul.f32 %v2873, %v3092
        %v3157 = vmul.f32 %v2875, %v3093
        %v3158 = vmul.f32 %v2877, %v3094
        %v3159 = vmul.f32 %v2879, %v3095
        %v3160 = vmul.f32 %v2881, %v3096
        %v3161 = vmul.f32 %v2883, %v3097
        %v3162 = vmul.f32 %v2885, %v3098
        %v3163 = vmul.f32 %v2887, %v3099
        %v3164 = vmul.f32 %v2889, %v3100
        %v3165 = vmul.f32 %v2891, %v3101
        %v3166 = vmul.f32 %v2893, %v3102
        %v3167 = vmul.f32 %v2895, %v3103
        %v3168 = vmul.f32 %v2897, %v3104
        %v3169 = vmul.f32 %v2899, %v3105
        %v3170 = vmul.f32 %v2901, %v3106
        %v3171 = vmul.f32 %v2903, %v3107
        %v3172 = vmul.f32 %v2905, %v3108
        %v3173 = vmul.f32 %v2907, %v3109
        %v3174 = vmul.f32 %v2909, %v3110
        %v3175 = vmul.f32 %v2911, %v3111
        %v3176 = vmul.f32 %v2913, %v3112
        %v3177 = vmul.f32 %v2915, %v3113
        %v3178 = vmul.f32 %v2917, %v3114
        %v3179 = vmul.f32 %v2919, %v3115
        %v3180 = vmul.f32 %v2921, %v3116
        %v3181 = vmul.f32 %v2923, %v3117
        %v3182 = vmul.f32 %v2925, %v3118
        %v3183 = vmul.f32 %v2927, %v3119
        %v3184 = vpack.c.bf16 %v3120, %v3120
        %v3185 = vpack.c.bf16 %v3121, %v3121
        %v3186 = vpack.c.bf16 %v3122, %v3122
        %v3187 = vpack.c.bf16 %v3123, %v3123
        %v3188 = vpack.c.bf16 %v3124, %v3124
        %v3189 = vpack.c.bf16 %v3125, %v3125
        %v3190 = vpack.c.bf16 %v3126, %v3126
        %v3191 = vpack.c.bf16 %v3127, %v3127
        %v3192 = vpack.c.bf16 %v3128, %v3128
        %v3193 = vpack.c.bf16 %v3129, %v3129
        %v3194 = vpack.c.bf16 %v3130, %v3130
        %v3195 = vpack.c.bf16 %v3131, %v3131
        %v3196 = vpack.c.bf16 %v3132, %v3132
        %v3197 = vpack.c.bf16 %v3133, %v3133
        %v3198 = vpack.c.bf16 %v3134, %v3134
        %v3199 = vpack.c.bf16 %v3135, %v3135
        %v3200 = vpack.c.bf16 %v3136, %v3136
        %v3201 = vpack.c.bf16 %v3137, %v3137
        %v3202 = vpack.c.bf16 %v3138, %v3138
        %v3203 = vpack.c.bf16 %v3139, %v3139
        %v3204 = vpack.c.bf16 %v3140, %v3140
        %v3205 = vpack.c.bf16 %v3141, %v3141
        %v3206 = vpack.c.bf16 %v3142, %v3142
        %v3207 = vpack.c.bf16 %v3143, %v3143
        %v3208 = vpack.c.bf16 %v3144, %v3144
        %v3209 = vpack.c.bf16 %v3145, %v3145
        %v3210 = vpack.c.bf16 %v3146, %v3146
        %v3211 = vpack.c.bf16 %v3147, %v3147
        %v3212 = vpack.c.bf16 %v3148, %v3148
        %v3213 = vpack.c.bf16 %v3149, %v3149
        %v3214 = vpack.c.bf16 %v3150, %v3150
        %v3215 = vpack.c.bf16 %v3151, %v3151
        %v3216 = vpack.c.bf16 %v3152, %v3152
        %v3217 = vpack.c.bf16 %v3153, %v3153
        %v3218 = vpack.c.bf16 %v3154, %v3154
        %v3219 = vpack.c.bf16 %v3155, %v3155
        %v3220 = vpack.c.bf16 %v3156, %v3156
        %v3221 = vpack.c.bf16 %v3157, %v3157
        %v3222 = vpack.c.bf16 %v3158, %v3158
        %v3223 = vpack.c.bf16 %v3159, %v3159
        %v3224 = vpack.c.bf16 %v3160, %v3160
        %v3225 = vpack.c.bf16 %v3161, %v3161
        %v3226 = vpack.c.bf16 %v3162, %v3162
        %v3227 = vpack.c.bf16 %v3163, %v3163
        %v3228 = vpack.c.bf16 %v3164, %v3164
        %v3229 = vpack.c.bf16 %v3165, %v3165
        %v3230 = vpack.c.bf16 %v3166, %v3166
        %v3231 = vpack.c.bf16 %v3167, %v3167
        %v3232 = vpack.c.bf16 %v3168, %v3168
        %v3233 = vpack.c.bf16 %v3169, %v3169
        %v3234 = vpack.c.bf16 %v3170, %v3170
        %v3235 = vpack.c.bf16 %v3171, %v3171
        %v3236 = vpack.c.bf16 %v3172, %v3172
        %v3237 = vpack.c.bf16 %v3173, %v3173
        %v3238 = vpack.c.bf16 %v3174, %v3174
        %v3239 = vpack.c.bf16 %v3175, %v3175
        %v3240 = vpack.c.bf16 %v3176, %v3176
        %v3241 = vpack.c.bf16 %v3177, %v3177
        %v3242 = vpack.c.bf16 %v3178, %v3178
        %v3243 = vpack.c.bf16 %v3179, %v3179
        %v3244 = vpack.c.bf16 %v3180, %v3180
        %v3245 = vpack.c.bf16 %v3181, %v3181
        %v3246 = vpack.c.bf16 %v3182, %v3182
        %v3247 = vpack.c.bf16 %v3183, %v3183
        %v3264 = vunpack.c.l.b16 %v3184
        %v3265 = vunpack.c.l.b16 %v3185
        %v3266 = vunpack.c.l.b16 %v3186
        %v3267 = vunpack.c.l.b16 %v3187
        %v3268 = vunpack.c.l.b16 %v3188
        %v3269 = vunpack.c.l.b16 %v3189
        %v3270 = vunpack.c.l.b16 %v3190
        %v3271 = vunpack.c.l.b16 %v3191
        %v3272 = vunpack.c.l.b16 %v3192
        %v3273 = vunpack.c.l.b16 %v3193
        %v3274 = vunpack.c.l.b16 %v3194
        %v3275 = vunpack.c.l.b16 %v3195
        %v3276 = vunpack.c.l.b16 %v3196
        %v3277 = vunpack.c.l.b16 %v3197
        %v3278 = vunpack.c.l.b16 %v3198
        %v3279 = vunpack.c.l.b16 %v3199
        %v3280 = vpack.c.b16 %v3265, %v3264
        %v3281 = vpack.c.b16 %v3267, %v3266
        %v3282 = vpack.c.b16 %v3269, %v3268
        %v3283 = vpack.c.b16 %v3271, %v3270
        %v3284 = vpack.c.b16 %v3273, %v3272
        %v3285 = vpack.c.b16 %v3275, %v3274
        %v3286 = vpack.c.b16 %v3277, %v3276
        %v3287 = vpack.c.b16 %v3279, %v3278
        %v3312 = vunpack.c.l.b16 %v1835
        %v3313 = vunpack.c.l.b16 %v1836
        %v3314 = vunpack.c.l.b16 %v1837
        %v3315 = vunpack.c.l.b16 %v1838
        %v3316 = vunpack.c.l.b16 %v1839
        %v3317 = vunpack.c.l.b16 %v1840
        %v3318 = vunpack.c.l.b16 %v1841
        %v3319 = vunpack.c.l.b16 %v1842
        %v3320 = vunpack.c.l.b16 %v1843
        %v3321 = vunpack.c.l.b16 %v1844
        %v3322 = vunpack.c.l.b16 %v1845
        %v3323 = vunpack.c.l.b16 %v1846
        %v3324 = vunpack.c.l.b16 %v1847
        %v3325 = vunpack.c.l.b16 %v1848
        %v3326 = vunpack.c.l.b16 %v1849
        %v3327 = vunpack.c.l.b16 %v1850
        %v3328 = vpack.c.b16 %v3313, %v3312
        %v3329 = vpack.c.b16 %v3315, %v3314
        %v3330 = vpack.c.b16 %v3317, %v3316
        %v3331 = vpack.c.b16 %v3319, %v3318
        %v3332 = vpack.c.b16 %v3321, %v3320
        %v3333 = vpack.c.b16 %v3323, %v3322
        %v3334 = vpack.c.b16 %v3325, %v3324
        %v3335 = vpack.c.b16 %v3327, %v3326
        %3344 = vmatpush.bf16.msra.mxu0 %v3335
        %3345 = vmatpush.bf16.msra.mxu0 %v3334
        %3346 = vmatpush.bf16.msra.mxu0 %v3333
        %3347 = vmatpush.bf16.msra.mxu0 %v3332
        %3348 = vmatpush.bf16.msra.mxu0 %v3331
        %3349 = vmatpush.bf16.msra.mxu0 %v3330
        %3350 = vmatpush.bf16.msra.mxu0 %v3329
        %3351 = vmatpush.bf16.msra.mxu0 %v3328
        %3352 = vmatmul.bf16.gmra.mxu0 %v3280
        %v3353 = vpop.f32.mrf.mxu0
        %v3354 = vadd.f32 0.0, %v3353
        %v3355 = vpop.f32.mrf.mxu0
        %v3356 = vadd.f32 0.0, %v3355
        %3357 = vmatmul.bf16.gmra.mxu0 %v3281
        %v3358 = vpop.f32.mrf.mxu0
        %v3359 = vadd.f32 0.0, %v3358
        %v3360 = vpop.f32.mrf.mxu0
        %v3361 = vadd.f32 0.0, %v3360
        %3362 = vmatmul.bf16.gmra.mxu0 %v3282
        %v3363 = vpop.f32.mrf.mxu0
        %v3364 = vadd.f32 0.0, %v3363
        %v3365 = vpop.f32.mrf.mxu0
        %v3366 = vadd.f32 0.0, %v3365
        %3367 = vmatmul.bf16.gmra.mxu0 %v3283
        %v3368 = vpop.f32.mrf.mxu0
        %v3369 = vadd.f32 0.0, %v3368
        %v3370 = vpop.f32.mrf.mxu0
        %v3371 = vadd.f32 0.0, %v3370
        %3372 = vmatmul.bf16.gmra.mxu0 %v3284
        %v3373 = vpop.f32.mrf.mxu0
        %v3374 = vadd.f32 0.0, %v3373
        %v3375 = vpop.f32.mrf.mxu0
        %v3376 = vadd.f32 0.0, %v3375
        %3377 = vmatmul.bf16.gmra.mxu0 %v3285
        %v3378 = vpop.f32.mrf.mxu0
        %v3379 = vadd.f32 0.0, %v3378
        %v3380 = vpop.f32.mrf.mxu0
        %v3381 = vadd.f32 0.0, %v3380
        %3382 = vmatmul.bf16.gmra.mxu0 %v3286
        %v3383 = vpop.f32.mrf.mxu0
        %v3384 = vadd.f32 0.0, %v3383
        %v3385 = vpop.f32.mrf.mxu0
        %v3386 = vadd.f32 0.0, %v3385
        %3387 = vmatmul.bf16.gmra.mxu0 %v3287
        %v3388 = vpop.f32.mrf.mxu0
        %v3389 = vadd.f32 0.0, %v3388
        %v3390 = vpop.f32.mrf.mxu0
        %v3391 = vadd.f32 0.0, %v3390
        %3392 = vdwg.mxu0
        %v3409 = vunpack.c.l.b16 %v3200
        %v3410 = vunpack.c.l.b16 %v3201
        %v3411 = vunpack.c.l.b16 %v3202
        %v3412 = vunpack.c.l.b16 %v3203
        %v3413 = vunpack.c.l.b16 %v3204
        %v3414 = vunpack.c.l.b16 %v3205
        %v3415 = vunpack.c.l.b16 %v3206
        %v3416 = vunpack.c.l.b16 %v3207
        %v3417 = vunpack.c.l.b16 %v3208
        %v3418 = vunpack.c.l.b16 %v3209
        %v3419 = vunpack.c.l.b16 %v3210
        %v3420 = vunpack.c.l.b16 %v3211
        %v3421 = vunpack.c.l.b16 %v3212
        %v3422 = vunpack.c.l.b16 %v3213
        %v3423 = vunpack.c.l.b16 %v3214
        %v3424 = vunpack.c.l.b16 %v3215
        %v3425 = vpack.c.b16 %v3410, %v3409
        %v3426 = vpack.c.b16 %v3412, %v3411
        %v3427 = vpack.c.b16 %v3414, %v3413
        %v3428 = vpack.c.b16 %v3416, %v3415
        %v3429 = vpack.c.b16 %v3418, %v3417
        %v3430 = vpack.c.b16 %v3420, %v3419
        %v3431 = vpack.c.b16 %v3422, %v3421
        %v3432 = vpack.c.b16 %v3424, %v3423
        %v3457 = vunpack.c.l.b16 %v1851
        %v3458 = vunpack.c.l.b16 %v1852
        %v3459 = vunpack.c.l.b16 %v1853
        %v3460 = vunpack.c.l.b16 %v1854
        %v3461 = vunpack.c.l.b16 %v1855
        %v3462 = vunpack.c.l.b16 %v1856
        %v3463 = vunpack.c.l.b16 %v1857
        %v3464 = vunpack.c.l.b16 %v1858
        %v3465 = vunpack.c.l.b16 %v1859
        %v3466 = vunpack.c.l.b16 %v1860
        %v3467 = vunpack.c.l.b16 %v1861
        %v3468 = vunpack.c.l.b16 %v1862
        %v3469 = vunpack.c.l.b16 %v1863
        %v3470 = vunpack.c.l.b16 %v1864
        %v3471 = vunpack.c.l.b16 %v1865
        %v3472 = vunpack.c.l.b16 %v1866
        %v3473 = vpack.c.b16 %v3458, %v3457
        %v3474 = vpack.c.b16 %v3460, %v3459
        %v3475 = vpack.c.b16 %v3462, %v3461
        %v3476 = vpack.c.b16 %v3464, %v3463
        %v3477 = vpack.c.b16 %v3466, %v3465
        %v3478 = vpack.c.b16 %v3468, %v3467
        %v3479 = vpack.c.b16 %v3470, %v3469
        %v3480 = vpack.c.b16 %v3472, %v3471
        %3489 = vmatpush.bf16.msra.mxu0 %v3480
        %3490 = vmatpush.bf16.msra.mxu0 %v3479
        %3491 = vmatpush.bf16.msra.mxu0 %v3478
        %3492 = vmatpush.bf16.msra.mxu0 %v3477
        %3493 = vmatpush.bf16.msra.mxu0 %v3476
        %3494 = vmatpush.bf16.msra.mxu0 %v3475
        %3495 = vmatpush.bf16.msra.mxu0 %v3474
        %3496 = vmatpush.bf16.msra.mxu0 %v3473
        %3497 = vmatmul.bf16.gmra.mxu0 %v3425
        %v3498 = vpop.f32.mrf.mxu0
        %v3499 = vadd.f32 0.0, %v3498
        %v3500 = vpop.f32.mrf.mxu0
        %v3501 = vadd.f32 0.0, %v3500
        %3502 = vmatmul.bf16.gmra.mxu0 %v3426
        %v3503 = vpop.f32.mrf.mxu0
        %v3504 = vadd.f32 0.0, %v3503
        %v3505 = vpop.f32.mrf.mxu0
        %v3506 = vadd.f32 0.0, %v3505
        %3507 = vmatmul.bf16.gmra.mxu0 %v3427
        %v3508 = vpop.f32.mrf.mxu0
        %v3509 = vadd.f32 0.0, %v3508
        %v3510 = vpop.f32.mrf.mxu0
        %v3511 = vadd.f32 0.0, %v3510
        %3512 = vmatmul.bf16.gmra.mxu0 %v3428
        %v3513 = vpop.f32.mrf.mxu0
        %v3514 = vadd.f32 0.0, %v3513
        %v3515 = vpop.f32.mrf.mxu0
        %v3516 = vadd.f32 0.0, %v3515
        %3517 = vmatmul.bf16.gmra.mxu0 %v3429
        %v3518 = vpop.f32.mrf.mxu0
        %v3519 = vadd.f32 0.0, %v3518
        %v3520 = vpop.f32.mrf.mxu0
        %v3521 = vadd.f32 0.0, %v3520
        %3522 = vmatmul.bf16.gmra.mxu0 %v3430
        %v3523 = vpop.f32.mrf.mxu0
        %v3524 = vadd.f32 0.0, %v3523
        %v3525 = vpop.f32.mrf.mxu0
        %v3526 = vadd.f32 0.0, %v3525
        %3527 = vmatmul.bf16.gmra.mxu0 %v3431
        %v3528 = vpop.f32.mrf.mxu0
        %v3529 = vadd.f32 0.0, %v3528
        %v3530 = vpop.f32.mrf.mxu0
        %v3531 = vadd.f32 0.0, %v3530
        %3532 = vmatmul.bf16.gmra.mxu0 %v3432
        %v3533 = vpop.f32.mrf.mxu0
        %v3534 = vadd.f32 0.0, %v3533
        %v3535 = vpop.f32.mrf.mxu0
        %v3536 = vadd.f32 0.0, %v3535
        %3537 = vdwg.mxu0
        %v3554 = vunpack.c.l.b16 %v3216
        %v3555 = vunpack.c.l.b16 %v3217
        %v3556 = vunpack.c.l.b16 %v3218
        %v3557 = vunpack.c.l.b16 %v3219
        %v3558 = vunpack.c.l.b16 %v3220
        %v3559 = vunpack.c.l.b16 %v3221
        %v3560 = vunpack.c.l.b16 %v3222
        %v3561 = vunpack.c.l.b16 %v3223
        %v3562 = vunpack.c.l.b16 %v3224
        %v3563 = vunpack.c.l.b16 %v3225
        %v3564 = vunpack.c.l.b16 %v3226
        %v3565 = vunpack.c.l.b16 %v3227
        %v3566 = vunpack.c.l.b16 %v3228
        %v3567 = vunpack.c.l.b16 %v3229
        %v3568 = vunpack.c.l.b16 %v3230
        %v3569 = vunpack.c.l.b16 %v3231
        %v3570 = vpack.c.b16 %v3555, %v3554
        %v3571 = vpack.c.b16 %v3557, %v3556
        %v3572 = vpack.c.b16 %v3559, %v3558
        %v3573 = vpack.c.b16 %v3561, %v3560
        %v3574 = vpack.c.b16 %v3563, %v3562
        %v3575 = vpack.c.b16 %v3565, %v3564
        %v3576 = vpack.c.b16 %v3567, %v3566
        %v3577 = vpack.c.b16 %v3569, %v3568
        %v3602 = vunpack.c.l.b16 %v1867
        %v3603 = vunpack.c.l.b16 %v1868
        %v3604 = vunpack.c.l.b16 %v1869
        %v3605 = vunpack.c.l.b16 %v1870
        %v3606 = vunpack.c.l.b16 %v1871
        %v3607 = vunpack.c.l.b16 %v1872
        %v3608 = vunpack.c.l.b16 %v1873
        %v3609 = vunpack.c.l.b16 %v1874
        %v3610 = vunpack.c.l.b16 %v1875
        %v3611 = vunpack.c.l.b16 %v1876
        %v3612 = vunpack.c.l.b16 %v1877
        %v3613 = vunpack.c.l.b16 %v1878
        %v3614 = vunpack.c.l.b16 %v1879
        %v3615 = vunpack.c.l.b16 %v1880
        %v3616 = vunpack.c.l.b16 %v1881
        %v3617 = vunpack.c.l.b16 %v1882
        %v3618 = vpack.c.b16 %v3603, %v3602
        %v3619 = vpack.c.b16 %v3605, %v3604
        %v3620 = vpack.c.b16 %v3607, %v3606
        %v3621 = vpack.c.b16 %v3609, %v3608
        %v3622 = vpack.c.b16 %v3611, %v3610
        %v3623 = vpack.c.b16 %v3613, %v3612
        %v3624 = vpack.c.b16 %v3615, %v3614
        %v3625 = vpack.c.b16 %v3617, %v3616
        %3634 = vmatpush.bf16.msra.mxu0 %v3625
        %3635 = vmatpush.bf16.msra.mxu0 %v3624
        %3636 = vmatpush.bf16.msra.mxu0 %v3623
        %3637 = vmatpush.bf16.msra.mxu0 %v3622
        %3638 = vmatpush.bf16.msra.mxu0 %v3621
        %3639 = vmatpush.bf16.msra.mxu0 %v3620
        %3640 = vmatpush.bf16.msra.mxu0 %v3619
        %3641 = vmatpush.bf16.msra.mxu0 %v3618
        %3642 = vmatmul.bf16.gmra.mxu0 %v3570
        %v3643 = vpop.f32.mrf.mxu0
        %v3644 = vadd.f32 0.0, %v3643
        %v3645 = vpop.f32.mrf.mxu0
        %v3646 = vadd.f32 0.0, %v3645
        %3647 = vmatmul.bf16.gmra.mxu0 %v3571
        %v3648 = vpop.f32.mrf.mxu0
        %v3649 = vadd.f32 0.0, %v3648
        %v3650 = vpop.f32.mrf.mxu0
        %v3651 = vadd.f32 0.0, %v3650
        %3652 = vmatmul.bf16.gmra.mxu0 %v3572
        %v3653 = vpop.f32.mrf.mxu0
        %v3654 = vadd.f32 0.0, %v3653
        %v3655 = vpop.f32.mrf.mxu0
        %v3656 = vadd.f32 0.0, %v3655
        %3657 = vmatmul.bf16.gmra.mxu0 %v3573
        %v3658 = vpop.f32.mrf.mxu0
        %v3659 = vadd.f32 0.0, %v3658
        %v3660 = vpop.f32.mrf.mxu0
        %v3661 = vadd.f32 0.0, %v3660
        %3662 = vmatmul.bf16.gmra.mxu0 %v3574
        %v3663 = vpop.f32.mrf.mxu0
        %v3664 = vadd.f32 0.0, %v3663
        %v3665 = vpop.f32.mrf.mxu0
        %v3666 = vadd.f32 0.0, %v3665
        %3667 = vmatmul.bf16.gmra.mxu0 %v3575
        %v3668 = vpop.f32.mrf.mxu0
        %v3669 = vadd.f32 0.0, %v3668
        %v3670 = vpop.f32.mrf.mxu0
        %v3671 = vadd.f32 0.0, %v3670
        %3672 = vmatmul.bf16.gmra.mxu0 %v3576
        %v3673 = vpop.f32.mrf.mxu0
        %v3674 = vadd.f32 0.0, %v3673
        %v3675 = vpop.f32.mrf.mxu0
        %v3676 = vadd.f32 0.0, %v3675
        %3677 = vmatmul.bf16.gmra.mxu0 %v3577
        %v3678 = vpop.f32.mrf.mxu0
        %v3679 = vadd.f32 0.0, %v3678
        %v3680 = vpop.f32.mrf.mxu0
        %v3681 = vadd.f32 0.0, %v3680
        %3682 = vdwg.mxu0
        %v3699 = vunpack.c.l.b16 %v3232
        %v3700 = vunpack.c.l.b16 %v3233
        %v3701 = vunpack.c.l.b16 %v3234
        %v3702 = vunpack.c.l.b16 %v3235
        %v3703 = vunpack.c.l.b16 %v3236
        %v3704 = vunpack.c.l.b16 %v3237
        %v3705 = vunpack.c.l.b16 %v3238
        %v3706 = vunpack.c.l.b16 %v3239
        %v3707 = vunpack.c.l.b16 %v3240
        %v3708 = vunpack.c.l.b16 %v3241
        %v3709 = vunpack.c.l.b16 %v3242
        %v3710 = vunpack.c.l.b16 %v3243
        %v3711 = vunpack.c.l.b16 %v3244
        %v3712 = vunpack.c.l.b16 %v3245
        %v3713 = vunpack.c.l.b16 %v3246
        %v3714 = vunpack.c.l.b16 %v3247
        %v3715 = vpack.c.b16 %v3700, %v3699
        %v3716 = vpack.c.b16 %v3702, %v3701
        %v3717 = vpack.c.b16 %v3704, %v3703
        %v3718 = vpack.c.b16 %v3706, %v3705
        %v3719 = vpack.c.b16 %v3708, %v3707
        %v3720 = vpack.c.b16 %v3710, %v3709
        %v3721 = vpack.c.b16 %v3712, %v3711
        %v3722 = vpack.c.b16 %v3714, %v3713
        %v3747 = vunpack.c.l.b16 %v1883
        %v3748 = vunpack.c.l.b16 %v1884
        %v3749 = vunpack.c.l.b16 %v1885
        %v3750 = vunpack.c.l.b16 %v1886
        %v3751 = vunpack.c.l.b16 %v1887
        %v3752 = vunpack.c.l.b16 %v1888
        %v3753 = vunpack.c.l.b16 %v1889
        %v3754 = vunpack.c.l.b16 %v1890
        %v3755 = vunpack.c.l.b16 %v1891
        %v3756 = vunpack.c.l.b16 %v1892
        %v3757 = vunpack.c.l.b16 %v1893
        %v3758 = vunpack.c.l.b16 %v1894
        %v3759 = vunpack.c.l.b16 %v1895
        %v3760 = vunpack.c.l.b16 %v1896
        %v3761 = vunpack.c.l.b16 %v1897
        %v3762 = vunpack.c.l.b16 %v1898
        %v3763 = vpack.c.b16 %v3748, %v3747
        %v3764 = vpack.c.b16 %v3750, %v3749
        %v3765 = vpack.c.b16 %v3752, %v3751
        %v3766 = vpack.c.b16 %v3754, %v3753
        %v3767 = vpack.c.b16 %v3756, %v3755
        %v3768 = vpack.c.b16 %v3758, %v3757
        %v3769 = vpack.c.b16 %v3760, %v3759
        %v3770 = vpack.c.b16 %v3762, %v3761
        %3779 = vmatpush.bf16.msra.mxu0 %v3770
        %3780 = vmatpush.bf16.msra.mxu0 %v3769
        %3781 = vmatpush.bf16.msra.mxu0 %v3768
        %3782 = vmatpush.bf16.msra.mxu0 %v3767
        %3783 = vmatpush.bf16.msra.mxu0 %v3766
        %3784 = vmatpush.bf16.msra.mxu0 %v3765
        %3785 = vmatpush.bf16.msra.mxu0 %v3764
        %3786 = vmatpush.bf16.msra.mxu0 %v3763
        %3787 = vmatmul.bf16.gmra.mxu0 %v3715
        %v3788 = vpop.f32.mrf.mxu0
        %v3789 = vadd.f32 0.0, %v3788
        %v3790 = vpop.f32.mrf.mxu0
        %v3791 = vadd.f32 0.0, %v3790
        %3792 = vmatmul.bf16.gmra.mxu0 %v3716
        %v3793 = vpop.f32.mrf.mxu0
        %v3794 = vadd.f32 0.0, %v3793
        %v3795 = vpop.f32.mrf.mxu0
        %v3796 = vadd.f32 0.0, %v3795
        %3797 = vmatmul.bf16.gmra.mxu0 %v3717
        %v3798 = vpop.f32.mrf.mxu0
        %v3799 = vadd.f32 0.0, %v3798
        %v3800 = vpop.f32.mrf.mxu0
        %v3801 = vadd.f32 0.0, %v3800
        %3802 = vmatmul.bf16.gmra.mxu0 %v3718
        %v3803 = vpop.f32.mrf.mxu0
        %v3804 = vadd.f32 0.0, %v3803
        %v3805 = vpop.f32.mrf.mxu0
        %v3806 = vadd.f32 0.0, %v3805
        %3807 = vmatmul.bf16.gmra.mxu0 %v3719
        %v3808 = vpop.f32.mrf.mxu0
        %v3809 = vadd.f32 0.0, %v3808
        %v3810 = vpop.f32.mrf.mxu0
        %v3811 = vadd.f32 0.0, %v3810
        %3812 = vmatmul.bf16.gmra.mxu0 %v3720
        %v3813 = vpop.f32.mrf.mxu0
        %v3814 = vadd.f32 0.0, %v3813
        %v3815 = vpop.f32.mrf.mxu0
        %v3816 = vadd.f32 0.0, %v3815
        %3817 = vmatmul.bf16.gmra.mxu0 %v3721
        %v3818 = vpop.f32.mrf.mxu0
        %v3819 = vadd.f32 0.0, %v3818
        %v3820 = vpop.f32.mrf.mxu0
        %v3821 = vadd.f32 0.0, %v3820
        %3822 = vmatmul.bf16.gmra.mxu0 %v3722
        %v3823 = vpop.f32.mrf.mxu0
        %v3824 = vadd.f32 0.0, %v3823
        %v3825 = vpop.f32.mrf.mxu0
        %v3826 = vadd.f32 0.0, %v3825
        %3827 = vdwg.mxu0
        %3844 = vrot.lane.b32.xlu0 %v3499, 32
        %v3845 = vpop.permute.xlu0 %3844
        %3846 = vrot.lane.b32.xlu0 %v3501, 32
        %v3847 = vpop.permute.xlu0 %3846
        %3848 = vrot.lane.b32.xlu0 %v3504, 32
        %v3849 = vpop.permute.xlu0 %3848
        %3850 = vrot.lane.b32.xlu0 %v3506, 32
        %v3851 = vpop.permute.xlu0 %3850
        %3852 = vrot.lane.b32.xlu0 %v3509, 32
        %v3853 = vpop.permute.xlu0 %3852
        %3854 = vrot.lane.b32.xlu0 %v3511, 32
        %v3855 = vpop.permute.xlu0 %3854
        %3856 = vrot.lane.b32.xlu0 %v3514, 32
        %v3857 = vpop.permute.xlu0 %3856
        %3858 = vrot.lane.b32.xlu0 %v3516, 32
        %v3859 = vpop.permute.xlu0 %3858
        %3860 = vrot.lane.b32.xlu0 %v3519, 32
        %v3861 = vpop.permute.xlu0 %3860
        %3862 = vrot.lane.b32.xlu0 %v3521, 32
        %v3863 = vpop.permute.xlu0 %3862
        %3864 = vrot.lane.b32.xlu0 %v3524, 32
        %v3865 = vpop.permute.xlu0 %3864
        %3866 = vrot.lane.b32.xlu0 %v3526, 32
        %v3867 = vpop.permute.xlu0 %3866
        %3868 = vrot.lane.b32.xlu0 %v3529, 32
        %v3869 = vpop.permute.xlu0 %3868
        %3870 = vrot.lane.b32.xlu0 %v3531, 32
        %v3871 = vpop.permute.xlu0 %3870
        %3872 = vrot.lane.b32.xlu0 %v3534, 32
        %v3873 = vpop.permute.xlu0 %3872
        %3874 = vrot.lane.b32.xlu0 %v3536, 32
        %v3875 = vpop.permute.xlu0 %3874
        %3908 = vrot.lane.b32.xlu0 %v3644, 64
        %v3909 = vpop.permute.xlu0 %3908
        %3910 = vrot.lane.b32.xlu0 %v3646, 64
        %v3911 = vpop.permute.xlu0 %3910
        %3912 = vrot.lane.b32.xlu0 %v3649, 64
        %v3913 = vpop.permute.xlu0 %3912
        %3914 = vrot.lane.b32.xlu0 %v3651, 64
        %v3915 = vpop.permute.xlu0 %3914
        %3916 = vrot.lane.b32.xlu0 %v3654, 64
        %v3917 = vpop.permute.xlu0 %3916
        %3918 = vrot.lane.b32.xlu0 %v3656, 64
        %v3919 = vpop.permute.xlu0 %3918
        %3920 = vrot.lane.b32.xlu0 %v3659, 64
        %v3921 = vpop.permute.xlu0 %3920
        %3922 = vrot.lane.b32.xlu0 %v3661, 64
        %v3923 = vpop.permute.xlu0 %3922
        %3924 = vrot.lane.b32.xlu0 %v3664, 64
        %v3925 = vpop.permute.xlu0 %3924
        %3926 = vrot.lane.b32.xlu0 %v3666, 64
        %v3927 = vpop.permute.xlu0 %3926
        %3928 = vrot.lane.b32.xlu0 %v3669, 64
        %v3929 = vpop.permute.xlu0 %3928
        %3930 = vrot.lane.b32.xlu0 %v3671, 64
        %v3931 = vpop.permute.xlu0 %3930
        %3932 = vrot.lane.b32.xlu0 %v3674, 64
        %v3933 = vpop.permute.xlu0 %3932
        %3934 = vrot.lane.b32.xlu0 %v3676, 64
        %v3935 = vpop.permute.xlu0 %3934
        %3936 = vrot.lane.b32.xlu0 %v3679, 64
        %v3937 = vpop.permute.xlu0 %3936
        %3938 = vrot.lane.b32.xlu0 %v3681, 64
        %v3939 = vpop.permute.xlu0 %3938
        %3972 = vrot.lane.b32.xlu0 %v3789, 96
        %v3973 = vpop.permute.xlu0 %3972
        %3974 = vrot.lane.b32.xlu0 %v3791, 96
        %v3975 = vpop.permute.xlu0 %3974
        %3976 = vrot.lane.b32.xlu0 %v3794, 96
        %v3977 = vpop.permute.xlu0 %3976
        %3978 = vrot.lane.b32.xlu0 %v3796, 96
        %v3979 = vpop.permute.xlu0 %3978
        %3980 = vrot.lane.b32.xlu0 %v3799, 96
        %v3981 = vpop.permute.xlu0 %3980
        %3982 = vrot.lane.b32.xlu0 %v3801, 96
        %v3983 = vpop.permute.xlu0 %3982
        %3984 = vrot.lane.b32.xlu0 %v3804, 96
        %v3985 = vpop.permute.xlu0 %3984
        %3986 = vrot.lane.b32.xlu0 %v3806, 96
        %v3987 = vpop.permute.xlu0 %3986
        %3988 = vrot.lane.b32.xlu0 %v3809, 96
        %v3989 = vpop.permute.xlu0 %3988
        %3990 = vrot.lane.b32.xlu0 %v3811, 96
        %v3991 = vpop.permute.xlu0 %3990
        %3992 = vrot.lane.b32.xlu0 %v3814, 96
        %v3993 = vpop.permute.xlu0 %3992
        %3994 = vrot.lane.b32.xlu0 %v3816, 96
        %v3995 = vpop.permute.xlu0 %3994
        %3996 = vrot.lane.b32.xlu0 %v3819, 96
        %v3997 = vpop.permute.xlu0 %3996
        %3998 = vrot.lane.b32.xlu0 %v3821, 96
        %v3999 = vpop.permute.xlu0 %3998
        %4000 = vrot.lane.b32.xlu0 %v3824, 96
        %v4001 = vpop.permute.xlu0 %4000
        %4002 = vrot.lane.b32.xlu0 %v3826, 96
        %v4003 = vpop.permute.xlu0 %4002
        %v4020 = vsel %vm1979, %v3354, %v3845
        %v4021 = vsel %vm1979, %v3356, %v3847
        %v4022 = vsel %vm1979, %v3359, %v3849
        %v4023 = vsel %vm1979, %v3361, %v3851
        %v4024 = vsel %vm1979, %v3364, %v3853
        %v4025 = vsel %vm1979, %v3366, %v3855
        %v4026 = vsel %vm1979, %v3369, %v3857
        %v4027 = vsel %vm1979, %v3371, %v3859
        %v4028 = vsel %vm1979, %v3374, %v3861
        %v4029 = vsel %vm1979, %v3376, %v3863
        %v4030 = vsel %vm1979, %v3379, %v3865
        %v4031 = vsel %vm1979, %v3381, %v3867
        %v4032 = vsel %vm1979, %v3384, %v3869
        %v4033 = vsel %vm1979, %v3386, %v3871
        %v4034 = vsel %vm1979, %v3389, %v3873
        %v4035 = vsel %vm1979, %v3391, %v3875
        %vm4036 = vcmask 523264
        %v4037 = vsel %vm4036, %v4020, %v3909
        %v4038 = vsel %vm4036, %v4021, %v3911
        %v4039 = vsel %vm4036, %v4022, %v3913
        %v4040 = vsel %vm4036, %v4023, %v3915
        %v4041 = vsel %vm4036, %v4024, %v3917
        %v4042 = vsel %vm4036, %v4025, %v3919
        %v4043 = vsel %vm4036, %v4026, %v3921
        %v4044 = vsel %vm4036, %v4027, %v3923
        %v4045 = vsel %vm4036, %v4028, %v3925
        %v4046 = vsel %vm4036, %v4029, %v3927
        %v4047 = vsel %vm4036, %v4030, %v3929
        %v4048 = vsel %vm4036, %v4031, %v3931
        %v4049 = vsel %vm4036, %v4032, %v3933
        %v4050 = vsel %vm4036, %v4033, %v3935
        %v4051 = vsel %vm4036, %v4034, %v3937
        %v4052 = vsel %vm4036, %v4035, %v3939
        %vm4053 = vcmask 785408
        %v4054 = vsel %vm4053, %v4037, %v3973
        %v4055 = vsel %vm4053, %v4038, %v3975
        %v4056 = vsel %vm4053, %v4039, %v3977
        %v4057 = vsel %vm4053, %v4040, %v3979
        %v4058 = vsel %vm4053, %v4041, %v3981
        %v4059 = vsel %vm4053, %v4042, %v3983
        %v4060 = vsel %vm4053, %v4043, %v3985
        %v4061 = vsel %vm4053, %v4044, %v3987
        %v4062 = vsel %vm4053, %v4045, %v3989
        %v4063 = vsel %vm4053, %v4046, %v3991
        %v4064 = vsel %vm4053, %v4047, %v3993
        %v4065 = vsel %vm4053, %v4048, %v3995
        %v4066 = vsel %vm4053, %v4049, %v3997
        %v4067 = vsel %vm4053, %v4050, %v3999
        %v4068 = vsel %vm4053, %v4051, %v4001
        %v4069 = vsel %vm4053, %v4052, %v4003
        %v4070 = vpack.c.bf16 %v4055, %v4054
        %v4071 = vpack.c.bf16 %v4057, %v4056
        %v4072 = vpack.c.bf16 %v4059, %v4058
        %v4073 = vpack.c.bf16 %v4061, %v4060
        %v4074 = vpack.c.bf16 %v4063, %v4062
        %v4075 = vpack.c.bf16 %v4065, %v4064
        %v4076 = vpack.c.bf16 %v4067, %v4066
        %v4077 = vpack.c.bf16 %v4069, %v4068
        %v4078 = vld [vmem:[#allocation8] sm:$0xf]
        %v4079 = vld [vmem:[#allocation8 + $0x4] sm:$0xf]
        %v4080 = vld [vmem:[#allocation8 + $0x8] sm:$0xf]
        %v4081 = vld [vmem:[#allocation8 + $0xc] sm:$0xf]
        %v4082 = vld [vmem:[#allocation8 + $0x10] sm:$0xf]
        %v4083 = vld [vmem:[#allocation8 + $0x14] sm:$0xf]
        %v4084 = vld [vmem:[#allocation8 + $0x18] sm:$0xf]
        %v4085 = vld [vmem:[#allocation8 + $0x1c] sm:$0xf]
        %v4086 = vld [vmem:[#allocation8 + $0x20] sm:$0xf]
        %v4087 = vld [vmem:[#allocation8 + $0x24] sm:$0xf]
        %v4088 = vld [vmem:[#allocation8 + $0x28] sm:$0xf]
        %v4089 = vld [vmem:[#allocation8 + $0x2c] sm:$0xf]
        %v4090 = vld [vmem:[#allocation8 + $0x30] sm:$0xf]
        %v4091 = vld [vmem:[#allocation8 + $0x34] sm:$0xf]
        %v4092 = vld [vmem:[#allocation8 + $0x38] sm:$0xf]
        %v4093 = vld [vmem:[#allocation8 + $0x3c] sm:$0xf]
        %v4094 = vld [vmem:[%s5] sm:$0x1]
        %v4096 = vperm.slane %v4094, 0
        %v4114 = vunpack.c.l.b16 %v4078
        %v4115 = vunpack.c.l.b16 %v4079
        %v4116 = vunpack.c.l.b16 %v4080
        %v4117 = vunpack.c.l.b16 %v4081
        %v4118 = vunpack.c.l.b16 %v4082
        %v4119 = vunpack.c.l.b16 %v4083
        %v4120 = vunpack.c.l.b16 %v4084
        %v4121 = vunpack.c.l.b16 %v4085
        %v4122 = vunpack.c.l.b16 %v4086
        %v4123 = vunpack.c.l.b16 %v4087
        %v4124 = vunpack.c.l.b16 %v4088
        %v4125 = vunpack.c.l.b16 %v4089
        %v4126 = vunpack.c.l.b16 %v4090
        %v4127 = vunpack.c.l.b16 %v4091
        %v4128 = vunpack.c.l.b16 %v4092
        %v4129 = vunpack.c.l.b16 %v4093
        %v4130 = vpack.c.b16 %v4115, %v4114
        %v4131 = vpack.c.b16 %v4117, %v4116
        %v4132 = vpack.c.b16 %v4119, %v4118
        %v4133 = vpack.c.b16 %v4121, %v4120
        %v4134 = vpack.c.b16 %v4123, %v4122
        %v4135 = vpack.c.b16 %v4125, %v4124
        %v4136 = vpack.c.b16 %v4127, %v4126
        %v4137 = vpack.c.b16 %v4129, %v4128
        %4146 = vmatpush.bf16.msra.mxu0 %v4137
        %4147 = vmatpush.bf16.msra.mxu0 %v4136
        %4148 = vmatpush.bf16.msra.mxu0 %v4135
        %4149 = vmatpush.bf16.msra.mxu0 %v4134
        %4150 = vmatpush.bf16.msra.mxu0 %v4133
        %4151 = vmatpush.bf16.msra.mxu0 %v4132
        %4152 = vmatpush.bf16.msra.mxu0 %v4131
        %4153 = vmatpush.bf16.msra.mxu0 %v4130
        %4154 = vmatmul.bf16.gmra.mxu0 %v4070
        %v4155 = vpop.f32.mrf.mxu0
        %v4156 = vadd.f32 %v4096, %v4155
        %v4157 = vpop.f32.mrf.mxu0
        %v4158 = vadd.f32 %v4096, %v4157
        %4159 = vmatmul.bf16.gmra.mxu0 %v4071
        %v4160 = vpop.f32.mrf.mxu0
        %v4161 = vadd.f32 %v4096, %v4160
        %v4162 = vpop.f32.mrf.mxu0
        %v4163 = vadd.f32 %v4096, %v4162
        %4164 = vmatmul.bf16.gmra.mxu0 %v4072
        %v4165 = vpop.f32.mrf.mxu0
        %v4166 = vadd.f32 %v4096, %v4165
        %v4167 = vpop.f32.mrf.mxu0
        %v4168 = vadd.f32 %v4096, %v4167
        %4169 = vmatmul.bf16.gmra.mxu0 %v4073
        %v4170 = vpop.f32.mrf.mxu0
        %v4171 = vadd.f32 %v4096, %v4170
        %v4172 = vpop.f32.mrf.mxu0
        %v4173 = vadd.f32 %v4096, %v4172
        %4174 = vmatmul.bf16.gmra.mxu0 %v4074
        %v4175 = vpop.f32.mrf.mxu0
        %v4176 = vadd.f32 %v4096, %v4175
        %v4177 = vpop.f32.mrf.mxu0
        %v4178 = vadd.f32 %v4096, %v4177
        %4179 = vmatmul.bf16.gmra.mxu0 %v4075
        %v4180 = vpop.f32.mrf.mxu0
        %v4181 = vadd.f32 %v4096, %v4180
        %v4182 = vpop.f32.mrf.mxu0
        %v4183 = vadd.f32 %v4096, %v4182
        %4184 = vmatmul.bf16.gmra.mxu0 %v4076
        %v4185 = vpop.f32.mrf.mxu0
        %v4186 = vadd.f32 %v4096, %v4185
        %v4187 = vpop.f32.mrf.mxu0
        %v4188 = vadd.f32 %v4096, %v4187
        %4189 = vmatmul.bf16.gmra.mxu0 %v4077
        %v4190 = vpop.f32.mrf.mxu0
        %v4191 = vadd.f32 %v4096, %v4190
        %v4192 = vpop.f32.mrf.mxu0
        %v4193 = vadd.f32 %v4096, %v4192
        %4194 = vdwg.mxu0
        %v4195 = vadd.f32 %v529, %v4156
        %v4196 = vadd.f32 %v530, %v4158
        %v4197 = vadd.f32 %v531, %v4161
        %v4198 = vadd.f32 %v532, %v4163
        %v4199 = vadd.f32 %v533, %v4166
        %v4200 = vadd.f32 %v534, %v4168
        %v4201 = vadd.f32 %v535, %v4171
        %v4202 = vadd.f32 %v536, %v4173
        %v4203 = vadd.f32 %v537, %v4176
        %v4204 = vadd.f32 %v538, %v4178
        %v4205 = vadd.f32 %v539, %v4181
        %v4206 = vadd.f32 %v540, %v4183
        %v4207 = vadd.f32 %v541, %v4186
        %v4208 = vadd.f32 %v542, %v4188
        %v4209 = vadd.f32 %v543, %v4191
        %v4210 = vadd.f32 %v544, %v4193
        %v4211 = vld [vmem:[%s6] sm:$0x1]
        %v4212 = vld [vmem:[#allocation10] sm:$0x1]
        %4213 = vadd.xlane.f32.xlu0 %v4195
        %v4214 = vpop.xlane.xlu0 %4213
        %4215 = vadd.xlane.f32.xlu0 %v4196
        %v4216 = vpop.xlane.xlu0 %4215
        %4217 = vadd.xlane.f32.xlu0 %v4197
        %v4218 = vpop.xlane.xlu0 %4217
        %4219 = vadd.xlane.f32.xlu0 %v4198
        %v4220 = vpop.xlane.xlu0 %4219
        %4221 = vadd.xlane.f32.xlu0 %v4199
        %v4222 = vpop.xlane.xlu0 %4221
        %4223 = vadd.xlane.f32.xlu0 %v4200
        %v4224 = vpop.xlane.xlu0 %4223
        %4225 = vadd.xlane.f32.xlu0 %v4201
        %v4226 = vpop.xlane.xlu0 %4225
        %4227 = vadd.xlane.f32.xlu0 %v4202
        %v4228 = vpop.xlane.xlu0 %4227
        %4229 = vadd.xlane.f32.xlu0 %v4203
        %v4230 = vpop.xlane.xlu0 %4229
        %4231 = vadd.xlane.f32.xlu0 %v4204
        %v4232 = vpop.xlane.xlu0 %4231
        %4233 = vadd.xlane.f32.xlu0 %v4205
        %v4234 = vpop.xlane.xlu0 %4233
        %4235 = vadd.xlane.f32.xlu0 %v4206
        %v4236 = vpop.xlane.xlu0 %4235
        %4237 = vadd.xlane.f32.xlu0 %v4207
        %v4238 = vpop.xlane.xlu0 %4237
        %4239 = vadd.xlane.f32.xlu0 %v4208
        %v4240 = vpop.xlane.xlu0 %4239
        %4241 = vadd.xlane.f32.xlu0 %v4209
        %v4242 = vpop.xlane.xlu0 %4241
        %4243 = vadd.xlane.f32.xlu0 %v4210
        %v4244 = vpop.xlane.xlu0 %4243
        %v4245 = vmul.f32 %v4214, %v585
        %v4246 = vmul.f32 %v4216, %v585
        %v4247 = vmul.f32 %v4218, %v585
        %v4248 = vmul.f32 %v4220, %v585
        %v4249 = vmul.f32 %v4222, %v585
        %v4250 = vmul.f32 %v4224, %v585
        %v4251 = vmul.f32 %v4226, %v585
        %v4252 = vmul.f32 %v4228, %v585
        %v4253 = vmul.f32 %v4230, %v585
        %v4254 = vmul.f32 %v4232, %v585
        %v4255 = vmul.f32 %v4234, %v585
        %v4256 = vmul.f32 %v4236, %v585
        %v4257 = vmul.f32 %v4238, %v585
        %v4258 = vmul.f32 %v4240, %v585
        %v4259 = vmul.f32 %v4242, %v585
        %v4260 = vmul.f32 %v4244, %v585
        %v4261 = vsub.f32 %v4195, %v4245
        %v4262 = vsub.f32 %v4196, %v4246
        %v4263 = vsub.f32 %v4197, %v4247
        %v4264 = vsub.f32 %v4198, %v4248
        %v4265 = vsub.f32 %v4199, %v4249
        %v4266 = vsub.f32 %v4200, %v4250
        %v4267 = vsub.f32 %v4201, %v4251
        %v4268 = vsub.f32 %v4202, %v4252
        %v4269 = vsub.f32 %v4203, %v4253
        %v4270 = vsub.f32 %v4204, %v4254
        %v4271 = vsub.f32 %v4205, %v4255
        %v4272 = vsub.f32 %v4206, %v4256
        %v4273 = vsub.f32 %v4207, %v4257
        %v4274 = vsub.f32 %v4208, %v4258
        %v4275 = vsub.f32 %v4209, %v4259
        %v4276 = vsub.f32 %v4210, %v4260
        %v4277 = vmul.f32 %v4261, %v4261
        %v4278 = vmul.f32 %v4262, %v4262
        %v4279 = vmul.f32 %v4263, %v4263
        %v4280 = vmul.f32 %v4264, %v4264
        %v4281 = vmul.f32 %v4265, %v4265
        %v4282 = vmul.f32 %v4266, %v4266
        %v4283 = vmul.f32 %v4267, %v4267
        %v4284 = vmul.f32 %v4268, %v4268
        %v4285 = vmul.f32 %v4269, %v4269
        %v4286 = vmul.f32 %v4270, %v4270
        %v4287 = vmul.f32 %v4271, %v4271
        %v4288 = vmul.f32 %v4272, %v4272
        %v4289 = vmul.f32 %v4273, %v4273
        %v4290 = vmul.f32 %v4274, %v4274
        %v4291 = vmul.f32 %v4275, %v4275
        %v4292 = vmul.f32 %v4276, %v4276
        %4293 = vadd.xlane.f32.xlu0 %v4277
        %v4294 = vpop.xlane.xlu0 %4293
        %4295 = vadd.xlane.f32.xlu0 %v4278
        %v4296 = vpop.xlane.xlu0 %4295
        %4297 = vadd.xlane.f32.xlu0 %v4279
        %v4298 = vpop.xlane.xlu0 %4297
        %4299 = vadd.xlane.f32.xlu0 %v4280
        %v4300 = vpop.xlane.xlu0 %4299
        %4301 = vadd.xlane.f32.xlu0 %v4281
        %v4302 = vpop.xlane.xlu0 %4301
        %4303 = vadd.xlane.f32.xlu0 %v4282
        %v4304 = vpop.xlane.xlu0 %4303
        %4305 = vadd.xlane.f32.xlu0 %v4283
        %v4306 = vpop.xlane.xlu0 %4305
        %4307 = vadd.xlane.f32.xlu0 %v4284
        %v4308 = vpop.xlane.xlu0 %4307
        %4309 = vadd.xlane.f32.xlu0 %v4285
        %v4310 = vpop.xlane.xlu0 %4309
        %4311 = vadd.xlane.f32.xlu0 %v4286
        %v4312 = vpop.xlane.xlu0 %4311
        %4313 = vadd.xlane.f32.xlu0 %v4287
        %v4314 = vpop.xlane.xlu0 %4313
        %4315 = vadd.xlane.f32.xlu0 %v4288
        %v4316 = vpop.xlane.xlu0 %4315
        %4317 = vadd.xlane.f32.xlu0 %v4289
        %v4318 = vpop.xlane.xlu0 %4317
        %4319 = vadd.xlane.f32.xlu0 %v4290
        %v4320 = vpop.xlane.xlu0 %4319
        %4321 = vadd.xlane.f32.xlu0 %v4291
        %v4322 = vpop.xlane.xlu0 %4321
        %4323 = vadd.xlane.f32.xlu0 %v4292
        %v4324 = vpop.xlane.xlu0 %4323
        %v4325 = vmul.f32 %v4294, %v585
        %v4326 = vmul.f32 %v4296, %v585
        %v4327 = vmul.f32 %v4298, %v585
        %v4328 = vmul.f32 %v4300, %v585
        %v4329 = vmul.f32 %v4302, %v585
        %v4330 = vmul.f32 %v4304, %v585
        %v4331 = vmul.f32 %v4306, %v585
        %v4332 = vmul.f32 %v4308, %v585
        %v4333 = vmul.f32 %v4310, %v585
        %v4334 = vmul.f32 %v4312, %v585
        %v4335 = vmul.f32 %v4314, %v585
        %v4336 = vmul.f32 %v4316, %v585
        %v4337 = vmul.f32 %v4318, %v585
        %v4338 = vmul.f32 %v4320, %v585
        %v4339 = vmul.f32 %v4322, %v585
        %v4340 = vmul.f32 %v4324, %v585
        %v4341 = vadd.f32 %v4325, 1e-05
        %v4342 = vadd.f32 %v4326, 1e-05
        %v4343 = vadd.f32 %v4327, 1e-05
        %v4344 = vadd.f32 %v4328, 1e-05
        %v4345 = vadd.f32 %v4329, 1e-05
        %v4346 = vadd.f32 %v4330, 1e-05
        %v4347 = vadd.f32 %v4331, 1e-05
        %v4348 = vadd.f32 %v4332, 1e-05
        %v4349 = vadd.f32 %v4333, 1e-05
        %v4350 = vadd.f32 %v4334, 1e-05
        %v4351 = vadd.f32 %v4335, 1e-05
        %v4352 = vadd.f32 %v4336, 1e-05
        %v4353 = vadd.f32 %v4337, 1e-05
        %v4354 = vadd.f32 %v4338, 1e-05
        %v4355 = vadd.f32 %v4339, 1e-05
        %v4356 = vadd.f32 %v4340, 1e-05
        %v4357 = vrsqrt.pop %v4341
        %v4358 = vmul.f32 %v4357, %v4341
        %v4359 = vmul.f32 %v4358, %v4357
        %v4360 = vmul.f32 0.5, %v4359
        %v4361 = vsub.f32 1.5, %v4360
        %v4362 = vmul.f32 %v4357, %v4361
        %vm4363 = vweird.f32 %v4341
        %vm4364 = vweird.f32 %v4357
        %vm4365 = vmor %vm4363, %vm4364
        %v4366 = vsel %vm4365, %v4357, %v4362
        %v4367 = vrsqrt.pop %v4342
        %v4368 = vmul.f32 %v4367, %v4342
        %v4369 = vmul.f32 %v4368, %v4367
        %v4370 = vmul.f32 0.5, %v4369
        %v4371 = vsub.f32 1.5, %v4370
        %v4372 = vmul.f32 %v4367, %v4371
        %vm4373 = vweird.f32 %v4342
        %vm4374 = vweird.f32 %v4367
        %vm4375 = vmor %vm4373, %vm4374
        %v4376 = vsel %vm4375, %v4367, %v4372
        %v4377 = vrsqrt.pop %v4343
        %v4378 = vmul.f32 %v4377, %v4343
        %v4379 = vmul.f32 %v4378, %v4377
        %v4380 = vmul.f32 0.5, %v4379
        %v4381 = vsub.f32 1.5, %v4380
        %v4382 = vmul.f32 %v4377, %v4381
        %vm4383 = vweird.f32 %v4343
        %vm4384 = vweird.f32 %v4377
        %vm4385 = vmor %vm4383, %vm4384
        %v4386 = vsel %vm4385, %v4377, %v4382
        %v4387 = vrsqrt.pop %v4344
        %v4388 = vmul.f32 %v4387, %v4344
        %v4389 = vmul.f32 %v4388, %v4387
        %v4390 = vmul.f32 0.5, %v4389
        %v4391 = vsub.f32 1.5, %v4390
        %v4392 = vmul.f32 %v4387, %v4391
        %vm4393 = vweird.f32 %v4344
        %vm4394 = vweird.f32 %v4387
        %vm4395 = vmor %vm4393, %vm4394
        %v4396 = vsel %vm4395, %v4387, %v4392
        %v4397 = vrsqrt.pop %v4345
        %v4398 = vmul.f32 %v4397, %v4345
        %v4399 = vmul.f32 %v4398, %v4397
        %v4400 = vmul.f32 0.5, %v4399
        %v4401 = vsub.f32 1.5, %v4400
        %v4402 = vmul.f32 %v4397, %v4401
        %vm4403 = vweird.f32 %v4345
        %vm4404 = vweird.f32 %v4397
        %vm4405 = vmor %vm4403, %vm4404
        %v4406 = vsel %vm4405, %v4397, %v4402
        %v4407 = vrsqrt.pop %v4346
        %v4408 = vmul.f32 %v4407, %v4346
        %v4409 = vmul.f32 %v4408, %v4407
        %v4410 = vmul.f32 0.5, %v4409
        %v4411 = vsub.f32 1.5, %v4410
        %v4412 = vmul.f32 %v4407, %v4411
        %vm4413 = vweird.f32 %v4346
        %vm4414 = vweird.f32 %v4407
        %vm4415 = vmor %vm4413, %vm4414
        %v4416 = vsel %vm4415, %v4407, %v4412
        %v4417 = vrsqrt.pop %v4347
        %v4418 = vmul.f32 %v4417, %v4347
        %v4419 = vmul.f32 %v4418, %v4417
        %v4420 = vmul.f32 0.5, %v4419
        %v4421 = vsub.f32 1.5, %v4420
        %v4422 = vmul.f32 %v4417, %v4421
        %vm4423 = vweird.f32 %v4347
        %vm4424 = vweird.f32 %v4417
        %vm4425 = vmor %vm4423, %vm4424
        %v4426 = vsel %vm4425, %v4417, %v4422
        %v4427 = vrsqrt.pop %v4348
        %v4428 = vmul.f32 %v4427, %v4348
        %v4429 = vmul.f32 %v4428, %v4427
        %v4430 = vmul.f32 0.5, %v4429
        %v4431 = vsub.f32 1.5, %v4430
        %v4432 = vmul.f32 %v4427, %v4431
        %vm4433 = vweird.f32 %v4348
        %vm4434 = vweird.f32 %v4427
        %vm4435 = vmor %vm4433, %vm4434
        %v4436 = vsel %vm4435, %v4427, %v4432
        %v4437 = vrsqrt.pop %v4349
        %v4438 = vmul.f32 %v4437, %v4349
        %v4439 = vmul.f32 %v4438, %v4437
        %v4440 = vmul.f32 0.5, %v4439
        %v4441 = vsub.f32 1.5, %v4440
        %v4442 = vmul.f32 %v4437, %v4441
        %vm4443 = vweird.f32 %v4349
        %vm4444 = vweird.f32 %v4437
        %vm4445 = vmor %vm4443, %vm4444
        %v4446 = vsel %vm4445, %v4437, %v4442
        %v4447 = vrsqrt.pop %v4350
        %v4448 = vmul.f32 %v4447, %v4350
        %v4449 = vmul.f32 %v4448, %v4447
        %v4450 = vmul.f32 0.5, %v4449
        %v4451 = vsub.f32 1.5, %v4450
        %v4452 = vmul.f32 %v4447, %v4451
        %vm4453 = vweird.f32 %v4350
        %vm4454 = vweird.f32 %v4447
        %vm4455 = vmor %vm4453, %vm4454
        %v4456 = vsel %vm4455, %v4447, %v4452
        %v4457 = vrsqrt.pop %v4351
        %v4458 = vmul.f32 %v4457, %v4351
        %v4459 = vmul.f32 %v4458, %v4457
        %v4460 = vmul.f32 0.5, %v4459
        %v4461 = vsub.f32 1.5, %v4460
        %v4462 = vmul.f32 %v4457, %v4461
        %vm4463 = vweird.f32 %v4351
        %vm4464 = vweird.f32 %v4457
        %vm4465 = vmor %vm4463, %vm4464
        %v4466 = vsel %vm4465, %v4457, %v4462
        %v4467 = vrsqrt.pop %v4352
        %v4468 = vmul.f32 %v4467, %v4352
        %v4469 = vmul.f32 %v4468, %v4467
        %v4470 = vmul.f32 0.5, %v4469
        %v4471 = vsub.f32 1.5, %v4470
        %v4472 = vmul.f32 %v4467, %v4471
        %vm4473 = vweird.f32 %v4352
        %vm4474 = vweird.f32 %v4467
        %vm4475 = vmor %vm4473, %vm4474
        %v4476 = vsel %vm4475, %v4467, %v4472
        %v4477 = vrsqrt.pop %v4353
        %v4478 = vmul.f32 %v4477, %v4353
        %v4479 = vmul.f32 %v4478, %v4477
        %v4480 = vmul.f32 0.5, %v4479
        %v4481 = vsub.f32 1.5, %v4480
        %v4482 = vmul.f32 %v4477, %v4481
        %vm4483 = vweird.f32 %v4353
        %vm4484 = vweird.f32 %v4477
        %vm4485 = vmor %vm4483, %vm4484
        %v4486 = vsel %vm4485, %v4477, %v4482
        %v4487 = vrsqrt.pop %v4354
        %v4488 = vmul.f32 %v4487, %v4354
        %v4489 = vmul.f32 %v4488, %v4487
        %v4490 = vmul.f32 0.5, %v4489
        %v4491 = vsub.f32 1.5, %v4490
        %v4492 = vmul.f32 %v4487, %v4491
        %vm4493 = vweird.f32 %v4354
        %vm4494 = vweird.f32 %v4487
        %vm4495 = vmor %vm4493, %vm4494
        %v4496 = vsel %vm4495, %v4487, %v4492
        %v4497 = vrsqrt.pop %v4355
        %v4498 = vmul.f32 %v4497, %v4355
        %v4499 = vmul.f32 %v4498, %v4497
        %v4500 = vmul.f32 0.5, %v4499
        %v4501 = vsub.f32 1.5, %v4500
        %v4502 = vmul.f32 %v4497, %v4501
        %vm4503 = vweird.f32 %v4355
        %vm4504 = vweird.f32 %v4497
        %vm4505 = vmor %vm4503, %vm4504
        %v4506 = vsel %vm4505, %v4497, %v4502
        %v4507 = vrsqrt.pop %v4356
        %v4508 = vmul.f32 %v4507, %v4356
        %v4509 = vmul.f32 %v4508, %v4507
        %v4510 = vmul.f32 0.5, %v4509
        %v4511 = vsub.f32 1.5, %v4510
        %v4512 = vmul.f32 %v4507, %v4511
        %vm4513 = vweird.f32 %v4356
        %vm4514 = vweird.f32 %v4507
        %vm4515 = vmor %vm4513, %vm4514
        %v4516 = vsel %vm4515, %v4507, %v4512
        %v4517 = vmul.f32 %v4261, %v4366
        %v4518 = vmul.f32 %v4262, %v4376
        %v4519 = vmul.f32 %v4263, %v4386
        %v4520 = vmul.f32 %v4264, %v4396
        %v4521 = vmul.f32 %v4265, %v4406
        %v4522 = vmul.f32 %v4266, %v4416
        %v4523 = vmul.f32 %v4267, %v4426
        %v4524 = vmul.f32 %v4268, %v4436
        %v4525 = vmul.f32 %v4269, %v4446
        %v4526 = vmul.f32 %v4270, %v4456
        %v4527 = vmul.f32 %v4271, %v4466
        %v4528 = vmul.f32 %v4272, %v4476
        %v4529 = vmul.f32 %v4273, %v4486
        %v4530 = vmul.f32 %v4274, %v4496
        %v4531 = vmul.f32 %v4275, %v4506
        %v4532 = vmul.f32 %v4276, %v4516
        %v4534 = vperm.slane %v4211, 0
        %v4536 = vmul.f32 %v4517, %v4534
        %v4537 = vmul.f32 %v4518, %v4534
        %v4538 = vmul.f32 %v4519, %v4534
        %v4539 = vmul.f32 %v4520, %v4534
        %v4540 = vmul.f32 %v4521, %v4534
        %v4541 = vmul.f32 %v4522, %v4534
        %v4542 = vmul.f32 %v4523, %v4534
        %v4543 = vmul.f32 %v4524, %v4534
        %v4544 = vmul.f32 %v4525, %v4534
        %v4545 = vmul.f32 %v4526, %v4534
        %v4546 = vmul.f32 %v4527, %v4534
        %v4547 = vmul.f32 %v4528, %v4534
        %v4548 = vmul.f32 %v4529, %v4534
        %v4549 = vmul.f32 %v4530, %v4534
        %v4550 = vmul.f32 %v4531, %v4534
        %v4551 = vmul.f32 %v4532, %v4534
        %v4553 = vperm.slane %v4212, 0
        %v4555 = vadd.f32 %v4536, %v4553
        %v4556 = vadd.f32 %v4537, %v4553
        %v4557 = vadd.f32 %v4538, %v4553
        %v4558 = vadd.f32 %v4539, %v4553
        %v4559 = vadd.f32 %v4540, %v4553
        %v4560 = vadd.f32 %v4541, %v4553
        %v4561 = vadd.f32 %v4542, %v4553
        %v4562 = vadd.f32 %v4543, %v4553
        %v4563 = vadd.f32 %v4544, %v4553
        %v4564 = vadd.f32 %v4545, %v4553
        %v4565 = vadd.f32 %v4546, %v4553
        %v4566 = vadd.f32 %v4547, %v4553
        %v4567 = vadd.f32 %v4548, %v4553
        %v4568 = vadd.f32 %v4549, %v4553
        %v4569 = vadd.f32 %v4550, %v4553
        %v4570 = vadd.f32 %v4551, %v4553
        %v4571 = vpack.c.bf16 %v4556, %v4555
        %v4572 = vpack.c.bf16 %v4558, %v4557
        %v4573 = vpack.c.bf16 %v4560, %v4559
        %v4574 = vpack.c.bf16 %v4562, %v4561
        %v4575 = vpack.c.bf16 %v4564, %v4563
        %v4576 = vpack.c.bf16 %v4566, %v4565
        %v4577 = vpack.c.bf16 %v4568, %v4567
        %v4578 = vpack.c.bf16 %v4570, %v4569
        %v4579 = vld [vmem:[#allocation11] sm:$0xff]
        %v4580 = vld [vmem:[#allocation11 + $0x8] sm:$0xff]
        %v4581 = vld [vmem:[#allocation11 + $0x10] sm:$0xff]
        %v4582 = vld [vmem:[#allocation11 + $0x18] sm:$0xff]
        %v4583 = vld [vmem:[#allocation11 + $0x20] sm:$0xff]
        %v4584 = vld [vmem:[#allocation11 + $0x28] sm:$0xff]
        %v4585 = vld [vmem:[#allocation11 + $0x30] sm:$0xff]
        %v4586 = vld [vmem:[#allocation11 + $0x38] sm:$0xff]
        %v4587 = vld [vmem:[#allocation11 + $0x40] sm:$0xff]
        %v4588 = vld [vmem:[#allocation11 + $0x48] sm:$0xff]
        %v4589 = vld [vmem:[#allocation11 + $0x50] sm:$0xff]
        %v4590 = vld [vmem:[#allocation11 + $0x58] sm:$0xff]
        %v4591 = vld [vmem:[#allocation11 + $0x60] sm:$0xff]
        %v4592 = vld [vmem:[#allocation11 + $0x68] sm:$0xff]
        %v4593 = vld [vmem:[#allocation11 + $0x70] sm:$0xff]
        %v4594 = vld [vmem:[#allocation11 + $0x78] sm:$0xff]
        %v4595 = vld [vmem:[#allocation11 + $0x80] sm:$0xff]
        %v4596 = vld [vmem:[#allocation11 + $0x88] sm:$0xff]
        %v4597 = vld [vmem:[#allocation11 + $0x90] sm:$0xff]
        %v4598 = vld [vmem:[#allocation11 + $0x98] sm:$0xff]
        %v4599 = vld [vmem:[#allocation11 + $0xa0] sm:$0xff]
        %v4600 = vld [vmem:[#allocation11 + $0xa8] sm:$0xff]
        %v4601 = vld [vmem:[#allocation11 + $0xb0] sm:$0xff]
        %v4602 = vld [vmem:[#allocation11 + $0xb8] sm:$0xff]
        %v4603 = vld [vmem:[#allocation11 + $0xc0] sm:$0xff]
        %v4604 = vld [vmem:[#allocation11 + $0xc8] sm:$0xff]
        %v4605 = vld [vmem:[#allocation11 + $0xd0] sm:$0xff]
        %v4606 = vld [vmem:[#allocation11 + $0xd8] sm:$0xff]
        %v4607 = vld [vmem:[#allocation11 + $0xe0] sm:$0xff]
        %v4608 = vld [vmem:[#allocation11 + $0xe8] sm:$0xff]
        %v4609 = vld [vmem:[#allocation11 + $0xf0] sm:$0xff]
        %v4610 = vld [vmem:[#allocation11 + $0xf8] sm:$0xff]
        %v4611 = vld [vmem:[%s9] sm:$0xf]
        %v4613 = vperm.slane %v4611, 0
        %v4614 = vperm.slane %v4611, 1
        %v4615 = vperm.slane %v4611, 2
        %v4616 = vperm.slane %v4611, 3
        %v4653 = vunpack.c.l.b16 %v4579
        %v4654 = vunpack.c.h.b16 %v4579
        %v4655 = vunpack.c.l.b16 %v4580
        %v4656 = vunpack.c.h.b16 %v4580
        %v4657 = vunpack.c.l.b16 %v4581
        %v4658 = vunpack.c.h.b16 %v4581
        %v4659 = vunpack.c.l.b16 %v4582
        %v4660 = vunpack.c.h.b16 %v4582
        %v4661 = vunpack.c.l.b16 %v4583
        %v4662 = vunpack.c.h.b16 %v4583
        %v4663 = vunpack.c.l.b16 %v4584
        %v4664 = vunpack.c.h.b16 %v4584
        %v4665 = vunpack.c.l.b16 %v4585
        %v4666 = vunpack.c.h.b16 %v4585
        %v4667 = vunpack.c.l.b16 %v4586
        %v4668 = vunpack.c.h.b16 %v4586
        %v4669 = vunpack.c.l.b16 %v4587
        %v4670 = vunpack.c.h.b16 %v4587
        %v4671 = vunpack.c.l.b16 %v4588
        %v4672 = vunpack.c.h.b16 %v4588
        %v4673 = vunpack.c.l.b16 %v4589
        %v4674 = vunpack.c.h.b16 %v4589
        %v4675 = vunpack.c.l.b16 %v4590
        %v4676 = vunpack.c.h.b16 %v4590
        %v4677 = vunpack.c.l.b16 %v4591
        %v4678 = vunpack.c.h.b16 %v4591
        %v4679 = vunpack.c.l.b16 %v4592
        %v4680 = vunpack.c.h.b16 %v4592
        %v4681 = vunpack.c.l.b16 %v4593
        %v4682 = vunpack.c.h.b16 %v4593
        %v4683 = vunpack.c.l.b16 %v4594
        %v4684 = vunpack.c.h.b16 %v4594
        %v4685 = vunpack.c.l.b16 %v4595
        %v4686 = vunpack.c.h.b16 %v4595
        %v4687 = vunpack.c.l.b16 %v4596
        %v4688 = vunpack.c.h.b16 %v4596
        %v4689 = vunpack.c.l.b16 %v4597
        %v4690 = vunpack.c.h.b16 %v4597
        %v4691 = vunpack.c.l.b16 %v4598
        %v4692 = vunpack.c.h.b16 %v4598
        %v4693 = vunpack.c.l.b16 %v4599
        %v4694 = vunpack.c.h.b16 %v4599
        %v4695 = vunpack.c.l.b16 %v4600
        %v4696 = vunpack.c.h.b16 %v4600
        %v4697 = vunpack.c.l.b16 %v4601
        %v4698 = vunpack.c.h.b16 %v4601
        %v4699 = vunpack.c.l.b16 %v4602
        %v4700 = vunpack.c.h.b16 %v4602
        %v4701 = vunpack.c.l.b16 %v4603
        %v4702 = vunpack.c.h.b16 %v4603
        %v4703 = vunpack.c.l.b16 %v4604
        %v4704 = vunpack.c.h.b16 %v4604
        %v4705 = vunpack.c.l.b16 %v4605
        %v4706 = vunpack.c.h.b16 %v4605
        %v4707 = vunpack.c.l.b16 %v4606
        %v4708 = vunpack.c.h.b16 %v4606
        %v4709 = vunpack.c.l.b16 %v4607
        %v4710 = vunpack.c.h.b16 %v4607
        %v4711 = vunpack.c.l.b16 %v4608
        %v4712 = vunpack.c.h.b16 %v4608
        %v4713 = vunpack.c.l.b16 %v4609
        %v4714 = vunpack.c.h.b16 %v4609
        %v4715 = vunpack.c.l.b16 %v4610
        %v4716 = vunpack.c.h.b16 %v4610
        %v4717 = vpack.c.b16 %v4657, %v4653
        %v4718 = vpack.c.b16 %v4658, %v4654
        %v4719 = vpack.c.b16 %v4659, %v4655
        %v4720 = vpack.c.b16 %v4660, %v4656
        %v4721 = vpack.c.b16 %v4665, %v4661
        %v4722 = vpack.c.b16 %v4666, %v4662
        %v4723 = vpack.c.b16 %v4667, %v4663
        %v4724 = vpack.c.b16 %v4668, %v4664
        %v4725 = vpack.c.b16 %v4673, %v4669
        %v4726 = vpack.c.b16 %v4674, %v4670
        %v4727 = vpack.c.b16 %v4675, %v4671
        %v4728 = vpack.c.b16 %v4676, %v4672
        %v4729 = vpack.c.b16 %v4681, %v4677
        %v4730 = vpack.c.b16 %v4682, %v4678
        %v4731 = vpack.c.b16 %v4683, %v4679
        %v4732 = vpack.c.b16 %v4684, %v4680
        %v4733 = vpack.c.b16 %v4689, %v4685
        %v4734 = vpack.c.b16 %v4690, %v4686
        %v4735 = vpack.c.b16 %v4691, %v4687
        %v4736 = vpack.c.b16 %v4692, %v4688
        %v4737 = vpack.c.b16 %v4697, %v4693
        %v4738 = vpack.c.b16 %v4698, %v4694
        %v4739 = vpack.c.b16 %v4699, %v4695
        %v4740 = vpack.c.b16 %v4700, %v4696
        %v4741 = vpack.c.b16 %v4705, %v4701
        %v4742 = vpack.c.b16 %v4706, %v4702
        %v4743 = vpack.c.b16 %v4707, %v4703
        %v4744 = vpack.c.b16 %v4708, %v4704
        %v4745 = vpack.c.b16 %v4713, %v4709
        %v4746 = vpack.c.b16 %v4714, %v4710
        %v4747 = vpack.c.b16 %v4715, %v4711
        %v4748 = vpack.c.b16 %v4716, %v4712
        %4781 = vmatpush.bf16.msra.mxu0 %v4745
        %4782 = vmatpush.bf16.msra.mxu0 %v4741
        %4783 = vmatpush.bf16.msra.mxu0 %v4737
        %4784 = vmatpush.bf16.msra.mxu0 %v4733
        %4785 = vmatpush.bf16.msra.mxu0 %v4729
        %4786 = vmatpush.bf16.msra.mxu0 %v4725
        %4787 = vmatpush.bf16.msra.mxu0 %v4721
        %4788 = vmatpush.bf16.msra.mxu0 %v4717
        %4789 = vmatmul.bf16.gmra.mxu0 %v4571
        %v4790 = vpop.f32.mrf.mxu0
        %v4791 = vadd.f32 %v4613, %v4790
        %v4792 = vpop.f32.mrf.mxu0
        %v4793 = vadd.f32 %v4613, %v4792
        %4794 = vmatmul.bf16.gmra.mxu0 %v4572
        %v4795 = vpop.f32.mrf.mxu0
        %v4796 = vadd.f32 %v4613, %v4795
        %v4797 = vpop.f32.mrf.mxu0
        %v4798 = vadd.f32 %v4613, %v4797
        %4799 = vmatmul.bf16.gmra.mxu0 %v4573
        %v4800 = vpop.f32.mrf.mxu0
        %v4801 = vadd.f32 %v4613, %v4800
        %v4802 = vpop.f32.mrf.mxu0
        %v4803 = vadd.f32 %v4613, %v4802
        %4804 = vmatmul.bf16.gmra.mxu0 %v4574
        %v4805 = vpop.f32.mrf.mxu0
        %v4806 = vadd.f32 %v4613, %v4805
        %v4807 = vpop.f32.mrf.mxu0
        %v4808 = vadd.f32 %v4613, %v4807
        %4809 = vmatmul.bf16.gmra.mxu0 %v4575
        %v4810 = vpop.f32.mrf.mxu0
        %v4811 = vadd.f32 %v4613, %v4810
        %v4812 = vpop.f32.mrf.mxu0
        %v4813 = vadd.f32 %v4613, %v4812
        %4814 = vmatmul.bf16.gmra.mxu0 %v4576
        %v4815 = vpop.f32.mrf.mxu0
        %v4816 = vadd.f32 %v4613, %v4815
        %v4817 = vpop.f32.mrf.mxu0
        %v4818 = vadd.f32 %v4613, %v4817
        %4819 = vmatmul.bf16.gmra.mxu0 %v4577
        %v4820 = vpop.f32.mrf.mxu0
        %v4821 = vadd.f32 %v4613, %v4820
        %v4822 = vpop.f32.mrf.mxu0
        %v4823 = vadd.f32 %v4613, %v4822
        %4824 = vmatmul.bf16.gmra.mxu0 %v4578
        %v4825 = vpop.f32.mrf.mxu0
        %v4826 = vadd.f32 %v4613, %v4825
        %v4827 = vpop.f32.mrf.mxu0
        %v4828 = vadd.f32 %v4613, %v4827
        %4829 = vdwg.mxu0
        %4830 = vmatpush.bf16.msra.mxu0 %v4746
        %4831 = vmatpush.bf16.msra.mxu0 %v4742
        %4832 = vmatpush.bf16.msra.mxu0 %v4738
        %4833 = vmatpush.bf16.msra.mxu0 %v4734
        %4834 = vmatpush.bf16.msra.mxu0 %v4730
        %4835 = vmatpush.bf16.msra.mxu0 %v4726
        %4836 = vmatpush.bf16.msra.mxu0 %v4722
        %4837 = vmatpush.bf16.msra.mxu0 %v4718
        %4838 = vmatmul.bf16.gmra.mxu0 %v4571
        %v4839 = vpop.f32.mrf.mxu0
        %v4840 = vadd.f32 %v4614, %v4839
        %v4841 = vpop.f32.mrf.mxu0
        %v4842 = vadd.f32 %v4614, %v4841
        %4843 = vmatmul.bf16.gmra.mxu0 %v4572
        %v4844 = vpop.f32.mrf.mxu0
        %v4845 = vadd.f32 %v4614, %v4844
        %v4846 = vpop.f32.mrf.mxu0
        %v4847 = vadd.f32 %v4614, %v4846
        %4848 = vmatmul.bf16.gmra.mxu0 %v4573
        %v4849 = vpop.f32.mrf.mxu0
        %v4850 = vadd.f32 %v4614, %v4849
        %v4851 = vpop.f32.mrf.mxu0
        %v4852 = vadd.f32 %v4614, %v4851
        %4853 = vmatmul.bf16.gmra.mxu0 %v4574
        %v4854 = vpop.f32.mrf.mxu0
        %v4855 = vadd.f32 %v4614, %v4854
        %v4856 = vpop.f32.mrf.mxu0
        %v4857 = vadd.f32 %v4614, %v4856
        %4858 = vmatmul.bf16.gmra.mxu0 %v4575
        %v4859 = vpop.f32.mrf.mxu0
        %v4860 = vadd.f32 %v4614, %v4859
        %v4861 = vpop.f32.mrf.mxu0
        %v4862 = vadd.f32 %v4614, %v4861
        %4863 = vmatmul.bf16.gmra.mxu0 %v4576
        %v4864 = vpop.f32.mrf.mxu0
        %v4865 = vadd.f32 %v4614, %v4864
        %v4866 = vpop.f32.mrf.mxu0
        %v4867 = vadd.f32 %v4614, %v4866
        %4868 = vmatmul.bf16.gmra.mxu0 %v4577
        %v4869 = vpop.f32.mrf.mxu0
        %v4870 = vadd.f32 %v4614, %v4869
        %v4871 = vpop.f32.mrf.mxu0
        %v4872 = vadd.f32 %v4614, %v4871
        %4873 = vmatmul.bf16.gmra.mxu0 %v4578
        %v4874 = vpop.f32.mrf.mxu0
        %v4875 = vadd.f32 %v4614, %v4874
        %v4876 = vpop.f32.mrf.mxu0
        %v4877 = vadd.f32 %v4614, %v4876
        %4878 = vdwg.mxu0
        %4879 = vmatpush.bf16.msra.mxu0 %v4747
        %4880 = vmatpush.bf16.msra.mxu0 %v4743
        %4881 = vmatpush.bf16.msra.mxu0 %v4739
        %4882 = vmatpush.bf16.msra.mxu0 %v4735
        %4883 = vmatpush.bf16.msra.mxu0 %v4731
        %4884 = vmatpush.bf16.msra.mxu0 %v4727
        %4885 = vmatpush.bf16.msra.mxu0 %v4723
        %4886 = vmatpush.bf16.msra.mxu0 %v4719
        %4887 = vmatmul.bf16.gmra.mxu0 %v4571
        %v4888 = vpop.f32.mrf.mxu0
        %v4889 = vadd.f32 %v4615, %v4888
        %v4890 = vpop.f32.mrf.mxu0
        %v4891 = vadd.f32 %v4615, %v4890
        %4892 = vmatmul.bf16.gmra.mxu0 %v4572
        %v4893 = vpop.f32.mrf.mxu0
        %v4894 = vadd.f32 %v4615, %v4893
        %v4895 = vpop.f32.mrf.mxu0
        %v4896 = vadd.f32 %v4615, %v4895
        %4897 = vmatmul.bf16.gmra.mxu0 %v4573
        %v4898 = vpop.f32.mrf.mxu0
        %v4899 = vadd.f32 %v4615, %v4898
        %v4900 = vpop.f32.mrf.mxu0
        %v4901 = vadd.f32 %v4615, %v4900
        %4902 = vmatmul.bf16.gmra.mxu0 %v4574
        %v4903 = vpop.f32.mrf.mxu0
        %v4904 = vadd.f32 %v4615, %v4903
        %v4905 = vpop.f32.mrf.mxu0
        %v4906 = vadd.f32 %v4615, %v4905
        %4907 = vmatmul.bf16.gmra.mxu0 %v4575
        %v4908 = vpop.f32.mrf.mxu0
        %v4909 = vadd.f32 %v4615, %v4908
        %v4910 = vpop.f32.mrf.mxu0
        %v4911 = vadd.f32 %v4615, %v4910
        %4912 = vmatmul.bf16.gmra.mxu0 %v4576
        %v4913 = vpop.f32.mrf.mxu0
        %v4914 = vadd.f32 %v4615, %v4913
        %v4915 = vpop.f32.mrf.mxu0
        %v4916 = vadd.f32 %v4615, %v4915
        %4917 = vmatmul.bf16.gmra.mxu0 %v4577
        %v4918 = vpop.f32.mrf.mxu0
        %v4919 = vadd.f32 %v4615, %v4918
        %v4920 = vpop.f32.mrf.mxu0
        %v4921 = vadd.f32 %v4615, %v4920
        %4922 = vmatmul.bf16.gmra.mxu0 %v4578
        %v4923 = vpop.f32.mrf.mxu0
        %v4924 = vadd.f32 %v4615, %v4923
        %v4925 = vpop.f32.mrf.mxu0
        %v4926 = vadd.f32 %v4615, %v4925
        %4927 = vdwg.mxu0
        %4928 = vmatpush.bf16.msra.mxu0 %v4748
        %4929 = vmatpush.bf16.msra.mxu0 %v4744
        %4930 = vmatpush.bf16.msra.mxu0 %v4740
        %4931 = vmatpush.bf16.msra.mxu0 %v4736
        %4932 = vmatpush.bf16.msra.mxu0 %v4732
        %4933 = vmatpush.bf16.msra.mxu0 %v4728
        %4934 = vmatpush.bf16.msra.mxu0 %v4724
        %4935 = vmatpush.bf16.msra.mxu0 %v4720
        %4936 = vmatmul.bf16.gmra.mxu0 %v4571
        %v4937 = vpop.f32.mrf.mxu0
        %v4938 = vadd.f32 %v4616, %v4937
        %v4939 = vpop.f32.mrf.mxu0
        %v4940 = vadd.f32 %v4616, %v4939
        %4941 = vmatmul.bf16.gmra.mxu0 %v4572
        %v4942 = vpop.f32.mrf.mxu0
        %v4943 = vadd.f32 %v4616, %v4942
        %v4944 = vpop.f32.mrf.mxu0
        %v4945 = vadd.f32 %v4616, %v4944
        %4946 = vmatmul.bf16.gmra.mxu0 %v4573
        %v4947 = vpop.f32.mrf.mxu0
        %v4948 = vadd.f32 %v4616, %v4947
        %v4949 = vpop.f32.mrf.mxu0
        %v4950 = vadd.f32 %v4616, %v4949
        %4951 = vmatmul.bf16.gmra.mxu0 %v4574
        %v4952 = vpop.f32.mrf.mxu0
        %v4953 = vadd.f32 %v4616, %v4952
        %v4954 = vpop.f32.mrf.mxu0
        %v4955 = vadd.f32 %v4616, %v4954
        %4956 = vmatmul.bf16.gmra.mxu0 %v4575
        %v4957 = vpop.f32.mrf.mxu0
        %v4958 = vadd.f32 %v4616, %v4957
        %v4959 = vpop.f32.mrf.mxu0
        %v4960 = vadd.f32 %v4616, %v4959
        %4961 = vmatmul.bf16.gmra.mxu0 %v4576
        %v4962 = vpop.f32.mrf.mxu0
        %v4963 = vadd.f32 %v4616, %v4962
        %v4964 = vpop.f32.mrf.mxu0
        %v4965 = vadd.f32 %v4616, %v4964
        %4966 = vmatmul.bf16.gmra.mxu0 %v4577
        %v4967 = vpop.f32.mrf.mxu0
        %v4968 = vadd.f32 %v4616, %v4967
        %v4969 = vpop.f32.mrf.mxu0
        %v4970 = vadd.f32 %v4616, %v4969
        %4971 = vmatmul.bf16.gmra.mxu0 %v4578
        %v4972 = vpop.f32.mrf.mxu0
        %v4973 = vadd.f32 %v4616, %v4972
        %v4974 = vpop.f32.mrf.mxu0
        %v4975 = vadd.f32 %v4616, %v4974
        %4976 = vdwg.mxu0
        %v4977 = vmul.f32 %v4791, %v4791
        %v4978 = vmul.f32 %v4840, %v4840
        %v4979 = vmul.f32 %v4889, %v4889
        %v4980 = vmul.f32 %v4938, %v4938
        %v4981 = vmul.f32 %v4793, %v4793
        %v4982 = vmul.f32 %v4842, %v4842
        %v4983 = vmul.f32 %v4891, %v4891
        %v4984 = vmul.f32 %v4940, %v4940
        %v4985 = vmul.f32 %v4796, %v4796
        %v4986 = vmul.f32 %v4845, %v4845
        %v4987 = vmul.f32 %v4894, %v4894
        %v4988 = vmul.f32 %v4943, %v4943
        %v4989 = vmul.f32 %v4798, %v4798
        %v4990 = vmul.f32 %v4847, %v4847
        %v4991 = vmul.f32 %v4896, %v4896
        %v4992 = vmul.f32 %v4945, %v4945
        %v4993 = vmul.f32 %v4801, %v4801
        %v4994 = vmul.f32 %v4850, %v4850
        %v4995 = vmul.f32 %v4899, %v4899
        %v4996 = vmul.f32 %v4948, %v4948
        %v4997 = vmul.f32 %v4803, %v4803
        %v4998 = vmul.f32 %v4852, %v4852
        %v4999 = vmul.f32 %v4901, %v4901
        %v5000 = vmul.f32 %v4950, %v4950
        %v5001 = vmul.f32 %v4806, %v4806
        %v5002 = vmul.f32 %v4855, %v4855
        %v5003 = vmul.f32 %v4904, %v4904
        %v5004 = vmul.f32 %v4953, %v4953
        %v5005 = vmul.f32 %v4808, %v4808
        %v5006 = vmul.f32 %v4857, %v4857
        %v5007 = vmul.f32 %v4906, %v4906
        %v5008 = vmul.f32 %v4955, %v4955
        %v5009 = vmul.f32 %v4811, %v4811
        %v5010 = vmul.f32 %v4860, %v4860
        %v5011 = vmul.f32 %v4909, %v4909
        %v5012 = vmul.f32 %v4958, %v4958
        %v5013 = vmul.f32 %v4813, %v4813
        %v5014 = vmul.f32 %v4862, %v4862
        %v5015 = vmul.f32 %v4911, %v4911
        %v5016 = vmul.f32 %v4960, %v4960
        %v5017 = vmul.f32 %v4816, %v4816
        %v5018 = vmul.f32 %v4865, %v4865
        %v5019 = vmul.f32 %v4914, %v4914
        %v5020 = vmul.f32 %v4963, %v4963
        %v5021 = vmul.f32 %v4818, %v4818
        %v5022 = vmul.f32 %v4867, %v4867
        %v5023 = vmul.f32 %v4916, %v4916
        %v5024 = vmul.f32 %v4965, %v4965
        %v5025 = vmul.f32 %v4821, %v4821
        %v5026 = vmul.f32 %v4870, %v4870
        %v5027 = vmul.f32 %v4919, %v4919
        %v5028 = vmul.f32 %v4968, %v4968
        %v5029 = vmul.f32 %v4823, %v4823
        %v5030 = vmul.f32 %v4872, %v4872
        %v5031 = vmul.f32 %v4921, %v4921
        %v5032 = vmul.f32 %v4970, %v4970
        %v5033 = vmul.f32 %v4826, %v4826
        %v5034 = vmul.f32 %v4875, %v4875
        %v5035 = vmul.f32 %v4924, %v4924
        %v5036 = vmul.f32 %v4973, %v4973
        %v5037 = vmul.f32 %v4828, %v4828
        %v5038 = vmul.f32 %v4877, %v4877
        %v5039 = vmul.f32 %v4926, %v4926
        %v5040 = vmul.f32 %v4975, %v4975
        %v5041 = vmul.f32 %v4791, %v4977
        %v5042 = vmul.f32 %v4840, %v4978
        %v5043 = vmul.f32 %v4889, %v4979
        %v5044 = vmul.f32 %v4938, %v4980
        %v5045 = vmul.f32 %v4793, %v4981
        %v5046 = vmul.f32 %v4842, %v4982
        %v5047 = vmul.f32 %v4891, %v4983
        %v5048 = vmul.f32 %v4940, %v4984
        %v5049 = vmul.f32 %v4796, %v4985
        %v5050 = vmul.f32 %v4845, %v4986
        %v5051 = vmul.f32 %v4894, %v4987
        %v5052 = vmul.f32 %v4943, %v4988
        %v5053 = vmul.f32 %v4798, %v4989
        %v5054 = vmul.f32 %v4847, %v4990
        %v5055 = vmul.f32 %v4896, %v4991
        %v5056 = vmul.f32 %v4945, %v4992
        %v5057 = vmul.f32 %v4801, %v4993
        %v5058 = vmul.f32 %v4850, %v4994
        %v5059 = vmul.f32 %v4899, %v4995
        %v5060 = vmul.f32 %v4948, %v4996
        %v5061 = vmul.f32 %v4803, %v4997
        %v5062 = vmul.f32 %v4852, %v4998
        %v5063 = vmul.f32 %v4901, %v4999
        %v5064 = vmul.f32 %v4950, %v5000
        %v5065 = vmul.f32 %v4806, %v5001
        %v5066 = vmul.f32 %v4855, %v5002
        %v5067 = vmul.f32 %v4904, %v5003
        %v5068 = vmul.f32 %v4953, %v5004
        %v5069 = vmul.f32 %v4808, %v5005
        %v5070 = vmul.f32 %v4857, %v5006
        %v5071 = vmul.f32 %v4906, %v5007
        %v5072 = vmul.f32 %v4955, %v5008
        %v5073 = vmul.f32 %v4811, %v5009
        %v5074 = vmul.f32 %v4860, %v5010
        %v5075 = vmul.f32 %v4909, %v5011
        %v5076 = vmul.f32 %v4958, %v5012
        %v5077 = vmul.f32 %v4813, %v5013
        %v5078 = vmul.f32 %v4862, %v5014
        %v5079 = vmul.f32 %v4911, %v5015
        %v5080 = vmul.f32 %v4960, %v5016
        %v5081 = vmul.f32 %v4816, %v5017
        %v5082 = vmul.f32 %v4865, %v5018
        %v5083 = vmul.f32 %v4914, %v5019
        %v5084 = vmul.f32 %v4963, %v5020
        %v5085 = vmul.f32 %v4818, %v5021
        %v5086 = vmul.f32 %v4867, %v5022
        %v5087 = vmul.f32 %v4916, %v5023
        %v5088 = vmul.f32 %v4965, %v5024
        %v5089 = vmul.f32 %v4821, %v5025
        %v5090 = vmul.f32 %v4870, %v5026
        %v5091 = vmul.f32 %v4919, %v5027
        %v5092 = vmul.f32 %v4968, %v5028
        %v5093 = vmul.f32 %v4823, %v5029
        %v5094 = vmul.f32 %v4872, %v5030
        %v5095 = vmul.f32 %v4921, %v5031
        %v5096 = vmul.f32 %v4970, %v5032
        %v5097 = vmul.f32 %v4826, %v5033
        %v5098 = vmul.f32 %v4875, %v5034
        %v5099 = vmul.f32 %v4924, %v5035
        %v5100 = vmul.f32 %v4973, %v5036
        %v5101 = vmul.f32 %v4828, %v5037
        %v5102 = vmul.f32 %v4877, %v5038
        %v5103 = vmul.f32 %v4926, %v5039
        %v5104 = vmul.f32 %v4975, %v5040
        %v5105 = vmul.f32 %v5041, 0.044715
        %v5106 = vmul.f32 %v5042, 0.044715
        %v5107 = vmul.f32 %v5043, 0.044715
        %v5108 = vmul.f32 %v5044, 0.044715
        %v5109 = vmul.f32 %v5045, 0.044715
        %v5110 = vmul.f32 %v5046, 0.044715
        %v5111 = vmul.f32 %v5047, 0.044715
        %v5112 = vmul.f32 %v5048, 0.044715
        %v5113 = vmul.f32 %v5049, 0.044715
        %v5114 = vmul.f32 %v5050, 0.044715
        %v5115 = vmul.f32 %v5051, 0.044715
        %v5116 = vmul.f32 %v5052, 0.044715
        %v5117 = vmul.f32 %v5053, 0.044715
        %v5118 = vmul.f32 %v5054, 0.044715
        %v5119 = vmul.f32 %v5055, 0.044715
        %v5120 = vmul.f32 %v5056, 0.044715
        %v5121 = vmul.f32 %v5057, 0.044715
        %v5122 = vmul.f32 %v5058, 0.044715
        %v5123 = vmul.f32 %v5059, 0.044715
        %v5124 = vmul.f32 %v5060, 0.044715
        %v5125 = vmul.f32 %v5061, 0.044715
        %v5126 = vmul.f32 %v5062, 0.044715
        %v5127 = vmul.f32 %v5063, 0.044715
        %v5128 = vmul.f32 %v5064, 0.044715
        %v5129 = vmul.f32 %v5065, 0.044715
        %v5130 = vmul.f32 %v5066, 0.044715
        %v5131 = vmul.f32 %v5067, 0.044715
        %v5132 = vmul.f32 %v5068, 0.044715
        %v5133 = vmul.f32 %v5069, 0.044715
        %v5134 = vmul.f32 %v5070, 0.044715
        %v5135 = vmul.f32 %v5071, 0.044715
        %v5136 = vmul.f32 %v5072, 0.044715
        %v5137 = vmul.f32 %v5073, 0.044715
        %v5138 = vmul.f32 %v5074, 0.044715
        %v5139 = vmul.f32 %v5075, 0.044715
        %v5140 = vmul.f32 %v5076, 0.044715
        %v5141 = vmul.f32 %v5077, 0.044715
        %v5142 = vmul.f32 %v5078, 0.044715
        %v5143 = vmul.f32 %v5079, 0.044715
        %v5144 = vmul.f32 %v5080, 0.044715
        %v5145 = vmul.f32 %v5081, 0.044715
        %v5146 = vmul.f32 %v5082, 0.044715
        %v5147 = vmul.f32 %v5083, 0.044715
        %v5148 = vmul.f32 %v5084, 0.044715
        %v5149 = vmul.f32 %v5085, 0.044715
        %v5150 = vmul.f32 %v5086, 0.044715
        %v5151 = vmul.f32 %v5087, 0.044715
        %v5152 = vmul.f32 %v5088, 0.044715
        %v5153 = vmul.f32 %v5089, 0.044715
        %v5154 = vmul.f32 %v5090, 0.044715
        %v5155 = vmul.f32 %v5091, 0.044715
        %v5156 = vmul.f32 %v5092, 0.044715
        %v5157 = vmul.f32 %v5093, 0.044715
        %v5158 = vmul.f32 %v5094, 0.044715
        %v5159 = vmul.f32 %v5095, 0.044715
        %v5160 = vmul.f32 %v5096, 0.044715
        %v5161 = vmul.f32 %v5097, 0.044715
        %v5162 = vmul.f32 %v5098, 0.044715
        %v5163 = vmul.f32 %v5099, 0.044715
        %v5164 = vmul.f32 %v5100, 0.044715
        %v5165 = vmul.f32 %v5101, 0.044715
        %v5166 = vmul.f32 %v5102, 0.044715
        %v5167 = vmul.f32 %v5103, 0.044715
        %v5168 = vmul.f32 %v5104, 0.044715
        %v5169 = vadd.f32 %v4791, %v5105
        %v5170 = vadd.f32 %v4840, %v5106
        %v5171 = vadd.f32 %v4889, %v5107
        %v5172 = vadd.f32 %v4938, %v5108
        %v5173 = vadd.f32 %v4793, %v5109
        %v5174 = vadd.f32 %v4842, %v5110
        %v5175 = vadd.f32 %v4891, %v5111
        %v5176 = vadd.f32 %v4940, %v5112
        %v5177 = vadd.f32 %v4796, %v5113
        %v5178 = vadd.f32 %v4845, %v5114
        %v5179 = vadd.f32 %v4894, %v5115
        %v5180 = vadd.f32 %v4943, %v5116
        %v5181 = vadd.f32 %v4798, %v5117
        %v5182 = vadd.f32 %v4847, %v5118
        %v5183 = vadd.f32 %v4896, %v5119
        %v5184 = vadd.f32 %v4945, %v5120
        %v5185 = vadd.f32 %v4801, %v5121
        %v5186 = vadd.f32 %v4850, %v5122
        %v5187 = vadd.f32 %v4899, %v5123
        %v5188 = vadd.f32 %v4948, %v5124
        %v5189 = vadd.f32 %v4803, %v5125
        %v5190 = vadd.f32 %v4852, %v5126
        %v5191 = vadd.f32 %v4901, %v5127
        %v5192 = vadd.f32 %v4950, %v5128
        %v5193 = vadd.f32 %v4806, %v5129
        %v5194 = vadd.f32 %v4855, %v5130
        %v5195 = vadd.f32 %v4904, %v5131
        %v5196 = vadd.f32 %v4953, %v5132
        %v5197 = vadd.f32 %v4808, %v5133
        %v5198 = vadd.f32 %v4857, %v5134
        %v5199 = vadd.f32 %v4906, %v5135
        %v5200 = vadd.f32 %v4955, %v5136
        %v5201 = vadd.f32 %v4811, %v5137
        %v5202 = vadd.f32 %v4860, %v5138
        %v5203 = vadd.f32 %v4909, %v5139
        %v5204 = vadd.f32 %v4958, %v5140
        %v5205 = vadd.f32 %v4813, %v5141
        %v5206 = vadd.f32 %v4862, %v5142
        %v5207 = vadd.f32 %v4911, %v5143
        %v5208 = vadd.f32 %v4960, %v5144
        %v5209 = vadd.f32 %v4816, %v5145
        %v5210 = vadd.f32 %v4865, %v5146
        %v5211 = vadd.f32 %v4914, %v5147
        %v5212 = vadd.f32 %v4963, %v5148
        %v5213 = vadd.f32 %v4818, %v5149
        %v5214 = vadd.f32 %v4867, %v5150
        %v5215 = vadd.f32 %v4916, %v5151
        %v5216 = vadd.f32 %v4965, %v5152
        %v5217 = vadd.f32 %v4821, %v5153
        %v5218 = vadd.f32 %v4870, %v5154
        %v5219 = vadd.f32 %v4919, %v5155
        %v5220 = vadd.f32 %v4968, %v5156
        %v5221 = vadd.f32 %v4823, %v5157
        %v5222 = vadd.f32 %v4872, %v5158
        %v5223 = vadd.f32 %v4921, %v5159
        %v5224 = vadd.f32 %v4970, %v5160
        %v5225 = vadd.f32 %v4826, %v5161
        %v5226 = vadd.f32 %v4875, %v5162
        %v5227 = vadd.f32 %v4924, %v5163
        %v5228 = vadd.f32 %v4973, %v5164
        %v5229 = vadd.f32 %v4828, %v5165
        %v5230 = vadd.f32 %v4877, %v5166
        %v5231 = vadd.f32 %v4926, %v5167
        %v5232 = vadd.f32 %v4975, %v5168
        %v5233 = vmul.f32 %v5169, 0.7978846
        %v5234 = vmul.f32 %v5170, 0.7978846
        %v5235 = vmul.f32 %v5171, 0.7978846
        %v5236 = vmul.f32 %v5172, 0.7978846
        %v5237 = vmul.f32 %v5173, 0.7978846
        %v5238 = vmul.f32 %v5174, 0.7978846
        %v5239 = vmul.f32 %v5175, 0.7978846
        %v5240 = vmul.f32 %v5176, 0.7978846
        %v5241 = vmul.f32 %v5177, 0.7978846
        %v5242 = vmul.f32 %v5178, 0.7978846
        %v5243 = vmul.f32 %v5179, 0.7978846
        %v5244 = vmul.f32 %v5180, 0.7978846
        %v5245 = vmul.f32 %v5181, 0.7978846
        %v5246 = vmul.f32 %v5182, 0.7978846
        %v5247 = vmul.f32 %v5183, 0.7978846
        %v5248 = vmul.f32 %v5184, 0.7978846
        %v5249 = vmul.f32 %v5185, 0.7978846
        %v5250 = vmul.f32 %v5186, 0.7978846
        %v5251 = vmul.f32 %v5187, 0.7978846
        %v5252 = vmul.f32 %v5188, 0.7978846
        %v5253 = vmul.f32 %v5189, 0.7978846
        %v5254 = vmul.f32 %v5190, 0.7978846
        %v5255 = vmul.f32 %v5191, 0.7978846
        %v5256 = vmul.f32 %v5192, 0.7978846
        %v5257 = vmul.f32 %v5193, 0.7978846
        %v5258 = vmul.f32 %v5194, 0.7978846
        %v5259 = vmul.f32 %v5195, 0.7978846
        %v5260 = vmul.f32 %v5196, 0.7978846
        %v5261 = vmul.f32 %v5197, 0.7978846
        %v5262 = vmul.f32 %v5198, 0.7978846
        %v5263 = vmul.f32 %v5199, 0.7978846
        %v5264 = vmul.f32 %v5200, 0.7978846
        %v5265 = vmul.f32 %v5201, 0.7978846
        %v5266 = vmul.f32 %v5202, 0.7978846
        %v5267 = vmul.f32 %v5203, 0.7978846
        %v5268 = vmul.f32 %v5204, 0.7978846
        %v5269 = vmul.f32 %v5205, 0.7978846
        %v5270 = vmul.f32 %v5206, 0.7978846
        %v5271 = vmul.f32 %v5207, 0.7978846
        %v5272 = vmul.f32 %v5208, 0.7978846
        %v5273 = vmul.f32 %v5209, 0.7978846
        %v5274 = vmul.f32 %v5210, 0.7978846
        %v5275 = vmul.f32 %v5211, 0.7978846
        %v5276 = vmul.f32 %v5212, 0.7978846
        %v5277 = vmul.f32 %v5213, 0.7978846
        %v5278 = vmul.f32 %v5214, 0.7978846
        %v5279 = vmul.f32 %v5215, 0.7978846
        %v5280 = vmul.f32 %v5216, 0.7978846
        %v5281 = vmul.f32 %v5217, 0.7978846
        %v5282 = vmul.f32 %v5218, 0.7978846
        %v5283 = vmul.f32 %v5219, 0.7978846
        %v5284 = vmul.f32 %v5220, 0.7978846
        %v5285 = vmul.f32 %v5221, 0.7978846
        %v5286 = vmul.f32 %v5222, 0.7978846
        %v5287 = vmul.f32 %v5223, 0.7978846
        %v5288 = vmul.f32 %v5224, 0.7978846
        %v5289 = vmul.f32 %v5225, 0.7978846
        %v5290 = vmul.f32 %v5226, 0.7978846
        %v5291 = vmul.f32 %v5227, 0.7978846
        %v5292 = vmul.f32 %v5228, 0.7978846
        %v5293 = vmul.f32 %v5229, 0.7978846
        %v5294 = vmul.f32 %v5230, 0.7978846
        %v5295 = vmul.f32 %v5231, 0.7978846
        %v5296 = vmul.f32 %v5232, 0.7978846
        %v5297 = vtanh.pop %v5233
        %v5298 = vtanh.pop %v5234
        %v5299 = vtanh.pop %v5235
        %v5300 = vtanh.pop %v5236
        %v5301 = vtanh.pop %v5237
        %v5302 = vtanh.pop %v5238
        %v5303 = vtanh.pop %v5239
        %v5304 = vtanh.pop %v5240
        %v5305 = vtanh.pop %v5241
        %v5306 = vtanh.pop %v5242
        %v5307 = vtanh.pop %v5243
        %v5308 = vtanh.pop %v5244
        %v5309 = vtanh.pop %v5245
        %v5310 = vtanh.pop %v5246
        %v5311 = vtanh.pop %v5247
        %v5312 = vtanh.pop %v5248
        %v5313 = vtanh.pop %v5249
        %v5314 = vtanh.pop %v5250
        %v5315 = vtanh.pop %v5251
        %v5316 = vtanh.pop %v5252
        %v5317 = vtanh.pop %v5253
        %v5318 = vtanh.pop %v5254
        %v5319 = vtanh.pop %v5255
        %v5320 = vtanh.pop %v5256
        %v5321 = vtanh.pop %v5257
        %v5322 = vtanh.pop %v5258
        %v5323 = vtanh.pop %v5259
        %v5324 = vtanh.pop %v5260
        %v5325 = vtanh.pop %v5261
        %v5326 = vtanh.pop %v5262
        %v5327 = vtanh.pop %v5263
        %v5328 = vtanh.pop %v5264
        %v5329 = vtanh.pop %v5265
        %v5330 = vtanh.pop %v5266
        %v5331 = vtanh.pop %v5267
        %v5332 = vtanh.pop %v5268
        %v5333 = vtanh.pop %v5269
        %v5334 = vtanh.pop %v5270
        %v5335 = vtanh.pop %v5271
        %v5336 = vtanh.pop %v5272
        %v5337 = vtanh.pop %v5273
        %v5338 = vtanh.pop %v5274
        %v5339 = vtanh.pop %v5275
        %v5340 = vtanh.pop %v5276
        %v5341 = vtanh.pop %v5277
        %v5342 = vtanh.pop %v5278
        %v5343 = vtanh.pop %v5279
        %v5344 = vtanh.pop %v5280
        %v5345 = vtanh.pop %v5281
        %v5346 = vtanh.pop %v5282
        %v5347 = vtanh.pop %v5283
        %v5348 = vtanh.pop %v5284
        %v5349 = vtanh.pop %v5285
        %v5350 = vtanh.pop %v5286
        %v5351 = vtanh.pop %v5287
        %v5352 = vtanh.pop %v5288
        %v5353 = vtanh.pop %v5289
        %v5354 = vtanh.pop %v5290
        %v5355 = vtanh.pop %v5291
        %v5356 = vtanh.pop %v5292
        %v5357 = vtanh.pop %v5293
        %v5358 = vtanh.pop %v5294
        %v5359 = vtanh.pop %v5295
        %v5360 = vtanh.pop %v5296
        %v5361 = vadd.f32 %v5297, 1.0
        %v5362 = vadd.f32 %v5298, 1.0
        %v5363 = vadd.f32 %v5299, 1.0
        %v5364 = vadd.f32 %v5300, 1.0
        %v5365 = vadd.f32 %v5301, 1.0
        %v5366 = vadd.f32 %v5302, 1.0
        %v5367 = vadd.f32 %v5303, 1.0
        %v5368 = vadd.f32 %v5304, 1.0
        %v5369 = vadd.f32 %v5305, 1.0
        %v5370 = vadd.f32 %v5306, 1.0
        %v5371 = vadd.f32 %v5307, 1.0
        %v5372 = vadd.f32 %v5308, 1.0
        %v5373 = vadd.f32 %v5309, 1.0
        %v5374 = vadd.f32 %v5310, 1.0
        %v5375 = vadd.f32 %v5311, 1.0
        %v5376 = vadd.f32 %v5312, 1.0
        %v5377 = vadd.f32 %v5313, 1.0
        %v5378 = vadd.f32 %v5314, 1.0
        %v5379 = vadd.f32 %v5315, 1.0
        %v5380 = vadd.f32 %v5316, 1.0
        %v5381 = vadd.f32 %v5317, 1.0
        %v5382 = vadd.f32 %v5318, 1.0
        %v5383 = vadd.f32 %v5319, 1.0
        %v5384 = vadd.f32 %v5320, 1.0
        %v5385 = vadd.f32 %v5321, 1.0
        %v5386 = vadd.f32 %v5322, 1.0
        %v5387 = vadd.f32 %v5323, 1.0
        %v5388 = vadd.f32 %v5324, 1.0
        %v5389 = vadd.f32 %v5325, 1.0
        %v5390 = vadd.f32 %v5326, 1.0
        %v5391 = vadd.f32 %v5327, 1.0
        %v5392 = vadd.f32 %v5328, 1.0
        %v5393 = vadd.f32 %v5329, 1.0
        %v5394 = vadd.f32 %v5330, 1.0
        %v5395 = vadd.f32 %v5331, 1.0
        %v5396 = vadd.f32 %v5332, 1.0
        %v5397 = vadd.f32 %v5333, 1.0
        %v5398 = vadd.f32 %v5334, 1.0
        %v5399 = vadd.f32 %v5335, 1.0
        %v5400 = vadd.f32 %v5336, 1.0
        %v5401 = vadd.f32 %v5337, 1.0
        %v5402 = vadd.f32 %v5338, 1.0
        %v5403 = vadd.f32 %v5339, 1.0
        %v5404 = vadd.f32 %v5340, 1.0
        %v5405 = vadd.f32 %v5341, 1.0
        %v5406 = vadd.f32 %v5342, 1.0
        %v5407 = vadd.f32 %v5343, 1.0
        %v5408 = vadd.f32 %v5344, 1.0
        %v5409 = vadd.f32 %v5345, 1.0
        %v5410 = vadd.f32 %v5346, 1.0
        %v5411 = vadd.f32 %v5347, 1.0
        %v5412 = vadd.f32 %v5348, 1.0
        %v5413 = vadd.f32 %v5349, 1.0
        %v5414 = vadd.f32 %v5350, 1.0
        %v5415 = vadd.f32 %v5351, 1.0
        %v5416 = vadd.f32 %v5352, 1.0
        %v5417 = vadd.f32 %v5353, 1.0
        %v5418 = vadd.f32 %v5354, 1.0
        %v5419 = vadd.f32 %v5355, 1.0
        %v5420 = vadd.f32 %v5356, 1.0
        %v5421 = vadd.f32 %v5357, 1.0
        %v5422 = vadd.f32 %v5358, 1.0
        %v5423 = vadd.f32 %v5359, 1.0
        %v5424 = vadd.f32 %v5360, 1.0
        %v5425 = vmul.f32 %v5361, 0.5
        %v5426 = vmul.f32 %v5362, 0.5
        %v5427 = vmul.f32 %v5363, 0.5
        %v5428 = vmul.f32 %v5364, 0.5
        %v5429 = vmul.f32 %v5365, 0.5
        %v5430 = vmul.f32 %v5366, 0.5
        %v5431 = vmul.f32 %v5367, 0.5
        %v5432 = vmul.f32 %v5368, 0.5
        %v5433 = vmul.f32 %v5369, 0.5
        %v5434 = vmul.f32 %v5370, 0.5
        %v5435 = vmul.f32 %v5371, 0.5
        %v5436 = vmul.f32 %v5372, 0.5
        %v5437 = vmul.f32 %v5373, 0.5
        %v5438 = vmul.f32 %v5374, 0.5
        %v5439 = vmul.f32 %v5375, 0.5
        %v5440 = vmul.f32 %v5376, 0.5
        %v5441 = vmul.f32 %v5377, 0.5
        %v5442 = vmul.f32 %v5378, 0.5
        %v5443 = vmul.f32 %v5379, 0.5
        %v5444 = vmul.f32 %v5380, 0.5
        %v5445 = vmul.f32 %v5381, 0.5
        %v5446 = vmul.f32 %v5382, 0.5
        %v5447 = vmul.f32 %v5383, 0.5
        %v5448 = vmul.f32 %v5384, 0.5
        %v5449 = vmul.f32 %v5385, 0.5
        %v5450 = vmul.f32 %v5386, 0.5
        %v5451 = vmul.f32 %v5387, 0.5
        %v5452 = vmul.f32 %v5388, 0.5
        %v5453 = vmul.f32 %v5389, 0.5
        %v5454 = vmul.f32 %v5390, 0.5
        %v5455 = vmul.f32 %v5391, 0.5
        %v5456 = vmul.f32 %v5392, 0.5
        %v5457 = vmul.f32 %v5393, 0.5
        %v5458 = vmul.f32 %v5394, 0.5
        %v5459 = vmul.f32 %v5395, 0.5
        %v5460 = vmul.f32 %v5396, 0.5
        %v5461 = vmul.f32 %v5397, 0.5
        %v5462 = vmul.f32 %v5398, 0.5
        %v5463 = vmul.f32 %v5399, 0.5
        %v5464 = vmul.f32 %v5400, 0.5
        %v5465 = vmul.f32 %v5401, 0.5
        %v5466 = vmul.f32 %v5402, 0.5
        %v5467 = vmul.f32 %v5403, 0.5
        %v5468 = vmul.f32 %v5404, 0.5
        %v5469 = vmul.f32 %v5405, 0.5
        %v5470 = vmul.f32 %v5406, 0.5
        %v5471 = vmul.f32 %v5407, 0.5
        %v5472 = vmul.f32 %v5408, 0.5
        %v5473 = vmul.f32 %v5409, 0.5
        %v5474 = vmul.f32 %v5410, 0.5
        %v5475 = vmul.f32 %v5411, 0.5
        %v5476 = vmul.f32 %v5412, 0.5
        %v5477 = vmul.f32 %v5413, 0.5
        %v5478 = vmul.f32 %v5414, 0.5
        %v5479 = vmul.f32 %v5415, 0.5
        %v5480 = vmul.f32 %v5416, 0.5
        %v5481 = vmul.f32 %v5417, 0.5
        %v5482 = vmul.f32 %v5418, 0.5
        %v5483 = vmul.f32 %v5419, 0.5
        %v5484 = vmul.f32 %v5420, 0.5
        %v5485 = vmul.f32 %v5421, 0.5
        %v5486 = vmul.f32 %v5422, 0.5
        %v5487 = vmul.f32 %v5423, 0.5
        %v5488 = vmul.f32 %v5424, 0.5
        %v5489 = vmul.f32 %v4791, %v5425
        %v5490 = vmul.f32 %v4840, %v5426
        %v5491 = vmul.f32 %v4889, %v5427
        %v5492 = vmul.f32 %v4938, %v5428
        %v5493 = vmul.f32 %v4793, %v5429
        %v5494 = vmul.f32 %v4842, %v5430
        %v5495 = vmul.f32 %v4891, %v5431
        %v5496 = vmul.f32 %v4940, %v5432
        %v5497 = vmul.f32 %v4796, %v5433
        %v5498 = vmul.f32 %v4845, %v5434
        %v5499 = vmul.f32 %v4894, %v5435
        %v5500 = vmul.f32 %v4943, %v5436
        %v5501 = vmul.f32 %v4798, %v5437
        %v5502 = vmul.f32 %v4847, %v5438
        %v5503 = vmul.f32 %v4896, %v5439
        %v5504 = vmul.f32 %v4945, %v5440
        %v5505 = vmul.f32 %v4801, %v5441
        %v5506 = vmul.f32 %v4850, %v5442
        %v5507 = vmul.f32 %v4899, %v5443
        %v5508 = vmul.f32 %v4948, %v5444
        %v5509 = vmul.f32 %v4803, %v5445
        %v5510 = vmul.f32 %v4852, %v5446
        %v5511 = vmul.f32 %v4901, %v5447
        %v5512 = vmul.f32 %v4950, %v5448
        %v5513 = vmul.f32 %v4806, %v5449
        %v5514 = vmul.f32 %v4855, %v5450
        %v5515 = vmul.f32 %v4904, %v5451
        %v5516 = vmul.f32 %v4953, %v5452
        %v5517 = vmul.f32 %v4808, %v5453
        %v5518 = vmul.f32 %v4857, %v5454
        %v5519 = vmul.f32 %v4906, %v5455
        %v5520 = vmul.f32 %v4955, %v5456
        %v5521 = vmul.f32 %v4811, %v5457
        %v5522 = vmul.f32 %v4860, %v5458
        %v5523 = vmul.f32 %v4909, %v5459
        %v5524 = vmul.f32 %v4958, %v5460
        %v5525 = vmul.f32 %v4813, %v5461
        %v5526 = vmul.f32 %v4862, %v5462
        %v5527 = vmul.f32 %v4911, %v5463
        %v5528 = vmul.f32 %v4960, %v5464
        %v5529 = vmul.f32 %v4816, %v5465
        %v5530 = vmul.f32 %v4865, %v5466
        %v5531 = vmul.f32 %v4914, %v5467
        %v5532 = vmul.f32 %v4963, %v5468
        %v5533 = vmul.f32 %v4818, %v5469
        %v5534 = vmul.f32 %v4867, %v5470
        %v5535 = vmul.f32 %v4916, %v5471
        %v5536 = vmul.f32 %v4965, %v5472
        %v5537 = vmul.f32 %v4821, %v5473
        %v5538 = vmul.f32 %v4870, %v5474
        %v5539 = vmul.f32 %v4919, %v5475
        %v5540 = vmul.f32 %v4968, %v5476
        %v5541 = vmul.f32 %v4823, %v5477
        %v5542 = vmul.f32 %v4872, %v5478
        %v5543 = vmul.f32 %v4921, %v5479
        %v5544 = vmul.f32 %v4970, %v5480
        %v5545 = vmul.f32 %v4826, %v5481
        %v5546 = vmul.f32 %v4875, %v5482
        %v5547 = vmul.f32 %v4924, %v5483
        %v5548 = vmul.f32 %v4973, %v5484
        %v5549 = vmul.f32 %v4828, %v5485
        %v5550 = vmul.f32 %v4877, %v5486
        %v5551 = vmul.f32 %v4926, %v5487
        %v5552 = vmul.f32 %v4975, %v5488
        %v5553 = vpack.c.bf16 %v5493, %v5489
        %v5554 = vpack.c.bf16 %v5494, %v5490
        %v5555 = vpack.c.bf16 %v5495, %v5491
        %v5556 = vpack.c.bf16 %v5496, %v5492
        %v5557 = vpack.c.bf16 %v5501, %v5497
        %v5558 = vpack.c.bf16 %v5502, %v5498
        %v5559 = vpack.c.bf16 %v5503, %v5499
        %v5560 = vpack.c.bf16 %v5504, %v5500
        %v5561 = vpack.c.bf16 %v5509, %v5505
        %v5562 = vpack.c.bf16 %v5510, %v5506
        %v5563 = vpack.c.bf16 %v5511, %v5507
        %v5564 = vpack.c.bf16 %v5512, %v5508
        %v5565 = vpack.c.bf16 %v5517, %v5513
        %v5566 = vpack.c.bf16 %v5518, %v5514
        %v5567 = vpack.c.bf16 %v5519, %v5515
        %v5568 = vpack.c.bf16 %v5520, %v5516
        %v5569 = vpack.c.bf16 %v5525, %v5521
        %v5570 = vpack.c.bf16 %v5526, %v5522
        %v5571 = vpack.c.bf16 %v5527, %v5523
        %v5572 = vpack.c.bf16 %v5528, %v5524
        %v5573 = vpack.c.bf16 %v5533, %v5529
        %v5574 = vpack.c.bf16 %v5534, %v5530
        %v5575 = vpack.c.bf16 %v5535, %v5531
        %v5576 = vpack.c.bf16 %v5536, %v5532
        %v5577 = vpack.c.bf16 %v5541, %v5537
        %v5578 = vpack.c.bf16 %v5542, %v5538
        %v5579 = vpack.c.bf16 %v5543, %v5539
        %v5580 = vpack.c.bf16 %v5544, %v5540
        %v5581 = vpack.c.bf16 %v5549, %v5545
        %v5582 = vpack.c.bf16 %v5550, %v5546
        %v5583 = vpack.c.bf16 %v5551, %v5547
        %v5584 = vpack.c.bf16 %v5552, %v5548
        %v5585 = vld [vmem:[#allocation13] sm:$0xf]
        %v5586 = vld [vmem:[#allocation13 + $0x4] sm:$0xf]
        %v5587 = vld [vmem:[#allocation13 + $0x8] sm:$0xf]
        %v5588 = vld [vmem:[#allocation13 + $0xc] sm:$0xf]
        %v5589 = vld [vmem:[#allocation13 + $0x10] sm:$0xf]
        %v5590 = vld [vmem:[#allocation13 + $0x14] sm:$0xf]
        %v5591 = vld [vmem:[#allocation13 + $0x18] sm:$0xf]
        %v5592 = vld [vmem:[#allocation13 + $0x1c] sm:$0xf]
        %v5593 = vld [vmem:[#allocation13 + $0x20] sm:$0xf]
        %v5594 = vld [vmem:[#allocation13 + $0x24] sm:$0xf]
        %v5595 = vld [vmem:[#allocation13 + $0x28] sm:$0xf]
        %v5596 = vld [vmem:[#allocation13 + $0x2c] sm:$0xf]
        %v5597 = vld [vmem:[#allocation13 + $0x30] sm:$0xf]
        %v5598 = vld [vmem:[#allocation13 + $0x34] sm:$0xf]
        %v5599 = vld [vmem:[#allocation13 + $0x38] sm:$0xf]
        %v5600 = vld [vmem:[#allocation13 + $0x3c] sm:$0xf]
        %v5601 = vld [vmem:[#allocation13 + $0x40] sm:$0xf]
        %v5602 = vld [vmem:[#allocation13 + $0x44] sm:$0xf]
        %v5603 = vld [vmem:[#allocation13 + $0x48] sm:$0xf]
        %v5604 = vld [vmem:[#allocation13 + $0x4c] sm:$0xf]
        %v5605 = vld [vmem:[#allocation13 + $0x50] sm:$0xf]
        %v5606 = vld [vmem:[#allocation13 + $0x54] sm:$0xf]
        %v5607 = vld [vmem:[#allocation13 + $0x58] sm:$0xf]
        %v5608 = vld [vmem:[#allocation13 + $0x5c] sm:$0xf]
        %v5609 = vld [vmem:[#allocation13 + $0x60] sm:$0xf]
        %v5610 = vld [vmem:[#allocation13 + $0x64] sm:$0xf]
        %v5611 = vld [vmem:[#allocation13 + $0x68] sm:$0xf]
        %v5612 = vld [vmem:[#allocation13 + $0x6c] sm:$0xf]
        %v5613 = vld [vmem:[#allocation13 + $0x70] sm:$0xf]
        %v5614 = vld [vmem:[#allocation13 + $0x74] sm:$0xf]
        %v5615 = vld [vmem:[#allocation13 + $0x78] sm:$0xf]
        %v5616 = vld [vmem:[#allocation13 + $0x7c] sm:$0xf]
        %v5617 = vld [vmem:[#allocation13 + $0x80] sm:$0xf]
        %v5618 = vld [vmem:[#allocation13 + $0x84] sm:$0xf]
        %v5619 = vld [vmem:[#allocation13 + $0x88] sm:$0xf]
        %v5620 = vld [vmem:[#allocation13 + $0x8c] sm:$0xf]
        %v5621 = vld [vmem:[#allocation13 + $0x90] sm:$0xf]
        %v5622 = vld [vmem:[#allocation13 + $0x94] sm:$0xf]
        %v5623 = vld [vmem:[#allocation13 + $0x98] sm:$0xf]
        %v5624 = vld [vmem:[#allocation13 + $0x9c] sm:$0xf]
        %v5625 = vld [vmem:[#allocation13 + $0xa0] sm:$0xf]
        %v5626 = vld [vmem:[#allocation13 + $0xa4] sm:$0xf]
        %v5627 = vld [vmem:[#allocation13 + $0xa8] sm:$0xf]
        %v5628 = vld [vmem:[#allocation13 + $0xac] sm:$0xf]
        %v5629 = vld [vmem:[#allocation13 + $0xb0] sm:$0xf]
        %v5630 = vld [vmem:[#allocation13 + $0xb4] sm:$0xf]
        %v5631 = vld [vmem:[#allocation13 + $0xb8] sm:$0xf]
        %v5632 = vld [vmem:[#allocation13 + $0xbc] sm:$0xf]
        %v5633 = vld [vmem:[#allocation13 + $0xc0] sm:$0xf]
        %v5634 = vld [vmem:[#allocation13 + $0xc4] sm:$0xf]
        %v5635 = vld [vmem:[#allocation13 + $0xc8] sm:$0xf]
        %v5636 = vld [vmem:[#allocation13 + $0xcc] sm:$0xf]
        %v5637 = vld [vmem:[#allocation13 + $0xd0] sm:$0xf]
        %v5638 = vld [vmem:[#allocation13 + $0xd4] sm:$0xf]
        %v5639 = vld [vmem:[#allocation13 + $0xd8] sm:$0xf]
        %v5640 = vld [vmem:[#allocation13 + $0xdc] sm:$0xf]
        %v5641 = vld [vmem:[#allocation13 + $0xe0] sm:$0xf]
        %v5642 = vld [vmem:[#allocation13 + $0xe4] sm:$0xf]
        %v5643 = vld [vmem:[#allocation13 + $0xe8] sm:$0xf]
        %v5644 = vld [vmem:[#allocation13 + $0xec] sm:$0xf]
        %v5645 = vld [vmem:[#allocation13 + $0xf0] sm:$0xf]
        %v5646 = vld [vmem:[#allocation13 + $0xf4] sm:$0xf]
        %v5647 = vld [vmem:[#allocation13 + $0xf8] sm:$0xf]
        %v5648 = vld [vmem:[#allocation13 + $0xfc] sm:$0xf]
        %v5649 = vld [vmem:[%s11] sm:$0x1]
        %v5651 = vperm.slane %v5649, 0
        %v5717 = vunpack.c.l.b16 %v5585
        %v5718 = vunpack.c.l.b16 %v5586
        %v5719 = vunpack.c.l.b16 %v5587
        %v5720 = vunpack.c.l.b16 %v5588
        %v5721 = vunpack.c.l.b16 %v5589
        %v5722 = vunpack.c.l.b16 %v5590
        %v5723 = vunpack.c.l.b16 %v5591
        %v5724 = vunpack.c.l.b16 %v5592
        %v5725 = vunpack.c.l.b16 %v5593
        %v5726 = vunpack.c.l.b16 %v5594
        %v5727 = vunpack.c.l.b16 %v5595
        %v5728 = vunpack.c.l.b16 %v5596
        %v5729 = vunpack.c.l.b16 %v5597
        %v5730 = vunpack.c.l.b16 %v5598
        %v5731 = vunpack.c.l.b16 %v5599
        %v5732 = vunpack.c.l.b16 %v5600
        %v5733 = vunpack.c.l.b16 %v5601
        %v5734 = vunpack.c.l.b16 %v5602
        %v5735 = vunpack.c.l.b16 %v5603
        %v5736 = vunpack.c.l.b16 %v5604
        %v5737 = vunpack.c.l.b16 %v5605
        %v5738 = vunpack.c.l.b16 %v5606
        %v5739 = vunpack.c.l.b16 %v5607
        %v5740 = vunpack.c.l.b16 %v5608
        %v5741 = vunpack.c.l.b16 %v5609
        %v5742 = vunpack.c.l.b16 %v5610
        %v5743 = vunpack.c.l.b16 %v5611
        %v5744 = vunpack.c.l.b16 %v5612
        %v5745 = vunpack.c.l.b16 %v5613
        %v5746 = vunpack.c.l.b16 %v5614
        %v5747 = vunpack.c.l.b16 %v5615
        %v5748 = vunpack.c.l.b16 %v5616
        %v5749 = vunpack.c.l.b16 %v5617
        %v5750 = vunpack.c.l.b16 %v5618
        %v5751 = vunpack.c.l.b16 %v5619
        %v5752 = vunpack.c.l.b16 %v5620
        %v5753 = vunpack.c.l.b16 %v5621
        %v5754 = vunpack.c.l.b16 %v5622
        %v5755 = vunpack.c.l.b16 %v5623
        %v5756 = vunpack.c.l.b16 %v5624
        %v5757 = vunpack.c.l.b16 %v5625
        %v5758 = vunpack.c.l.b16 %v5626
        %v5759 = vunpack.c.l.b16 %v5627
        %v5760 = vunpack.c.l.b16 %v5628
        %v5761 = vunpack.c.l.b16 %v5629
        %v5762 = vunpack.c.l.b16 %v5630
        %v5763 = vunpack.c.l.b16 %v5631
        %v5764 = vunpack.c.l.b16 %v5632
        %v5765 = vunpack.c.l.b16 %v5633
        %v5766 = vunpack.c.l.b16 %v5634
        %v5767 = vunpack.c.l.b16 %v5635
        %v5768 = vunpack.c.l.b16 %v5636
        %v5769 = vunpack.c.l.b16 %v5637
        %v5770 = vunpack.c.l.b16 %v5638
        %v5771 = vunpack.c.l.b16 %v5639
        %v5772 = vunpack.c.l.b16 %v5640
        %v5773 = vunpack.c.l.b16 %v5641
        %v5774 = vunpack.c.l.b16 %v5642
        %v5775 = vunpack.c.l.b16 %v5643
        %v5776 = vunpack.c.l.b16 %v5644
        %v5777 = vunpack.c.l.b16 %v5645
        %v5778 = vunpack.c.l.b16 %v5646
        %v5779 = vunpack.c.l.b16 %v5647
        %v5780 = vunpack.c.l.b16 %v5648
        %v5781 = vpack.c.b16 %v5718, %v5717
        %v5782 = vpack.c.b16 %v5720, %v5719
        %v5783 = vpack.c.b16 %v5722, %v5721
        %v5784 = vpack.c.b16 %v5724, %v5723
        %v5785 = vpack.c.b16 %v5726, %v5725
        %v5786 = vpack.c.b16 %v5728, %v5727
        %v5787 = vpack.c.b16 %v5730, %v5729
        %v5788 = vpack.c.b16 %v5732, %v5731
        %v5789 = vpack.c.b16 %v5734, %v5733
        %v5790 = vpack.c.b16 %v5736, %v5735
        %v5791 = vpack.c.b16 %v5738, %v5737
        %v5792 = vpack.c.b16 %v5740, %v5739
        %v5793 = vpack.c.b16 %v5742, %v5741
        %v5794 = vpack.c.b16 %v5744, %v5743
        %v5795 = vpack.c.b16 %v5746, %v5745
        %v5796 = vpack.c.b16 %v5748, %v5747
        %v5797 = vpack.c.b16 %v5750, %v5749
        %v5798 = vpack.c.b16 %v5752, %v5751
        %v5799 = vpack.c.b16 %v5754, %v5753
        %v5800 = vpack.c.b16 %v5756, %v5755
        %v5801 = vpack.c.b16 %v5758, %v5757
        %v5802 = vpack.c.b16 %v5760, %v5759
        %v5803 = vpack.c.b16 %v5762, %v5761
        %v5804 = vpack.c.b16 %v5764, %v5763
        %v5805 = vpack.c.b16 %v5766, %v5765
        %v5806 = vpack.c.b16 %v5768, %v5767
        %v5807 = vpack.c.b16 %v5770, %v5769
        %v5808 = vpack.c.b16 %v5772, %v5771
        %v5809 = vpack.c.b16 %v5774, %v5773
        %v5810 = vpack.c.b16 %v5776, %v5775
        %v5811 = vpack.c.b16 %v5778, %v5777
        %v5812 = vpack.c.b16 %v5780, %v5779
        %5845 = vmatpush.bf16.msra.mxu0 %v5788
        %5846 = vmatpush.bf16.msra.mxu0 %v5787
        %5847 = vmatpush.bf16.msra.mxu0 %v5786
        %5848 = vmatpush.bf16.msra.mxu0 %v5785
        %5849 = vmatpush.bf16.msra.mxu0 %v5784
        %5850 = vmatpush.bf16.msra.mxu0 %v5783
        %5851 = vmatpush.bf16.msra.mxu0 %v5782
        %5852 = vmatpush.bf16.msra.mxu0 %v5781
        %5853 = vmatmul.bf16.gmra.mxu0 %v5553
        %v5854 = vpop.f32.mrf.mxu0
        %v5855 = vadd.f32 %v5651, %v5854
        %v5856 = vpop.f32.mrf.mxu0
        %v5857 = vadd.f32 %v5651, %v5856
        %5858 = vmatmul.bf16.gmra.mxu0 %v5557
        %v5859 = vpop.f32.mrf.mxu0
        %v5860 = vadd.f32 %v5651, %v5859
        %v5861 = vpop.f32.mrf.mxu0
        %v5862 = vadd.f32 %v5651, %v5861
        %5863 = vmatmul.bf16.gmra.mxu0 %v5561
        %v5864 = vpop.f32.mrf.mxu0
        %v5865 = vadd.f32 %v5651, %v5864
        %v5866 = vpop.f32.mrf.mxu0
        %v5867 = vadd.f32 %v5651, %v5866
        %5868 = vmatmul.bf16.gmra.mxu0 %v5565
        %v5869 = vpop.f32.mrf.mxu0
        %v5870 = vadd.f32 %v5651, %v5869
        %v5871 = vpop.f32.mrf.mxu0
        %v5872 = vadd.f32 %v5651, %v5871
        %5873 = vmatmul.bf16.gmra.mxu0 %v5569
        %v5874 = vpop.f32.mrf.mxu0
        %v5875 = vadd.f32 %v5651, %v5874
        %v5876 = vpop.f32.mrf.mxu0
        %v5877 = vadd.f32 %v5651, %v5876
        %5878 = vmatmul.bf16.gmra.mxu0 %v5573
        %v5879 = vpop.f32.mrf.mxu0
        %v5880 = vadd.f32 %v5651, %v5879
        %v5881 = vpop.f32.mrf.mxu0
        %v5882 = vadd.f32 %v5651, %v5881
        %5883 = vmatmul.bf16.gmra.mxu0 %v5577
        %v5884 = vpop.f32.mrf.mxu0
        %v5885 = vadd.f32 %v5651, %v5884
        %v5886 = vpop.f32.mrf.mxu0
        %v5887 = vadd.f32 %v5651, %v5886
        %5888 = vmatmul.bf16.gmra.mxu0 %v5581
        %v5889 = vpop.f32.mrf.mxu0
        %v5890 = vadd.f32 %v5651, %v5889
        %v5891 = vpop.f32.mrf.mxu0
        %v5892 = vadd.f32 %v5651, %v5891
        %5893 = vdwg.mxu0
        %5894 = vmatpush.bf16.msra.mxu0 %v5796
        %5895 = vmatpush.bf16.msra.mxu0 %v5795
        %5896 = vmatpush.bf16.msra.mxu0 %v5794
        %5897 = vmatpush.bf16.msra.mxu0 %v5793
        %5898 = vmatpush.bf16.msra.mxu0 %v5792
        %5899 = vmatpush.bf16.msra.mxu0 %v5791
        %5900 = vmatpush.bf16.msra.mxu0 %v5790
        %5901 = vmatpush.bf16.msra.mxu0 %v5789
        %5902 = vmatmul.bf16.gmra.mxu0 %v5554
        %v5903 = vpop.f32.mrf.mxu0
        %v5904 = vadd.f32 %v5855, %v5903
        %v5905 = vpop.f32.mrf.mxu0
        %v5906 = vadd.f32 %v5857, %v5905
        %5907 = vmatmul.bf16.gmra.mxu0 %v5558
        %v5908 = vpop.f32.mrf.mxu0
        %v5909 = vadd.f32 %v5860, %v5908
        %v5910 = vpop.f32.mrf.mxu0
        %v5911 = vadd.f32 %v5862, %v5910
        %5912 = vmatmul.bf16.gmra.mxu0 %v5562
        %v5913 = vpop.f32.mrf.mxu0
        %v5914 = vadd.f32 %v5865, %v5913
        %v5915 = vpop.f32.mrf.mxu0
        %v5916 = vadd.f32 %v5867, %v5915
        %5917 = vmatmul.bf16.gmra.mxu0 %v5566
        %v5918 = vpop.f32.mrf.mxu0
        %v5919 = vadd.f32 %v5870, %v5918
        %v5920 = vpop.f32.mrf.mxu0
        %v5921 = vadd.f32 %v5872, %v5920
        %5922 = vmatmul.bf16.gmra.mxu0 %v5570
        %v5923 = vpop.f32.mrf.mxu0
        %v5924 = vadd.f32 %v5875, %v5923
        %v5925 = vpop.f32.mrf.mxu0
        %v5926 = vadd.f32 %v5877, %v5925
        %5927 = vmatmul.bf16.gmra.mxu0 %v5574
        %v5928 = vpop.f32.mrf.mxu0
        %v5929 = vadd.f32 %v5880, %v5928
        %v5930 = vpop.f32.mrf.mxu0
        %v5931 = vadd.f32 %v5882, %v5930
        %5932 = vmatmul.bf16.gmra.mxu0 %v5578
        %v5933 = vpop.f32.mrf.mxu0
        %v5934 = vadd.f32 %v5885, %v5933
        %v5935 = vpop.f32.mrf.mxu0
        %v5936 = vadd.f32 %v5887, %v5935
        %5937 = vmatmul.bf16.gmra.mxu0 %v5582
        %v5938 = vpop.f32.mrf.mxu0
        %v5939 = vadd.f32 %v5890, %v5938
        %v5940 = vpop.f32.mrf.mxu0
        %v5941 = vadd.f32 %v5892, %v5940
        %5942 = vdwg.mxu0
        %5943 = vmatpush.bf16.msra.mxu0 %v5804
        %5944 = vmatpush.bf16.msra.mxu0 %v5803
        %5945 = vmatpush.bf16.msra.mxu0 %v5802
        %5946 = vmatpush.bf16.msra.mxu0 %v5801
        %5947 = vmatpush.bf16.msra.mxu0 %v5800
        %5948 = vmatpush.bf16.msra.mxu0 %v5799
        %5949 = vmatpush.bf16.msra.mxu0 %v5798
        %5950 = vmatpush.bf16.msra.mxu0 %v5797
        %5951 = vmatmul.bf16.gmra.mxu0 %v5555
        %v5952 = vpop.f32.mrf.mxu0
        %v5953 = vadd.f32 %v5904, %v5952
        %v5954 = vpop.f32.mrf.mxu0
        %v5955 = vadd.f32 %v5906, %v5954
        %5956 = vmatmul.bf16.gmra.mxu0 %v5559
        %v5957 = vpop.f32.mrf.mxu0
        %v5958 = vadd.f32 %v5909, %v5957
        %v5959 = vpop.f32.mrf.mxu0
        %v5960 = vadd.f32 %v5911, %v5959
        %5961 = vmatmul.bf16.gmra.mxu0 %v5563
        %v5962 = vpop.f32.mrf.mxu0
        %v5963 = vadd.f32 %v5914, %v5962
        %v5964 = vpop.f32.mrf.mxu0
        %v5965 = vadd.f32 %v5916, %v5964
        %5966 = vmatmul.bf16.gmra.mxu0 %v5567
        %v5967 = vpop.f32.mrf.mxu0
        %v5968 = vadd.f32 %v5919, %v5967
        %v5969 = vpop.f32.mrf.mxu0
        %v5970 = vadd.f32 %v5921, %v5969
        %5971 = vmatmul.bf16.gmra.mxu0 %v5571
        %v5972 = vpop.f32.mrf.mxu0
        %v5973 = vadd.f32 %v5924, %v5972
        %v5974 = vpop.f32.mrf.mxu0
        %v5975 = vadd.f32 %v5926, %v5974
        %5976 = vmatmul.bf16.gmra.mxu0 %v5575
        %v5977 = vpop.f32.mrf.mxu0
        %v5978 = vadd.f32 %v5929, %v5977
        %v5979 = vpop.f32.mrf.mxu0
        %v5980 = vadd.f32 %v5931, %v5979
        %5981 = vmatmul.bf16.gmra.mxu0 %v5579
        %v5982 = vpop.f32.mrf.mxu0
        %v5983 = vadd.f32 %v5934, %v5982
        %v5984 = vpop.f32.mrf.mxu0
        %v5985 = vadd.f32 %v5936, %v5984
        %5986 = vmatmul.bf16.gmra.mxu0 %v5583
        %v5987 = vpop.f32.mrf.mxu0
        %v5988 = vadd.f32 %v5939, %v5987
        %v5989 = vpop.f32.mrf.mxu0
        %v5990 = vadd.f32 %v5941, %v5989
        %5991 = vdwg.mxu0
        %5992 = vmatpush.bf16.msra.mxu0 %v5812
        %5993 = vmatpush.bf16.msra.mxu0 %v5811
        %5994 = vmatpush.bf16.msra.mxu0 %v5810
        %5995 = vmatpush.bf16.msra.mxu0 %v5809
        %5996 = vmatpush.bf16.msra.mxu0 %v5808
        %5997 = vmatpush.bf16.msra.mxu0 %v5807
        %5998 = vmatpush.bf16.msra.mxu0 %v5806
        %5999 = vmatpush.bf16.msra.mxu0 %v5805
        %6000 = vmatmul.bf16.gmra.mxu0 %v5556
        %v6001 = vpop.f32.mrf.mxu0
        %v6002 = vadd.f32 %v5953, %v6001
        %v6003 = vpop.f32.mrf.mxu0
        %v6004 = vadd.f32 %v5955, %v6003
        %6005 = vmatmul.bf16.gmra.mxu0 %v5560
        %v6006 = vpop.f32.mrf.mxu0
        %v6007 = vadd.f32 %v5958, %v6006
        %v6008 = vpop.f32.mrf.mxu0
        %v6009 = vadd.f32 %v5960, %v6008
        %6010 = vmatmul.bf16.gmra.mxu0 %v5564
        %v6011 = vpop.f32.mrf.mxu0
        %v6012 = vadd.f32 %v5963, %v6011
        %v6013 = vpop.f32.mrf.mxu0
        %v6014 = vadd.f32 %v5965, %v6013
        %6015 = vmatmul.bf16.gmra.mxu0 %v5568
        %v6016 = vpop.f32.mrf.mxu0
        %v6017 = vadd.f32 %v5968, %v6016
        %v6018 = vpop.f32.mrf.mxu0
        %v6019 = vadd.f32 %v5970, %v6018
        %6020 = vmatmul.bf16.gmra.mxu0 %v5572
        %v6021 = vpop.f32.mrf.mxu0
        %v6022 = vadd.f32 %v5973, %v6021
        %v6023 = vpop.f32.mrf.mxu0
        %v6024 = vadd.f32 %v5975, %v6023
        %6025 = vmatmul.bf16.gmra.mxu0 %v5576
        %v6026 = vpop.f32.mrf.mxu0
        %v6027 = vadd.f32 %v5978, %v6026
        %v6028 = vpop.f32.mrf.mxu0
        %v6029 = vadd.f32 %v5980, %v6028
        %6030 = vmatmul.bf16.gmra.mxu0 %v5580
        %v6031 = vpop.f32.mrf.mxu0
        %v6032 = vadd.f32 %v5983, %v6031
        %v6033 = vpop.f32.mrf.mxu0
        %v6034 = vadd.f32 %v5985, %v6033
        %6035 = vmatmul.bf16.gmra.mxu0 %v5584
        %v6036 = vpop.f32.mrf.mxu0
        %v6037 = vadd.f32 %v5988, %v6036
        %v6038 = vpop.f32.mrf.mxu0
        %v6039 = vadd.f32 %v5990, %v6038
        %6040 = vdwg.mxu0
        %v6041 = vadd.f32 %v4195, %v6002
        %v6042 = vadd.f32 %v4196, %v6004
        %v6043 = vadd.f32 %v4197, %v6007
        %v6044 = vadd.f32 %v4198, %v6009
        %v6045 = vadd.f32 %v4199, %v6012
        %v6046 = vadd.f32 %v4200, %v6014
        %v6047 = vadd.f32 %v4201, %v6017
        %v6048 = vadd.f32 %v4202, %v6019
        %v6049 = vadd.f32 %v4203, %v6022
        %v6050 = vadd.f32 %v4204, %v6024
        %v6051 = vadd.f32 %v4205, %v6027
        %v6052 = vadd.f32 %v4206, %v6029
        %v6053 = vadd.f32 %v4207, %v6032
        %v6054 = vadd.f32 %v4208, %v6034
        %v6055 = vadd.f32 %v4209, %v6037
        %v6056 = vadd.f32 %v4210, %v6039
        %6057 = vst [vmem:[%s528] sm:$0xff] %v6041
        %6058 = vst [vmem:[%s528 + $0x8] sm:$0xff] %v6042
        %6059 = vst [vmem:[%s528 + $0x10] sm:$0xff] %v6043
        %6060 = vst [vmem:[%s528 + $0x18] sm:$0xff] %v6044
        %6061 = vst [vmem:[%s528 + $0x20] sm:$0xff] %v6045
        %6062 = vst [vmem:[%s528 + $0x28] sm:$0xff] %v6046
        %6063 = vst [vmem:[%s528 + $0x30] sm:$0xff] %v6047
        %6064 = vst [vmem:[%s528 + $0x38] sm:$0xff] %v6048
        %6065 = vst [vmem:[%s528 + $0x40] sm:$0xff] %v6049
        %6066 = vst [vmem:[%s528 + $0x48] sm:$0xff] %v6050
        %6067 = vst [vmem:[%s528 + $0x50] sm:$0xff] %v6051
        %6068 = vst [vmem:[%s528 + $0x58] sm:$0xff] %v6052
        %6069 = vst [vmem:[%s528 + $0x60] sm:$0xff] %v6053
        %6070 = vst [vmem:[%s528 + $0x68] sm:$0xff] %v6054
        %6071 = vst [vmem:[%s528 + $0x70] sm:$0xff] %v6055
        %6072 = vst [vmem:[%s528 + $0x78] sm:$0xff] %v6056
        %s6073 = sand.u32 %s297, 1
        %s6074 = scalar_lea.sflag [#allocation4], %s6073
        %s6075 = sand.u32 %s297, 1
        %s6076 = smul.addr %s6075, 128
        %s6077 = scalar_lea.vmem [#allocation14], %s6076
        // Predicated region
        $region97: #{tpu_custom_call.1} parent=67 // pred_check
          %p6078 = pneg %p307
        $region98: #{tpu_custom_call.1} parent=67 // pred_check_branch
          %6080 = sbr.rel (%p6078) target = $region100
        $region99: #{tpu_custom_call.1} parent=67 // pred_region
          %6082 = vsyncadd %s6074, 0
          %s6083 = smul.addr %s32, 16
          %s6084 = smul.addr %s6083, 8
          %s6085 = scalar_lea.hbm %s12, %s6084
          %s6086 = sshll.u32 %s6077, 4
          %s6087 = int_to_ptr.vmem [resolvable:$true] %s6086
          %s6088 = sshll.u32 %s6085, 4
          %s6089 = int_to_ptr.hbm [resolvable:$true] %s6088
          %6094 = dma.vmem_to_hbm [thread:$0]  %s6087, 2048, %s6089, %s6074, 128, 128, 8
        $region100: #{tpu_custom_call.1} parent=67 // pred_fallthru
          _
      $region68: #{tpu_custom_call.1} parent=5 // pred_fallthru
        _
      %p6095 = scmp.le.s32.totalorder 2, %s27
      // Predicated region
      $region101: #{tpu_custom_call.1} parent=5 // pred_check
        %p6096 = pneg %p6095
      $region102: #{tpu_custom_call.1} parent=5 // pred_check_branch
        %6098 = sbr.rel (%p6096) target = $region104
      $region103: #{tpu_custom_call.1} parent=5 // pred_region
        %s6099 = ssub.s32 %s27, 2
        // Predicated region
        $region105: #{tpu_custom_call.1} parent=103 // pred_check
          %p6100 = pneg %p313
        $region106: #{tpu_custom_call.1} parent=103 // pred_check_branch
          %6102 = sbr.rel (%p6100) target = $region108
        $region107: #{tpu_custom_call.1} parent=103 // pred_region
          %s6103 = sand.u32 %s298, 1
          %s6104 = scalar_lea.sflag [#allocation4], %s6103
          %s6105 = sand.u32 %s298, 1
          %s6106 = smul.addr %s6105, 128
          %s6107 = scalar_lea.vmem [#allocation14], %s6106
          %6109 = dma.done %s6104, 2048
        $region108: #{tpu_custom_call.1} parent=103 // pred_fallthru
          _
      $region104: #{tpu_custom_call.1} parent=5 // pred_fallthru
        _
    $region6: #{tpu_custom_call.1} parent=1 // loop_footer
      %s31 = sadd.s32 1, %s27
    $region7: #{tpu_custom_call.1} parent=1 // loop_footer_branch
      %26 = sbr.rel target = $region3
    $region8: #{tpu_custom_call.1} parent=1 // loop_exit
      _
    %6110 = vsyncpa [#allocation3], 1
    %s6111 = scalar_lea.sflag [#allocation3], 1
    %6112 = vsyncpa %s6111, 1
    %6113 = vsyncpa [#allocation6], 1
    %6114 = vsyncpa [#allocation9], 1
    %6115 = vsyncpa [#allocation12], 1
    %6116 = vsyncpa [#allocation4], 1
    %s6117 = scalar_lea.sflag [#allocation4], 1
    %6118 = vsyncpa %s6117, 1

</llo_original>
